<compile_context>
chip_gen: v7x
topology: tpu7x:2x2x1
jax: 0.10.0
libtpu: 0.0.40
codegen_flags: <defaults>
</compile_context>

<pallas_src>
import functools

import jax
import jax.numpy as jnp
from jax.experimental import pallas as pl
from jax.experimental.pallas import tpu as pltpu


def _set2set_kernel(x_ref, wihq_ref, wihr_ref, whh_ref, bias_ref, out_ref,
                    *, processing_steps):
    Bb, S, C = x_ref.shape
    C4 = 4 * C

    if processing_steps == 0:
        out_ref[...] = jnp.zeros_like(out_ref)
        return

    x = x_ref[...]                           # (Bb, S, C)
    wih_q = wihq_ref[...]                    # (C, 4C)   q-half of W_ih^T
    wih_r = wihr_ref[...]                    # (C, 4C)   r-half of W_ih^T
    whh = whh_ref[...]                       # (C, 4C)   W_hh^T
    bias = bias_ref[...]                     # (1, 4C)   b_ih + b_hh

    # Attention readout is numerically the identity: a = exp(0)/(exp(0)+1e-16) == 1.0
    # exactly in f32 and the scatter_add over index=arange(B) is the identity, so
    # r == x for every processing step (loop-invariant).
    r = x                                    # (Bb, S, C)

    # Loop-invariant part of the input projection: r-half of q_star @ W_ih^T + bias.
    rproj = (jnp.dot(r.reshape(Bb * S, C), wih_r,
                     preferred_element_type=jnp.float32)
             .reshape(Bb, S, C4) + bias)     # (Bb, S, 4C)

    h = jnp.zeros((Bb, C), jnp.float32)
    c = jnp.zeros((Bb, C), jnp.float32)

    for step in range(processing_steps):
        # Hoisted input projection: q_star is constant within a processing step.
        if step == 0:
            gin = None                       # q_star == 0 -> projection is just bias
        else:
            q_prev = out_ref[:, :, 0:C]      # previous step's q (fully written below)
            gin = (jnp.dot(q_prev.reshape(Bb * S, C), wih_q,
                           preferred_element_type=jnp.float32)
                   .reshape(Bb, S, C4) + rproj)

        # Serial LSTM recurrence: only the small h @ W_hh^T matmul + gate math
        # remain on the per-timestep critical path.
        for t in range(S):
            pre = bias if gin is None else gin[:, t, :]          # (·, 4C)
            gates = pre + jnp.dot(h, whh,
                                  preferred_element_type=jnp.float32)  # (Bb, 4C)
            sg = jax.nn.sigmoid(gates)                           # full-width EUP
            i_g = sg[:, 0 * C:1 * C]
            f_g = sg[:, 1 * C:2 * C]
            o_g = sg[:, 3 * C:4 * C]
            g_g = jnp.tanh(gates[:, 2 * C:3 * C])
            c = f_g * c + i_g * g_g
            h = o_g * jnp.tanh(c)
            # Write q directly into the q-half of the output buffer.  Safe: the
            # read of q_prev for this step happened before this t loop, and later
            # timesteps only write t' > t.
            out_ref[:, t:t + 1, 0:C] = jnp.reshape(h, (Bb, 1, C))

    # The r-half of q_star is identical for every step: write it exactly once.
    out_ref[:, :, C:2 * C] = r


def set2set_pallas(x, w_ih, w_hh, b_ih, b_hh, processing_steps, *, batch_block=None):
    """x: (B, S, C) float32.  Weights in PyTorch nn.LSTM shapes:
       w_ih (4C, 2C), w_hh (4C, C), b_ih (4C,), b_hh (4C,)."""
    B, S, C = x.shape
    if batch_block is None:
        batch_block = B
    batch_block = min(batch_block, B)
    assert B % batch_block == 0, "batch must be divisible by batch_block"

    w_ih_t = jnp.transpose(w_ih).astype(jnp.float32)             # (2C, 4C)
    wih_q = w_ih_t[0:C, :]                                       # (C, 4C)
    wih_r = w_ih_t[C:2 * C, :]                                   # (C, 4C)
    whh_t = jnp.transpose(w_hh).astype(jnp.float32)              # (C, 4C)
    bias = (b_ih + b_hh).reshape(1, 4 * C).astype(jnp.float32)   # (1, 4C)

    kernel = functools.partial(_set2set_kernel,
                               processing_steps=processing_steps)
    grid = (B // batch_block,)
    return pl.pallas_call(
        kernel,
        out_shape=jax.ShapeDtypeStruct((B, S, 2 * C), jnp.float32),
        grid=grid,
        in_specs=[
            pl.BlockSpec((batch_block, S, C), lambda b: (b, 0, 0)),   # x
            pl.BlockSpec((C, 4 * C), lambda b: (0, 0)),               # wih_q
            pl.BlockSpec((C, 4 * C), lambda b: (0, 0)),               # wih_r
            pl.BlockSpec((C, 4 * C), lambda b: (0, 0)),               # whh
            pl.BlockSpec((1, 4 * C), lambda b: (0, 0)),               # bias
        ],
        out_specs=pl.BlockSpec((batch_block, S, 2 * C), lambda b: (b, 0, 0)),
        compiler_params=pltpu.CompilerParams(
            dimension_semantics=("parallel",)),
    )(x.astype(jnp.float32), wih_q, wih_r, whh_t, bias)


def set2set_reference(x, w_ih, w_hh, b_ih, b_hh, processing_steps):
    """Pure-JAX reference mirroring the PyTorch module."""
    B, S, C = x.shape
    h = jnp.zeros((B, C), jnp.float32)
    c = jnp.zeros((B, C), jnp.float32)
    q_star = jnp.zeros((B, S, 2 * C), jnp.float32)
    for _ in range(processing_steps):
        qs = []
        for t in range(S):
            gates = q_star[:, t, :] @ w_ih.T + b_ih + h @ w_hh.T + b_hh
            i_g = jax.nn.sigmoid(gates[:, :C])
            f_g = jax.nn.sigmoid(gates[:, C:2 * C])
            g_g = jnp.tanh(gates[:, 2 * C:3 * C])
            o_g = jax.nn.sigmoid(gates[:, 3 * C:])
            c = f_g * c + i_g * g_g
            h = o_g * jnp.tanh(c)
            qs.append(h)
        q = jnp.stack(qs, axis=1)
        e = jnp.sum(x * q, axis=-1, keepdims=True)
        p = jnp.exp(e - e)
        a = p / (p + 1e-16)
        r = a * x
        q_star = jnp.concatenate([q, r], axis=-1)
    return q_star


if __name__ == "__main__":
    # Small, module-consistent shapes.
    B, S, C = 2, 8, 32           # batch, set size (seq), in_channels
    PROCESSING_STEPS = 3

    key = jax.random.PRNGKey(0)
    kx, k1, k2, k3, k4 = jax.random.split(key, 5)

    x = jax.random.normal(kx, (B, S, C), dtype=jnp.float32)

    # Deterministic LSTM parameter init (PyTorch-style uniform(-k, k), k=1/sqrt(C)).
    k_init = 1.0 / jnp.sqrt(jnp.float32(C))
    w_ih = jax.random.uniform(k1, (4 * C, 2 * C), jnp.float32, -k_init, k_init)
    w_hh = jax.random.uniform(k2, (4 * C, C), jnp.float32, -k_init, k_init)
    b_ih = jax.random.uniform(k3, (4 * C,), jnp.float32, -k_init, k_init)
    b_hh = jax.random.uniform(k4, (4 * C,), jnp.float32, -k_init, k_init)

    out = set2set_pallas(x, w_ih, w_hh, b_ih, b_hh, PROCESSING_STEPS)
    out = jax.block_until_ready(out)

    ref = set2set_reference(x, w_ih, w_hh, b_ih, b_hh, PROCESSING_STEPS)
    assert out.shape == (B, S, 2 * C)
    assert jnp.allclose(out, ref, rtol=1e-4, atol=1e-4)

    print("KERNEL_OK")
</pallas_src>

<mosaic_0001>
module attributes {stable_mosaic.version = 11 : i64} {
  func.func @_set2set_kernel(%arg0: i32, %arg1: memref<2x8x32xf32, #tpu.memory_space<vmem>>, %arg2: memref<32x128xf32, #tpu.memory_space<vmem>>, %arg3: memref<32x128xf32, #tpu.memory_space<vmem>>, %arg4: memref<32x128xf32, #tpu.memory_space<vmem>>, %arg5: memref<1x128xf32, #tpu.memory_space<vmem>>, %arg6: memref<2x8x64xf32, #tpu.memory_space<vmem>>) attributes {dimension_semantics = [#tpu.dimension_semantics<parallel>], iteration_bounds = array<i64: 1>, scalar_prefetch = 0 : i64, scratch_operands = 0 : i64, tpu.core_type = #tpu.core_type<tc>, window_params = [{transform_indices = @transform_0, window_bounds = array<i64: 2, 8, 32>}, {pipeline_mode = #tpu.pipeline_mode<synchronous>, transform_indices = @transform_1, window_bounds = array<i64: 32, 128>}, {pipeline_mode = #tpu.pipeline_mode<synchronous>, transform_indices = @transform_2, window_bounds = array<i64: 32, 128>}, {pipeline_mode = #tpu.pipeline_mode<synchronous>, transform_indices = @transform_3, window_bounds = array<i64: 32, 128>}, {pipeline_mode = #tpu.pipeline_mode<synchronous>, transform_indices = @transform_4, window_bounds = array<i64: 1, 128>}, {transform_indices = @transform_5, window_bounds = array<i64: 2, 8, 64>}]} {
    %c0 = arith.constant 0 : index
    %c0_0 = arith.constant 0 : index
    %c0_1 = arith.constant 0 : index
    %0 = vector.load %arg1[%c0, %c0_0, %c0_1] : memref<2x8x32xf32, #tpu.memory_space<vmem>>, vector<2x8x32xf32>
    %c0_2 = arith.constant 0 : index
    %c0_3 = arith.constant 0 : index
    %1 = vector.load %arg2[%c0_2, %c0_3] : memref<32x128xf32, #tpu.memory_space<vmem>>, vector<32x128xf32>
    %c0_4 = arith.constant 0 : index
    %c0_5 = arith.constant 0 : index
    %2 = vector.load %arg3[%c0_4, %c0_5] : memref<32x128xf32, #tpu.memory_space<vmem>>, vector<32x128xf32>
    %c0_6 = arith.constant 0 : index
    %c0_7 = arith.constant 0 : index
    %3 = vector.load %arg4[%c0_6, %c0_7] : memref<32x128xf32, #tpu.memory_space<vmem>>, vector<32x128xf32>
    %c0_8 = arith.constant 0 : index
    %c0_9 = arith.constant 0 : index
    %4 = vector.load %arg5[%c0_8, %c0_9] : memref<1x128xf32, #tpu.memory_space<vmem>>, vector<1x128xf32>
    %5 = vector.shape_cast %0 : vector<2x8x32xf32> to vector<16x32xf32>
    %cst = arith.constant dense<0.000000e+00> : vector<16x128xf32>
    %6 = tpu.matmul %5, %2, %cst {dimension_numbers = #tpu.dot_dimension_numbers<[1], [0], [0], [1], [0, 0, 1, 1], [], []>} : vector<16x32xf32>, vector<32x128xf32>, vector<16x128xf32> -> vector<16x128xf32>
    %7 = vector.shape_cast %6 : vector<16x128xf32> to vector<2x8x128xf32>
    %8 = vector.shape_cast %4 : vector<1x128xf32> to vector<1x1x128xf32>
    %9 = vector.broadcast %8 : vector<1x1x128xf32> to vector<2x8x128xf32>
    %10 = arith.addf %7, %9 : vector<2x8x128xf32>
    %cst_10 = arith.constant 0.000000e+00 : f32
    %11 = vector.broadcast %cst_10 : f32 to vector<2x32xf32>
    %cst_11 = arith.constant 0.000000e+00 : f32
    %12 = vector.broadcast %cst_11 : f32 to vector<2x32xf32>
    %cst_12 = arith.constant dense<0.000000e+00> : vector<2x128xf32>
    %13 = tpu.matmul %11, %3, %cst_12 {dimension_numbers = #tpu.dot_dimension_numbers<[1], [0], [0], [1], [0, 0, 1, 1], [], []>} : vector<2x32xf32>, vector<32x128xf32>, vector<2x128xf32> -> vector<2x128xf32>
    %14 = vector.broadcast %4 : vector<1x128xf32> to vector<2x128xf32>
    %15 = arith.addf %14, %13 : vector<2x128xf32>
    %16 = arith.negf %15 : vector<2x128xf32>
    %17 = math.exp %16 : vector<2x128xf32>
    %cst_13 = arith.constant 1.000000e+00 : f32
    %18 = vector.broadcast %cst_13 : f32 to vector<2x128xf32>
    %19 = arith.addf %18, %17 : vector<2x128xf32>
    %20 = arith.divf %18, %19 : vector<2x128xf32>
    %21 = vector.extract_strided_slice %20 {offsets = [0, 0], sizes = [2, 32], strides = [1, 1]} : vector<2x128xf32> to vector<2x32xf32>
    %22 = vector.extract_strided_slice %20 {offsets = [0, 32], sizes = [2, 32], strides = [1, 1]} : vector<2x128xf32> to vector<2x32xf32>
    %23 = vector.extract_strided_slice %20 {offsets = [0, 96], sizes = [2, 32], strides = [1, 1]} : vector<2x128xf32> to vector<2x32xf32>
    %24 = vector.extract_strided_slice %15 {offsets = [0, 64], sizes = [2, 32], strides = [1, 1]} : vector<2x128xf32> to vector<2x32xf32>
    %25 = math.tanh %24 : vector<2x32xf32>
    %26 = arith.mulf %22, %12 : vector<2x32xf32>
    %27 = arith.mulf %21, %25 : vector<2x32xf32>
    %28 = arith.addf %26, %27 : vector<2x32xf32>
    %29 = math.tanh %28 : vector<2x32xf32>
    %30 = arith.mulf %23, %29 : vector<2x32xf32>
    %31 = vector.shape_cast %30 : vector<2x32xf32> to vector<2x1x32xf32>
    %c0_14 = arith.constant 0 : index
    %c0_15 = arith.constant 0 : index
    %c0_16 = arith.constant 0 : index
    %32 = vector.load %arg6[%c0_14, %c0_15, %c0_16] : memref<2x8x64xf32, #tpu.memory_space<vmem>>, vector<2x1x32xf32>
    tpu.vector_store %arg6[%c0_14, %c0_15, %c0_16], %31 {strides = array<i32>} : memref<2x8x64xf32, #tpu.memory_space<vmem>>, vector<2x1x32xf32>,
    %cst_17 = arith.constant dense<0.000000e+00> : vector<2x128xf32>
    %33 = tpu.matmul %30, %3, %cst_17 {dimension_numbers = #tpu.dot_dimension_numbers<[1], [0], [0], [1], [0, 0, 1, 1], [], []>} : vector<2x32xf32>, vector<32x128xf32>, vector<2x128xf32> -> vector<2x128xf32>
    %34 = vector.broadcast %4 : vector<1x128xf32> to vector<2x128xf32>
    %35 = arith.addf %34, %33 : vector<2x128xf32>
    %36 = arith.negf %35 : vector<2x128xf32>
    %37 = math.exp %36 : vector<2x128xf32>
    %cst_18 = arith.constant 1.000000e+00 : f32
    %38 = vector.broadcast %cst_18 : f32 to vector<2x128xf32>
    %39 = arith.addf %38, %37 : vector<2x128xf32>
    %40 = arith.divf %38, %39 : vector<2x128xf32>
    %41 = vector.extract_strided_slice %40 {offsets = [0, 0], sizes = [2, 32], strides = [1, 1]} : vector<2x128xf32> to vector<2x32xf32>
    %42 = vector.extract_strided_slice %40 {offsets = [0, 32], sizes = [2, 32], strides = [1, 1]} : vector<2x128xf32> to vector<2x32xf32>
    %43 = vector.extract_strided_slice %40 {offsets = [0, 96], sizes = [2, 32], strides = [1, 1]} : vector<2x128xf32> to vector<2x32xf32>
    %44 = vector.extract_strided_slice %35 {offsets = [0, 64], sizes = [2, 32], strides = [1, 1]} : vector<2x128xf32> to vector<2x32xf32>
    %45 = math.tanh %44 : vector<2x32xf32>
    %46 = arith.mulf %42, %28 : vector<2x32xf32>
    %47 = arith.mulf %41, %45 : vector<2x32xf32>
    %48 = arith.addf %46, %47 : vector<2x32xf32>
    %49 = math.tanh %48 : vector<2x32xf32>
    %50 = arith.mulf %43, %49 : vector<2x32xf32>
    %51 = vector.shape_cast %50 : vector<2x32xf32> to vector<2x1x32xf32>
    %c0_19 = arith.constant 0 : index
    %c1 = arith.constant 1 : index
    %c0_20 = arith.constant 0 : index
    %52 = vector.load %arg6[%c0_19, %c1, %c0_20] : memref<2x8x64xf32, #tpu.memory_space<vmem>>, vector<2x1x32xf32>
    tpu.vector_store %arg6[%c0_19, %c1, %c0_20], %51 {strides = array<i32>} : memref<2x8x64xf32, #tpu.memory_space<vmem>>, vector<2x1x32xf32>,
    %cst_21 = arith.constant dense<0.000000e+00> : vector<2x128xf32>
    %53 = tpu.matmul %50, %3, %cst_21 {dimension_numbers = #tpu.dot_dimension_numbers<[1], [0], [0], [1], [0, 0, 1, 1], [], []>} : vector<2x32xf32>, vector<32x128xf32>, vector<2x128xf32> -> vector<2x128xf32>
    %54 = vector.broadcast %4 : vector<1x128xf32> to vector<2x128xf32>
    %55 = arith.addf %54, %53 : vector<2x128xf32>
    %56 = arith.negf %55 : vector<2x128xf32>
    %57 = math.exp %56 : vector<2x128xf32>
    %cst_22 = arith.constant 1.000000e+00 : f32
    %58 = vector.broadcast %cst_22 : f32 to vector<2x128xf32>
    %59 = arith.addf %58, %57 : vector<2x128xf32>
    %60 = arith.divf %58, %59 : vector<2x128xf32>
    %61 = vector.extract_strided_slice %60 {offsets = [0, 0], sizes = [2, 32], strides = [1, 1]} : vector<2x128xf32> to vector<2x32xf32>
    %62 = vector.extract_strided_slice %60 {offsets = [0, 32], sizes = [2, 32], strides = [1, 1]} : vector<2x128xf32> to vector<2x32xf32>
    %63 = vector.extract_strided_slice %60 {offsets = [0, 96], sizes = [2, 32], strides = [1, 1]} : vector<2x128xf32> to vector<2x32xf32>
    %64 = vector.extract_strided_slice %55 {offsets = [0, 64], sizes = [2, 32], strides = [1, 1]} : vector<2x128xf32> to vector<2x32xf32>
    %65 = math.tanh %64 : vector<2x32xf32>
    %66 = arith.mulf %62, %48 : vector<2x32xf32>
    %67 = arith.mulf %61, %65 : vector<2x32xf32>
    %68 = arith.addf %66, %67 : vector<2x32xf32>
    %69 = math.tanh %68 : vector<2x32xf32>
    %70 = arith.mulf %63, %69 : vector<2x32xf32>
    %71 = vector.shape_cast %70 : vector<2x32xf32> to vector<2x1x32xf32>
    %c0_23 = arith.constant 0 : index
    %c2 = arith.constant 2 : index
    %c0_24 = arith.constant 0 : index
    %72 = vector.load %arg6[%c0_23, %c2, %c0_24] : memref<2x8x64xf32, #tpu.memory_space<vmem>>, vector<2x1x32xf32>
    tpu.vector_store %arg6[%c0_23, %c2, %c0_24], %71 {strides = array<i32>} : memref<2x8x64xf32, #tpu.memory_space<vmem>>, vector<2x1x32xf32>,
    %cst_25 = arith.constant dense<0.000000e+00> : vector<2x128xf32>
    %73 = tpu.matmul %70, %3, %cst_25 {dimension_numbers = #tpu.dot_dimension_numbers<[1], [0], [0], [1], [0, 0, 1, 1], [], []>} : vector<2x32xf32>, vector<32x128xf32>, vector<2x128xf32> -> vector<2x128xf32>
    %74 = vector.broadcast %4 : vector<1x128xf32> to vector<2x128xf32>
    %75 = arith.addf %74, %73 : vector<2x128xf32>
    %76 = arith.negf %75 : vector<2x128xf32>
    %77 = math.exp %76 : vector<2x128xf32>
    %cst_26 = arith.constant 1.000000e+00 : f32
    %78 = vector.broadcast %cst_26 : f32 to vector<2x128xf32>
    %79 = arith.addf %78, %77 : vector<2x128xf32>
    %80 = arith.divf %78, %79 : vector<2x128xf32>
    %81 = vector.extract_strided_slice %80 {offsets = [0, 0], sizes = [2, 32], strides = [1, 1]} : vector<2x128xf32> to vector<2x32xf32>
    %82 = vector.extract_strided_slice %80 {offsets = [0, 32], sizes = [2, 32], strides = [1, 1]} : vector<2x128xf32> to vector<2x32xf32>
    %83 = vector.extract_strided_slice %80 {offsets = [0, 96], sizes = [2, 32], strides = [1, 1]} : vector<2x128xf32> to vector<2x32xf32>
    %84 = vector.extract_strided_slice %75 {offsets = [0, 64], sizes = [2, 32], strides = [1, 1]} : vector<2x128xf32> to vector<2x32xf32>
    %85 = math.tanh %84 : vector<2x32xf32>
    %86 = arith.mulf %82, %68 : vector<2x32xf32>
    %87 = arith.mulf %81, %85 : vector<2x32xf32>
    %88 = arith.addf %86, %87 : vector<2x32xf32>
    %89 = math.tanh %88 : vector<2x32xf32>
    %90 = arith.mulf %83, %89 : vector<2x32xf32>
    %91 = vector.shape_cast %90 : vector<2x32xf32> to vector<2x1x32xf32>
    %c0_27 = arith.constant 0 : index
    %c3 = arith.constant 3 : index
    %c0_28 = arith.constant 0 : index
    %92 = vector.load %arg6[%c0_27, %c3, %c0_28] : memref<2x8x64xf32, #tpu.memory_space<vmem>>, vector<2x1x32xf32>
    tpu.vector_store %arg6[%c0_27, %c3, %c0_28], %91 {strides = array<i32>} : memref<2x8x64xf32, #tpu.memory_space<vmem>>, vector<2x1x32xf32>,
    %cst_29 = arith.constant dense<0.000000e+00> : vector<2x128xf32>
    %93 = tpu.matmul %90, %3, %cst_29 {dimension_numbers = #tpu.dot_dimension_numbers<[1], [0], [0], [1], [0, 0, 1, 1], [], []>} : vector<2x32xf32>, vector<32x128xf32>, vector<2x128xf32> -> vector<2x128xf32>
    %94 = vector.broadcast %4 : vector<1x128xf32> to vector<2x128xf32>
    %95 = arith.addf %94, %93 : vector<2x128xf32>
    %96 = arith.negf %95 : vector<2x128xf32>
    %97 = math.exp %96 : vector<2x128xf32>
    %cst_30 = arith.constant 1.000000e+00 : f32
    %98 = vector.broadcast %cst_30 : f32 to vector<2x128xf32>
    %99 = arith.addf %98, %97 : vector<2x128xf32>
    %100 = arith.divf %98, %99 : vector<2x128xf32>
    %101 = vector.extract_strided_slice %100 {offsets = [0, 0], sizes = [2, 32], strides = [1, 1]} : vector<2x128xf32> to vector<2x32xf32>
    %102 = vector.extract_strided_slice %100 {offsets = [0, 32], sizes = [2, 32], strides = [1, 1]} : vector<2x128xf32> to vector<2x32xf32>
    %103 = vector.extract_strided_slice %100 {offsets = [0, 96], sizes = [2, 32], strides = [1, 1]} : vector<2x128xf32> to vector<2x32xf32>
    %104 = vector.extract_strided_slice %95 {offsets = [0, 64], sizes = [2, 32], strides = [1, 1]} : vector<2x128xf32> to vector<2x32xf32>
    %105 = math.tanh %104 : vector<2x32xf32>
    %106 = arith.mulf %102, %88 : vector<2x32xf32>
    %107 = arith.mulf %101, %105 : vector<2x32xf32>
    %108 = arith.addf %106, %107 : vector<2x32xf32>
    %109 = math.tanh %108 : vector<2x32xf32>
    %110 = arith.mulf %103, %109 : vector<2x32xf32>
    %111 = vector.shape_cast %110 : vector<2x32xf32> to vector<2x1x32xf32>
    %c0_31 = arith.constant 0 : index
    %c4 = arith.constant 4 : index
    %c0_32 = arith.constant 0 : index
    %112 = vector.load %arg6[%c0_31, %c4, %c0_32] : memref<2x8x64xf32, #tpu.memory_space<vmem>>, vector<2x1x32xf32>
    tpu.vector_store %arg6[%c0_31, %c4, %c0_32], %111 {strides = array<i32>} : memref<2x8x64xf32, #tpu.memory_space<vmem>>, vector<2x1x32xf32>,
    %cst_33 = arith.constant dense<0.000000e+00> : vector<2x128xf32>
    %113 = tpu.matmul %110, %3, %cst_33 {dimension_numbers = #tpu.dot_dimension_numbers<[1], [0], [0], [1], [0, 0, 1, 1], [], []>} : vector<2x32xf32>, vector<32x128xf32>, vector<2x128xf32> -> vector<2x128xf32>
    %114 = vector.broadcast %4 : vector<1x128xf32> to vector<2x128xf32>
    %115 = arith.addf %114, %113 : vector<2x128xf32>
    %116 = arith.negf %115 : vector<2x128xf32>
    %117 = math.exp %116 : vector<2x128xf32>
    %cst_34 = arith.constant 1.000000e+00 : f32
    %118 = vector.broadcast %cst_34 : f32 to vector<2x128xf32>
    %119 = arith.addf %118, %117 : vector<2x128xf32>
    %120 = arith.divf %118, %119 : vector<2x128xf32>
    %121 = vector.extract_strided_slice %120 {offsets = [0, 0], sizes = [2, 32], strides = [1, 1]} : vector<2x128xf32> to vector<2x32xf32>
    %122 = vector.extract_strided_slice %120 {offsets = [0, 32], sizes = [2, 32], strides = [1, 1]} : vector<2x128xf32> to vector<2x32xf32>
    %123 = vector.extract_strided_slice %120 {offsets = [0, 96], sizes = [2, 32], strides = [1, 1]} : vector<2x128xf32> to vector<2x32xf32>
    %124 = vector.extract_strided_slice %115 {offsets = [0, 64], sizes = [2, 32], strides = [1, 1]} : vector<2x128xf32> to vector<2x32xf32>
    %125 = math.tanh %124 : vector<2x32xf32>
    %126 = arith.mulf %122, %108 : vector<2x32xf32>
    %127 = arith.mulf %121, %125 : vector<2x32xf32>
    %128 = arith.addf %126, %127 : vector<2x32xf32>
    %129 = math.tanh %128 : vector<2x32xf32>
    %130 = arith.mulf %123, %129 : vector<2x32xf32>
    %131 = vector.shape_cast %130 : vector<2x32xf32> to vector<2x1x32xf32>
    %c0_35 = arith.constant 0 : index
    %c5 = arith.constant 5 : index
    %c0_36 = arith.constant 0 : index
    %132 = vector.load %arg6[%c0_35, %c5, %c0_36] : memref<2x8x64xf32, #tpu.memory_space<vmem>>, vector<2x1x32xf32>
    tpu.vector_store %arg6[%c0_35, %c5, %c0_36], %131 {strides = array<i32>} : memref<2x8x64xf32, #tpu.memory_space<vmem>>, vector<2x1x32xf32>,
    %cst_37 = arith.constant dense<0.000000e+00> : vector<2x128xf32>
    %133 = tpu.matmul %130, %3, %cst_37 {dimension_numbers = #tpu.dot_dimension_numbers<[1], [0], [0], [1], [0, 0, 1, 1], [], []>} : vector<2x32xf32>, vector<32x128xf32>, vector<2x128xf32> -> vector<2x128xf32>
    %134 = vector.broadcast %4 : vector<1x128xf32> to vector<2x128xf32>
    %135 = arith.addf %134, %133 : vector<2x128xf32>
    %136 = arith.negf %135 : vector<2x128xf32>
    %137 = math.exp %136 : vector<2x128xf32>
    %cst_38 = arith.constant 1.000000e+00 : f32
    %138 = vector.broadcast %cst_38 : f32 to vector<2x128xf32>
    %139 = arith.addf %138, %137 : vector<2x128xf32>
    %140 = arith.divf %138, %139 : vector<2x128xf32>
    %141 = vector.extract_strided_slice %140 {offsets = [0, 0], sizes = [2, 32], strides = [1, 1]} : vector<2x128xf32> to vector<2x32xf32>
    %142 = vector.extract_strided_slice %140 {offsets = [0, 32], sizes = [2, 32], strides = [1, 1]} : vector<2x128xf32> to vector<2x32xf32>
    %143 = vector.extract_strided_slice %140 {offsets = [0, 96], sizes = [2, 32], strides = [1, 1]} : vector<2x128xf32> to vector<2x32xf32>
    %144 = vector.extract_strided_slice %135 {offsets = [0, 64], sizes = [2, 32], strides = [1, 1]} : vector<2x128xf32> to vector<2x32xf32>
    %145 = math.tanh %144 : vector<2x32xf32>
    %146 = arith.mulf %142, %128 : vector<2x32xf32>
    %147 = arith.mulf %141, %145 : vector<2x32xf32>
    %148 = arith.addf %146, %147 : vector<2x32xf32>
    %149 = math.tanh %148 : vector<2x32xf32>
    %150 = arith.mulf %143, %149 : vector<2x32xf32>
    %151 = vector.shape_cast %150 : vector<2x32xf32> to vector<2x1x32xf32>
    %c0_39 = arith.constant 0 : index
    %c6 = arith.constant 6 : index
    %c0_40 = arith.constant 0 : index
    %152 = vector.load %arg6[%c0_39, %c6, %c0_40] : memref<2x8x64xf32, #tpu.memory_space<vmem>>, vector<2x1x32xf32>
    tpu.vector_store %arg6[%c0_39, %c6, %c0_40], %151 {strides = array<i32>} : memref<2x8x64xf32, #tpu.memory_space<vmem>>, vector<2x1x32xf32>,
    %cst_41 = arith.constant dense<0.000000e+00> : vector<2x128xf32>
    %153 = tpu.matmul %150, %3, %cst_41 {dimension_numbers = #tpu.dot_dimension_numbers<[1], [0], [0], [1], [0, 0, 1, 1], [], []>} : vector<2x32xf32>, vector<32x128xf32>, vector<2x128xf32> -> vector<2x128xf32>
    %154 = vector.broadcast %4 : vector<1x128xf32> to vector<2x128xf32>
    %155 = arith.addf %154, %153 : vector<2x128xf32>
    %156 = arith.negf %155 : vector<2x128xf32>
    %157 = math.exp %156 : vector<2x128xf32>
    %cst_42 = arith.constant 1.000000e+00 : f32
    %158 = vector.broadcast %cst_42 : f32 to vector<2x128xf32>
    %159 = arith.addf %158, %157 : vector<2x128xf32>
    %160 = arith.divf %158, %159 : vector<2x128xf32>
    %161 = vector.extract_strided_slice %160 {offsets = [0, 0], sizes = [2, 32], strides = [1, 1]} : vector<2x128xf32> to vector<2x32xf32>
    %162 = vector.extract_strided_slice %160 {offsets = [0, 32], sizes = [2, 32], strides = [1, 1]} : vector<2x128xf32> to vector<2x32xf32>
    %163 = vector.extract_strided_slice %160 {offsets = [0, 96], sizes = [2, 32], strides = [1, 1]} : vector<2x128xf32> to vector<2x32xf32>
    %164 = vector.extract_strided_slice %155 {offsets = [0, 64], sizes = [2, 32], strides = [1, 1]} : vector<2x128xf32> to vector<2x32xf32>
    %165 = math.tanh %164 : vector<2x32xf32>
    %166 = arith.mulf %162, %148 : vector<2x32xf32>
    %167 = arith.mulf %161, %165 : vector<2x32xf32>
    %168 = arith.addf %166, %167 : vector<2x32xf32>
    %169 = math.tanh %168 : vector<2x32xf32>
    %170 = arith.mulf %163, %169 : vector<2x32xf32>
    %171 = vector.shape_cast %170 : vector<2x32xf32> to vector<2x1x32xf32>
    %c0_43 = arith.constant 0 : index
    %c7 = arith.constant 7 : index
    %c0_44 = arith.constant 0 : index
    %172 = vector.load %arg6[%c0_43, %c7, %c0_44] : memref<2x8x64xf32, #tpu.memory_space<vmem>>, vector<2x1x32xf32>
    tpu.vector_store %arg6[%c0_43, %c7, %c0_44], %171 {strides = array<i32>} : memref<2x8x64xf32, #tpu.memory_space<vmem>>, vector<2x1x32xf32>,
    %c0_45 = arith.constant 0 : index
    %c0_46 = arith.constant 0 : index
    %c0_47 = arith.constant 0 : index
    %173 = vector.load %arg6[%c0_45, %c0_46, %c0_47] : memref<2x8x64xf32, #tpu.memory_space<vmem>>, vector<2x8x32xf32>
    %174 = vector.shape_cast %173 : vector<2x8x32xf32> to vector<16x32xf32>
    %cst_48 = arith.constant dense<0.000000e+00> : vector<16x128xf32>
    %175 = tpu.matmul %174, %1, %cst_48 {dimension_numbers = #tpu.dot_dimension_numbers<[1], [0], [0], [1], [0, 0, 1, 1], [], []>} : vector<16x32xf32>, vector<32x128xf32>, vector<16x128xf32> -> vector<16x128xf32>
    %176 = vector.shape_cast %175 : vector<16x128xf32> to vector<2x8x128xf32>
    %177 = arith.addf %176, %10 : vector<2x8x128xf32>
    %178 = vector.extract_strided_slice %177 {offsets = [0, 0, 0], sizes = [2, 1, 128], strides = [1, 1, 1]} : vector<2x8x128xf32> to vector<2x1x128xf32>
    %179 = vector.shape_cast %178 : vector<2x1x128xf32> to vector<2x128xf32>
    %cst_49 = arith.constant dense<0.000000e+00> : vector<2x128xf32>
    %180 = tpu.matmul %170, %3, %cst_49 {dimension_numbers = #tpu.dot_dimension_numbers<[1], [0], [0], [1], [0, 0, 1, 1], [], []>} : vector<2x32xf32>, vector<32x128xf32>, vector<2x128xf32> -> vector<2x128xf32>
    %181 = arith.addf %179, %180 : vector<2x128xf32>
    %182 = arith.negf %181 : vector<2x128xf32>
    %183 = math.exp %182 : vector<2x128xf32>
    %cst_50 = arith.constant 1.000000e+00 : f32
    %184 = vector.broadcast %cst_50 : f32 to vector<2x128xf32>
    %185 = arith.addf %184, %183 : vector<2x128xf32>
    %186 = arith.divf %184, %185 : vector<2x128xf32>
    %187 = vector.extract_strided_slice %186 {offsets = [0, 0], sizes = [2, 32], strides = [1, 1]} : vector<2x128xf32> to vector<2x32xf32>
    %188 = vector.extract_strided_slice %186 {offsets = [0, 32], sizes = [2, 32], strides = [1, 1]} : vector<2x128xf32> to vector<2x32xf32>
    %189 = vector.extract_strided_slice %186 {offsets = [0, 96], sizes = [2, 32], strides = [1, 1]} : vector<2x128xf32> to vector<2x32xf32>
    %190 = vector.extract_strided_slice %181 {offsets = [0, 64], sizes = [2, 32], strides = [1, 1]} : vector<2x128xf32> to vector<2x32xf32>
    %191 = math.tanh %190 : vector<2x32xf32>
    %192 = arith.mulf %188, %168 : vector<2x32xf32>
    %193 = arith.mulf %187, %191 : vector<2x32xf32>
    %194 = arith.addf %192, %193 : vector<2x32xf32>
    %195 = math.tanh %194 : vector<2x32xf32>
    %196 = arith.mulf %189, %195 : vector<2x32xf32>
    %197 = vector.shape_cast %196 : vector<2x32xf32> to vector<2x1x32xf32>
    %c0_51 = arith.constant 0 : index
    %c0_52 = arith.constant 0 : index
    %c0_53 = arith.constant 0 : index
    %198 = vector.load %arg6[%c0_51, %c0_52, %c0_53] : memref<2x8x64xf32, #tpu.memory_space<vmem>>, vector<2x1x32xf32>
    tpu.vector_store %arg6[%c0_51, %c0_52, %c0_53], %197 {strides = array<i32>} : memref<2x8x64xf32, #tpu.memory_space<vmem>>, vector<2x1x32xf32>,
    %199 = vector.extract_strided_slice %177 {offsets = [0, 1, 0], sizes = [2, 1, 128], strides = [1, 1, 1]} : vector<2x8x128xf32> to vector<2x1x128xf32>
    %200 = vector.shape_cast %199 : vector<2x1x128xf32> to vector<2x128xf32>
    %cst_54 = arith.constant dense<0.000000e+00> : vector<2x128xf32>
    %201 = tpu.matmul %196, %3, %cst_54 {dimension_numbers = #tpu.dot_dimension_numbers<[1], [0], [0], [1], [0, 0, 1, 1], [], []>} : vector<2x32xf32>, vector<32x128xf32>, vector<2x128xf32> -> vector<2x128xf32>
    %202 = arith.addf %200, %201 : vector<2x128xf32>
    %203 = arith.negf %202 : vector<2x128xf32>
    %204 = math.exp %203 : vector<2x128xf32>
    %cst_55 = arith.constant 1.000000e+00 : f32
    %205 = vector.broadcast %cst_55 : f32 to vector<2x128xf32>
    %206 = arith.addf %205, %204 : vector<2x128xf32>
    %207 = arith.divf %205, %206 : vector<2x128xf32>
    %208 = vector.extract_strided_slice %207 {offsets = [0, 0], sizes = [2, 32], strides = [1, 1]} : vector<2x128xf32> to vector<2x32xf32>
    %209 = vector.extract_strided_slice %207 {offsets = [0, 32], sizes = [2, 32], strides = [1, 1]} : vector<2x128xf32> to vector<2x32xf32>
    %210 = vector.extract_strided_slice %207 {offsets = [0, 96], sizes = [2, 32], strides = [1, 1]} : vector<2x128xf32> to vector<2x32xf32>
    %211 = vector.extract_strided_slice %202 {offsets = [0, 64], sizes = [2, 32], strides = [1, 1]} : vector<2x128xf32> to vector<2x32xf32>
    %212 = math.tanh %211 : vector<2x32xf32>
    %213 = arith.mulf %209, %194 : vector<2x32xf32>
    %214 = arith.mulf %208, %212 : vector<2x32xf32>
    %215 = arith.addf %213, %214 : vector<2x32xf32>
    %216 = math.tanh %215 : vector<2x32xf32>
    %217 = arith.mulf %210, %216 : vector<2x32xf32>
    %218 = vector.shape_cast %217 : vector<2x32xf32> to vector<2x1x32xf32>
    %c0_56 = arith.constant 0 : index
    %c1_57 = arith.constant 1 : index
    %c0_58 = arith.constant 0 : index
    %219 = vector.load %arg6[%c0_56, %c1_57, %c0_58] : memref<2x8x64xf32, #tpu.memory_space<vmem>>, vector<2x1x32xf32>
    tpu.vector_store %arg6[%c0_56, %c1_57, %c0_58], %218 {strides = array<i32>} : memref<2x8x64xf32, #tpu.memory_space<vmem>>, vector<2x1x32xf32>,
    %220 = vector.extract_strided_slice %177 {offsets = [0, 2, 0], sizes = [2, 1, 128], strides = [1, 1, 1]} : vector<2x8x128xf32> to vector<2x1x128xf32>
    %221 = vector.shape_cast %220 : vector<2x1x128xf32> to vector<2x128xf32>
    %cst_59 = arith.constant dense<0.000000e+00> : vector<2x128xf32>
    %222 = tpu.matmul %217, %3, %cst_59 {dimension_numbers = #tpu.dot_dimension_numbers<[1], [0], [0], [1], [0, 0, 1, 1], [], []>} : vector<2x32xf32>, vector<32x128xf32>, vector<2x128xf32> -> vector<2x128xf32>
    %223 = arith.addf %221, %222 : vector<2x128xf32>
    %224 = arith.negf %223 : vector<2x128xf32>
    %225 = math.exp %224 : vector<2x128xf32>
    %cst_60 = arith.constant 1.000000e+00 : f32
    %226 = vector.broadcast %cst_60 : f32 to vector<2x128xf32>
    %227 = arith.addf %226, %225 : vector<2x128xf32>
    %228 = arith.divf %226, %227 : vector<2x128xf32>
    %229 = vector.extract_strided_slice %228 {offsets = [0, 0], sizes = [2, 32], strides = [1, 1]} : vector<2x128xf32> to vector<2x32xf32>
    %230 = vector.extract_strided_slice %228 {offsets = [0, 32], sizes = [2, 32], strides = [1, 1]} : vector<2x128xf32> to vector<2x32xf32>
    %231 = vector.extract_strided_slice %228 {offsets = [0, 96], sizes = [2, 32], strides = [1, 1]} : vector<2x128xf32> to vector<2x32xf32>
    %232 = vector.extract_strided_slice %223 {offsets = [0, 64], sizes = [2, 32], strides = [1, 1]} : vector<2x128xf32> to vector<2x32xf32>
    %233 = math.tanh %232 : vector<2x32xf32>
    %234 = arith.mulf %230, %215 : vector<2x32xf32>
    %235 = arith.mulf %229, %233 : vector<2x32xf32>
    %236 = arith.addf %234, %235 : vector<2x32xf32>
    %237 = math.tanh %236 : vector<2x32xf32>
    %238 = arith.mulf %231, %237 : vector<2x32xf32>
    %239 = vector.shape_cast %238 : vector<2x32xf32> to vector<2x1x32xf32>
    %c0_61 = arith.constant 0 : index
    %c2_62 = arith.constant 2 : index
    %c0_63 = arith.constant 0 : index
    %240 = vector.load %arg6[%c0_61, %c2_62, %c0_63] : memref<2x8x64xf32, #tpu.memory_space<vmem>>, vector<2x1x32xf32>
    tpu.vector_store %arg6[%c0_61, %c2_62, %c0_63], %239 {strides = array<i32>} : memref<2x8x64xf32, #tpu.memory_space<vmem>>, vector<2x1x32xf32>,
    %241 = vector.extract_strided_slice %177 {offsets = [0, 3, 0], sizes = [2, 1, 128], strides = [1, 1, 1]} : vector<2x8x128xf32> to vector<2x1x128xf32>
    %242 = vector.shape_cast %241 : vector<2x1x128xf32> to vector<2x128xf32>
    %cst_64 = arith.constant dense<0.000000e+00> : vector<2x128xf32>
    %243 = tpu.matmul %238, %3, %cst_64 {dimension_numbers = #tpu.dot_dimension_numbers<[1], [0], [0], [1], [0, 0, 1, 1], [], []>} : vector<2x32xf32>, vector<32x128xf32>, vector<2x128xf32> -> vector<2x128xf32>
    %244 = arith.addf %242, %243 : vector<2x128xf32>
    %245 = arith.negf %244 : vector<2x128xf32>
    %246 = math.exp %245 : vector<2x128xf32>
    %cst_65 = arith.constant 1.000000e+00 : f32
    %247 = vector.broadcast %cst_65 : f32 to vector<2x128xf32>
    %248 = arith.addf %247, %246 : vector<2x128xf32>
    %249 = arith.divf %247, %248 : vector<2x128xf32>
    %250 = vector.extract_strided_slice %249 {offsets = [0, 0], sizes = [2, 32], strides = [1, 1]} : vector<2x128xf32> to vector<2x32xf32>
    %251 = vector.extract_strided_slice %249 {offsets = [0, 32], sizes = [2, 32], strides = [1, 1]} : vector<2x128xf32> to vector<2x32xf32>
    %252 = vector.extract_strided_slice %249 {offsets = [0, 96], sizes = [2, 32], strides = [1, 1]} : vector<2x128xf32> to vector<2x32xf32>
    %253 = vector.extract_strided_slice %244 {offsets = [0, 64], sizes = [2, 32], strides = [1, 1]} : vector<2x128xf32> to vector<2x32xf32>
    %254 = math.tanh %253 : vector<2x32xf32>
    %255 = arith.mulf %251, %236 : vector<2x32xf32>
    %256 = arith.mulf %250, %254 : vector<2x32xf32>
    %257 = arith.addf %255, %256 : vector<2x32xf32>
    %258 = math.tanh %257 : vector<2x32xf32>
    %259 = arith.mulf %252, %258 : vector<2x32xf32>
    %260 = vector.shape_cast %259 : vector<2x32xf32> to vector<2x1x32xf32>
    %c0_66 = arith.constant 0 : index
    %c3_67 = arith.constant 3 : index
    %c0_68 = arith.constant 0 : index
    %261 = vector.load %arg6[%c0_66, %c3_67, %c0_68] : memref<2x8x64xf32, #tpu.memory_space<vmem>>, vector<2x1x32xf32>
    tpu.vector_store %arg6[%c0_66, %c3_67, %c0_68], %260 {strides = array<i32>} : memref<2x8x64xf32, #tpu.memory_space<vmem>>, vector<2x1x32xf32>,
    %262 = vector.extract_strided_slice %177 {offsets = [0, 4, 0], sizes = [2, 1, 128], strides = [1, 1, 1]} : vector<2x8x128xf32> to vector<2x1x128xf32>
    %263 = vector.shape_cast %262 : vector<2x1x128xf32> to vector<2x128xf32>
    %cst_69 = arith.constant dense<0.000000e+00> : vector<2x128xf32>
    %264 = tpu.matmul %259, %3, %cst_69 {dimension_numbers = #tpu.dot_dimension_numbers<[1], [0], [0], [1], [0, 0, 1, 1], [], []>} : vector<2x32xf32>, vector<32x128xf32>, vector<2x128xf32> -> vector<2x128xf32>
    %265 = arith.addf %263, %264 : vector<2x128xf32>
    %266 = arith.negf %265 : vector<2x128xf32>
    %267 = math.exp %266 : vector<2x128xf32>
    %cst_70 = arith.constant 1.000000e+00 : f32
    %268 = vector.broadcast %cst_70 : f32 to vector<2x128xf32>
    %269 = arith.addf %268, %267 : vector<2x128xf32>
    %270 = arith.divf %268, %269 : vector<2x128xf32>
    %271 = vector.extract_strided_slice %270 {offsets = [0, 0], sizes = [2, 32], strides = [1, 1]} : vector<2x128xf32> to vector<2x32xf32>
    %272 = vector.extract_strided_slice %270 {offsets = [0, 32], sizes = [2, 32], strides = [1, 1]} : vector<2x128xf32> to vector<2x32xf32>
    %273 = vector.extract_strided_slice %270 {offsets = [0, 96], sizes = [2, 32], strides = [1, 1]} : vector<2x128xf32> to vector<2x32xf32>
    %274 = vector.extract_strided_slice %265 {offsets = [0, 64], sizes = [2, 32], strides = [1, 1]} : vector<2x128xf32> to vector<2x32xf32>
    %275 = math.tanh %274 : vector<2x32xf32>
    %276 = arith.mulf %272, %257 : vector<2x32xf32>
    %277 = arith.mulf %271, %275 : vector<2x32xf32>
    %278 = arith.addf %276, %277 : vector<2x32xf32>
    %279 = math.tanh %278 : vector<2x32xf32>
    %280 = arith.mulf %273, %279 : vector<2x32xf32>
    %281 = vector.shape_cast %280 : vector<2x32xf32> to vector<2x1x32xf32>
    %c0_71 = arith.constant 0 : index
    %c4_72 = arith.constant 4 : index
    %c0_73 = arith.constant 0 : index
    %282 = vector.load %arg6[%c0_71, %c4_72, %c0_73] : memref<2x8x64xf32, #tpu.memory_space<vmem>>, vector<2x1x32xf32>
    tpu.vector_store %arg6[%c0_71, %c4_72, %c0_73], %281 {strides = array<i32>} : memref<2x8x64xf32, #tpu.memory_space<vmem>>, vector<2x1x32xf32>,
    %283 = vector.extract_strided_slice %177 {offsets = [0, 5, 0], sizes = [2, 1, 128], strides = [1, 1, 1]} : vector<2x8x128xf32> to vector<2x1x128xf32>
    %284 = vector.shape_cast %283 : vector<2x1x128xf32> to vector<2x128xf32>
    %cst_74 = arith.constant dense<0.000000e+00> : vector<2x128xf32>
    %285 = tpu.matmul %280, %3, %cst_74 {dimension_numbers = #tpu.dot_dimension_numbers<[1], [0], [0], [1], [0, 0, 1, 1], [], []>} : vector<2x32xf32>, vector<32x128xf32>, vector<2x128xf32> -> vector<2x128xf32>
    %286 = arith.addf %284, %285 : vector<2x128xf32>
    %287 = arith.negf %286 : vector<2x128xf32>
    %288 = math.exp %287 : vector<2x128xf32>
    %cst_75 = arith.constant 1.000000e+00 : f32
    %289 = vector.broadcast %cst_75 : f32 to vector<2x128xf32>
    %290 = arith.addf %289, %288 : vector<2x128xf32>
    %291 = arith.divf %289, %290 : vector<2x128xf32>
    %292 = vector.extract_strided_slice %291 {offsets = [0, 0], sizes = [2, 32], strides = [1, 1]} : vector<2x128xf32> to vector<2x32xf32>
    %293 = vector.extract_strided_slice %291 {offsets = [0, 32], sizes = [2, 32], strides = [1, 1]} : vector<2x128xf32> to vector<2x32xf32>
    %294 = vector.extract_strided_slice %291 {offsets = [0, 96], sizes = [2, 32], strides = [1, 1]} : vector<2x128xf32> to vector<2x32xf32>
    %295 = vector.extract_strided_slice %286 {offsets = [0, 64], sizes = [2, 32], strides = [1, 1]} : vector<2x128xf32> to vector<2x32xf32>
    %296 = math.tanh %295 : vector<2x32xf32>
    %297 = arith.mulf %293, %278 : vector<2x32xf32>
    %298 = arith.mulf %292, %296 : vector<2x32xf32>
    %299 = arith.addf %297, %298 : vector<2x32xf32>
    %300 = math.tanh %299 : vector<2x32xf32>
    %301 = arith.mulf %294, %300 : vector<2x32xf32>
    %302 = vector.shape_cast %301 : vector<2x32xf32> to vector<2x1x32xf32>
    %c0_76 = arith.constant 0 : index
    %c5_77 = arith.constant 5 : index
    %c0_78 = arith.constant 0 : index
    %303 = vector.load %arg6[%c0_76, %c5_77, %c0_78] : memref<2x8x64xf32, #tpu.memory_space<vmem>>, vector<2x1x32xf32>
    tpu.vector_store %arg6[%c0_76, %c5_77, %c0_78], %302 {strides = array<i32>} : memref<2x8x64xf32, #tpu.memory_space<vmem>>, vector<2x1x32xf32>,
    %304 = vector.extract_strided_slice %177 {offsets = [0, 6, 0], sizes = [2, 1, 128], strides = [1, 1, 1]} : vector<2x8x128xf32> to vector<2x1x128xf32>
    %305 = vector.shape_cast %304 : vector<2x1x128xf32> to vector<2x128xf32>
    %cst_79 = arith.constant dense<0.000000e+00> : vector<2x128xf32>
    %306 = tpu.matmul %301, %3, %cst_79 {dimension_numbers = #tpu.dot_dimension_numbers<[1], [0], [0], [1], [0, 0, 1, 1], [], []>} : vector<2x32xf32>, vector<32x128xf32>, vector<2x128xf32> -> vector<2x128xf32>
    %307 = arith.addf %305, %306 : vector<2x128xf32>
    %308 = arith.negf %307 : vector<2x128xf32>
    %309 = math.exp %308 : vector<2x128xf32>
    %cst_80 = arith.constant 1.000000e+00 : f32
    %310 = vector.broadcast %cst_80 : f32 to vector<2x128xf32>
    %311 = arith.addf %310, %309 : vector<2x128xf32>
    %312 = arith.divf %310, %311 : vector<2x128xf32>
    %313 = vector.extract_strided_slice %312 {offsets = [0, 0], sizes = [2, 32], strides = [1, 1]} : vector<2x128xf32> to vector<2x32xf32>
    %314 = vector.extract_strided_slice %312 {offsets = [0, 32], sizes = [2, 32], strides = [1, 1]} : vector<2x128xf32> to vector<2x32xf32>
    %315 = vector.extract_strided_slice %312 {offsets = [0, 96], sizes = [2, 32], strides = [1, 1]} : vector<2x128xf32> to vector<2x32xf32>
    %316 = vector.extract_strided_slice %307 {offsets = [0, 64], sizes = [2, 32], strides = [1, 1]} : vector<2x128xf32> to vector<2x32xf32>
    %317 = math.tanh %316 : vector<2x32xf32>
    %318 = arith.mulf %314, %299 : vector<2x32xf32>
    %319 = arith.mulf %313, %317 : vector<2x32xf32>
    %320 = arith.addf %318, %319 : vector<2x32xf32>
    %321 = math.tanh %320 : vector<2x32xf32>
    %322 = arith.mulf %315, %321 : vector<2x32xf32>
    %323 = vector.shape_cast %322 : vector<2x32xf32> to vector<2x1x32xf32>
    %c0_81 = arith.constant 0 : index
    %c6_82 = arith.constant 6 : index
    %c0_83 = arith.constant 0 : index
    %324 = vector.load %arg6[%c0_81, %c6_82, %c0_83] : memref<2x8x64xf32, #tpu.memory_space<vmem>>, vector<2x1x32xf32>
    tpu.vector_store %arg6[%c0_81, %c6_82, %c0_83], %323 {strides = array<i32>} : memref<2x8x64xf32, #tpu.memory_space<vmem>>, vector<2x1x32xf32>,
    %325 = vector.extract_strided_slice %177 {offsets = [0, 7, 0], sizes = [2, 1, 128], strides = [1, 1, 1]} : vector<2x8x128xf32> to vector<2x1x128xf32>
    %326 = vector.shape_cast %325 : vector<2x1x128xf32> to vector<2x128xf32>
    %cst_84 = arith.constant dense<0.000000e+00> : vector<2x128xf32>
    %327 = tpu.matmul %322, %3, %cst_84 {dimension_numbers = #tpu.dot_dimension_numbers<[1], [0], [0], [1], [0, 0, 1, 1], [], []>} : vector<2x32xf32>, vector<32x128xf32>, vector<2x128xf32> -> vector<2x128xf32>
    %328 = arith.addf %326, %327 : vector<2x128xf32>
    %329 = arith.negf %328 : vector<2x128xf32>
    %330 = math.exp %329 : vector<2x128xf32>
    %cst_85 = arith.constant 1.000000e+00 : f32
    %331 = vector.broadcast %cst_85 : f32 to vector<2x128xf32>
    %332 = arith.addf %331, %330 : vector<2x128xf32>
    %333 = arith.divf %331, %332 : vector<2x128xf32>
    %334 = vector.extract_strided_slice %333 {offsets = [0, 0], sizes = [2, 32], strides = [1, 1]} : vector<2x128xf32> to vector<2x32xf32>
    %335 = vector.extract_strided_slice %333 {offsets = [0, 32], sizes = [2, 32], strides = [1, 1]} : vector<2x128xf32> to vector<2x32xf32>
    %336 = vector.extract_strided_slice %333 {offsets = [0, 96], sizes = [2, 32], strides = [1, 1]} : vector<2x128xf32> to vector<2x32xf32>
    %337 = vector.extract_strided_slice %328 {offsets = [0, 64], sizes = [2, 32], strides = [1, 1]} : vector<2x128xf32> to vector<2x32xf32>
    %338 = math.tanh %337 : vector<2x32xf32>
    %339 = arith.mulf %335, %320 : vector<2x32xf32>
    %340 = arith.mulf %334, %338 : vector<2x32xf32>
    %341 = arith.addf %339, %340 : vector<2x32xf32>
    %342 = math.tanh %341 : vector<2x32xf32>
    %343 = arith.mulf %336, %342 : vector<2x32xf32>
    %344 = vector.shape_cast %343 : vector<2x32xf32> to vector<2x1x32xf32>
    %c0_86 = arith.constant 0 : index
    %c7_87 = arith.constant 7 : index
    %c0_88 = arith.constant 0 : index
    %345 = vector.load %arg6[%c0_86, %c7_87, %c0_88] : memref<2x8x64xf32, #tpu.memory_space<vmem>>, vector<2x1x32xf32>
    tpu.vector_store %arg6[%c0_86, %c7_87, %c0_88], %344 {strides = array<i32>} : memref<2x8x64xf32, #tpu.memory_space<vmem>>, vector<2x1x32xf32>,
    %c0_89 = arith.constant 0 : index
    %c0_90 = arith.constant 0 : index
    %c0_91 = arith.constant 0 : index
    %346 = vector.load %arg6[%c0_89, %c0_90, %c0_91] : memref<2x8x64xf32, #tpu.memory_space<vmem>>, vector<2x8x32xf32>
    %347 = vector.shape_cast %346 : vector<2x8x32xf32> to vector<16x32xf32>
    %cst_92 = arith.constant dense<0.000000e+00> : vector<16x128xf32>
    %348 = tpu.matmul %347, %1, %cst_92 {dimension_numbers = #tpu.dot_dimension_numbers<[1], [0], [0], [1], [0, 0, 1, 1], [], []>} : vector<16x32xf32>, vector<32x128xf32>, vector<16x128xf32> -> vector<16x128xf32>
    %349 = vector.shape_cast %348 : vector<16x128xf32> to vector<2x8x128xf32>
    %350 = arith.addf %349, %10 : vector<2x8x128xf32>
    %351 = vector.extract_strided_slice %350 {offsets = [0, 0, 0], sizes = [2, 1, 128], strides = [1, 1, 1]} : vector<2x8x128xf32> to vector<2x1x128xf32>
    %352 = vector.shape_cast %351 : vector<2x1x128xf32> to vector<2x128xf32>
    %cst_93 = arith.constant dense<0.000000e+00> : vector<2x128xf32>
    %353 = tpu.matmul %343, %3, %cst_93 {dimension_numbers = #tpu.dot_dimension_numbers<[1], [0], [0], [1], [0, 0, 1, 1], [], []>} : vector<2x32xf32>, vector<32x128xf32>, vector<2x128xf32> -> vector<2x128xf32>
    %354 = arith.addf %352, %353 : vector<2x128xf32>
    %355 = arith.negf %354 : vector<2x128xf32>
    %356 = math.exp %355 : vector<2x128xf32>
    %cst_94 = arith.constant 1.000000e+00 : f32
    %357 = vector.broadcast %cst_94 : f32 to vector<2x128xf32>
    %358 = arith.addf %357, %356 : vector<2x128xf32>
    %359 = arith.divf %357, %358 : vector<2x128xf32>
    %360 = vector.extract_strided_slice %359 {offsets = [0, 0], sizes = [2, 32], strides = [1, 1]} : vector<2x128xf32> to vector<2x32xf32>
    %361 = vector.extract_strided_slice %359 {offsets = [0, 32], sizes = [2, 32], strides = [1, 1]} : vector<2x128xf32> to vector<2x32xf32>
    %362 = vector.extract_strided_slice %359 {offsets = [0, 96], sizes = [2, 32], strides = [1, 1]} : vector<2x128xf32> to vector<2x32xf32>
    %363 = vector.extract_strided_slice %354 {offsets = [0, 64], sizes = [2, 32], strides = [1, 1]} : vector<2x128xf32> to vector<2x32xf32>
    %364 = math.tanh %363 : vector<2x32xf32>
    %365 = arith.mulf %361, %341 : vector<2x32xf32>
    %366 = arith.mulf %360, %364 : vector<2x32xf32>
    %367 = arith.addf %365, %366 : vector<2x32xf32>
    %368 = math.tanh %367 : vector<2x32xf32>
    %369 = arith.mulf %362, %368 : vector<2x32xf32>
    %370 = vector.shape_cast %369 : vector<2x32xf32> to vector<2x1x32xf32>
    %c0_95 = arith.constant 0 : index
    %c0_96 = arith.constant 0 : index
    %c0_97 = arith.constant 0 : index
    %371 = vector.load %arg6[%c0_95, %c0_96, %c0_97] : memref<2x8x64xf32, #tpu.memory_space<vmem>>, vector<2x1x32xf32>
    tpu.vector_store %arg6[%c0_95, %c0_96, %c0_97], %370 {strides = array<i32>} : memref<2x8x64xf32, #tpu.memory_space<vmem>>, vector<2x1x32xf32>,
    %372 = vector.extract_strided_slice %350 {offsets = [0, 1, 0], sizes = [2, 1, 128], strides = [1, 1, 1]} : vector<2x8x128xf32> to vector<2x1x128xf32>
    %373 = vector.shape_cast %372 : vector<2x1x128xf32> to vector<2x128xf32>
    %cst_98 = arith.constant dense<0.000000e+00> : vector<2x128xf32>
    %374 = tpu.matmul %369, %3, %cst_98 {dimension_numbers = #tpu.dot_dimension_numbers<[1], [0], [0], [1], [0, 0, 1, 1], [], []>} : vector<2x32xf32>, vector<32x128xf32>, vector<2x128xf32> -> vector<2x128xf32>
    %375 = arith.addf %373, %374 : vector<2x128xf32>
    %376 = arith.negf %375 : vector<2x128xf32>
    %377 = math.exp %376 : vector<2x128xf32>
    %cst_99 = arith.constant 1.000000e+00 : f32
    %378 = vector.broadcast %cst_99 : f32 to vector<2x128xf32>
    %379 = arith.addf %378, %377 : vector<2x128xf32>
    %380 = arith.divf %378, %379 : vector<2x128xf32>
    %381 = vector.extract_strided_slice %380 {offsets = [0, 0], sizes = [2, 32], strides = [1, 1]} : vector<2x128xf32> to vector<2x32xf32>
    %382 = vector.extract_strided_slice %380 {offsets = [0, 32], sizes = [2, 32], strides = [1, 1]} : vector<2x128xf32> to vector<2x32xf32>
    %383 = vector.extract_strided_slice %380 {offsets = [0, 96], sizes = [2, 32], strides = [1, 1]} : vector<2x128xf32> to vector<2x32xf32>
    %384 = vector.extract_strided_slice %375 {offsets = [0, 64], sizes = [2, 32], strides = [1, 1]} : vector<2x128xf32> to vector<2x32xf32>
    %385 = math.tanh %384 : vector<2x32xf32>
    %386 = arith.mulf %382, %367 : vector<2x32xf32>
    %387 = arith.mulf %381, %385 : vector<2x32xf32>
    %388 = arith.addf %386, %387 : vector<2x32xf32>
    %389 = math.tanh %388 : vector<2x32xf32>
    %390 = arith.mulf %383, %389 : vector<2x32xf32>
    %391 = vector.shape_cast %390 : vector<2x32xf32> to vector<2x1x32xf32>
    %c0_100 = arith.constant 0 : index
    %c1_101 = arith.constant 1 : index
    %c0_102 = arith.constant 0 : index
    %392 = vector.load %arg6[%c0_100, %c1_101, %c0_102] : memref<2x8x64xf32, #tpu.memory_space<vmem>>, vector<2x1x32xf32>
    tpu.vector_store %arg6[%c0_100, %c1_101, %c0_102], %391 {strides = array<i32>} : memref<2x8x64xf32, #tpu.memory_space<vmem>>, vector<2x1x32xf32>,
    %393 = vector.extract_strided_slice %350 {offsets = [0, 2, 0], sizes = [2, 1, 128], strides = [1, 1, 1]} : vector<2x8x128xf32> to vector<2x1x128xf32>
    %394 = vector.shape_cast %393 : vector<2x1x128xf32> to vector<2x128xf32>
    %cst_103 = arith.constant dense<0.000000e+00> : vector<2x128xf32>
    %395 = tpu.matmul %390, %3, %cst_103 {dimension_numbers = #tpu.dot_dimension_numbers<[1], [0], [0], [1], [0, 0, 1, 1], [], []>} : vector<2x32xf32>, vector<32x128xf32>, vector<2x128xf32> -> vector<2x128xf32>
    %396 = arith.addf %394, %395 : vector<2x128xf32>
    %397 = arith.negf %396 : vector<2x128xf32>
    %398 = math.exp %397 : vector<2x128xf32>
    %cst_104 = arith.constant 1.000000e+00 : f32
    %399 = vector.broadcast %cst_104 : f32 to vector<2x128xf32>
    %400 = arith.addf %399, %398 : vector<2x128xf32>
    %401 = arith.divf %399, %400 : vector<2x128xf32>
    %402 = vector.extract_strided_slice %401 {offsets = [0, 0], sizes = [2, 32], strides = [1, 1]} : vector<2x128xf32> to vector<2x32xf32>
    %403 = vector.extract_strided_slice %401 {offsets = [0, 32], sizes = [2, 32], strides = [1, 1]} : vector<2x128xf32> to vector<2x32xf32>
    %404 = vector.extract_strided_slice %401 {offsets = [0, 96], sizes = [2, 32], strides = [1, 1]} : vector<2x128xf32> to vector<2x32xf32>
    %405 = vector.extract_strided_slice %396 {offsets = [0, 64], sizes = [2, 32], strides = [1, 1]} : vector<2x128xf32> to vector<2x32xf32>
    %406 = math.tanh %405 : vector<2x32xf32>
    %407 = arith.mulf %403, %388 : vector<2x32xf32>
    %408 = arith.mulf %402, %406 : vector<2x32xf32>
    %409 = arith.addf %407, %408 : vector<2x32xf32>
    %410 = math.tanh %409 : vector<2x32xf32>
    %411 = arith.mulf %404, %410 : vector<2x32xf32>
    %412 = vector.shape_cast %411 : vector<2x32xf32> to vector<2x1x32xf32>
    %c0_105 = arith.constant 0 : index
    %c2_106 = arith.constant 2 : index
    %c0_107 = arith.constant 0 : index
    %413 = vector.load %arg6[%c0_105, %c2_106, %c0_107] : memref<2x8x64xf32, #tpu.memory_space<vmem>>, vector<2x1x32xf32>
    tpu.vector_store %arg6[%c0_105, %c2_106, %c0_107], %412 {strides = array<i32>} : memref<2x8x64xf32, #tpu.memory_space<vmem>>, vector<2x1x32xf32>,
    %414 = vector.extract_strided_slice %350 {offsets = [0, 3, 0], sizes = [2, 1, 128], strides = [1, 1, 1]} : vector<2x8x128xf32> to vector<2x1x128xf32>
    %415 = vector.shape_cast %414 : vector<2x1x128xf32> to vector<2x128xf32>
    %cst_108 = arith.constant dense<0.000000e+00> : vector<2x128xf32>
    %416 = tpu.matmul %411, %3, %cst_108 {dimension_numbers = #tpu.dot_dimension_numbers<[1], [0], [0], [1], [0, 0, 1, 1], [], []>} : vector<2x32xf32>, vector<32x128xf32>, vector<2x128xf32> -> vector<2x128xf32>
    %417 = arith.addf %415, %416 : vector<2x128xf32>
    %418 = arith.negf %417 : vector<2x128xf32>
    %419 = math.exp %418 : vector<2x128xf32>
    %cst_109 = arith.constant 1.000000e+00 : f32
    %420 = vector.broadcast %cst_109 : f32 to vector<2x128xf32>
    %421 = arith.addf %420, %419 : vector<2x128xf32>
    %422 = arith.divf %420, %421 : vector<2x128xf32>
    %423 = vector.extract_strided_slice %422 {offsets = [0, 0], sizes = [2, 32], strides = [1, 1]} : vector<2x128xf32> to vector<2x32xf32>
    %424 = vector.extract_strided_slice %422 {offsets = [0, 32], sizes = [2, 32], strides = [1, 1]} : vector<2x128xf32> to vector<2x32xf32>
    %425 = vector.extract_strided_slice %422 {offsets = [0, 96], sizes = [2, 32], strides = [1, 1]} : vector<2x128xf32> to vector<2x32xf32>
    %426 = vector.extract_strided_slice %417 {offsets = [0, 64], sizes = [2, 32], strides = [1, 1]} : vector<2x128xf32> to vector<2x32xf32>
    %427 = math.tanh %426 : vector<2x32xf32>
    %428 = arith.mulf %424, %409 : vector<2x32xf32>
    %429 = arith.mulf %423, %427 : vector<2x32xf32>
    %430 = arith.addf %428, %429 : vector<2x32xf32>
    %431 = math.tanh %430 : vector<2x32xf32>
    %432 = arith.mulf %425, %431 : vector<2x32xf32>
    %433 = vector.shape_cast %432 : vector<2x32xf32> to vector<2x1x32xf32>
    %c0_110 = arith.constant 0 : index
    %c3_111 = arith.constant 3 : index
    %c0_112 = arith.constant 0 : index
    %434 = vector.load %arg6[%c0_110, %c3_111, %c0_112] : memref<2x8x64xf32, #tpu.memory_space<vmem>>, vector<2x1x32xf32>
    tpu.vector_store %arg6[%c0_110, %c3_111, %c0_112], %433 {strides = array<i32>} : memref<2x8x64xf32, #tpu.memory_space<vmem>>, vector<2x1x32xf32>,
    %435 = vector.extract_strided_slice %350 {offsets = [0, 4, 0], sizes = [2, 1, 128], strides = [1, 1, 1]} : vector<2x8x128xf32> to vector<2x1x128xf32>
    %436 = vector.shape_cast %435 : vector<2x1x128xf32> to vector<2x128xf32>
    %cst_113 = arith.constant dense<0.000000e+00> : vector<2x128xf32>
    %437 = tpu.matmul %432, %3, %cst_113 {dimension_numbers = #tpu.dot_dimension_numbers<[1], [0], [0], [1], [0, 0, 1, 1], [], []>} : vector<2x32xf32>, vector<32x128xf32>, vector<2x128xf32> -> vector<2x128xf32>
    %438 = arith.addf %436, %437 : vector<2x128xf32>
    %439 = arith.negf %438 : vector<2x128xf32>
    %440 = math.exp %439 : vector<2x128xf32>
    %cst_114 = arith.constant 1.000000e+00 : f32
    %441 = vector.broadcast %cst_114 : f32 to vector<2x128xf32>
    %442 = arith.addf %441, %440 : vector<2x128xf32>
    %443 = arith.divf %441, %442 : vector<2x128xf32>
    %444 = vector.extract_strided_slice %443 {offsets = [0, 0], sizes = [2, 32], strides = [1, 1]} : vector<2x128xf32> to vector<2x32xf32>
    %445 = vector.extract_strided_slice %443 {offsets = [0, 32], sizes = [2, 32], strides = [1, 1]} : vector<2x128xf32> to vector<2x32xf32>
    %446 = vector.extract_strided_slice %443 {offsets = [0, 96], sizes = [2, 32], strides = [1, 1]} : vector<2x128xf32> to vector<2x32xf32>
    %447 = vector.extract_strided_slice %438 {offsets = [0, 64], sizes = [2, 32], strides = [1, 1]} : vector<2x128xf32> to vector<2x32xf32>
    %448 = math.tanh %447 : vector<2x32xf32>
    %449 = arith.mulf %445, %430 : vector<2x32xf32>
    %450 = arith.mulf %444, %448 : vector<2x32xf32>
    %451 = arith.addf %449, %450 : vector<2x32xf32>
    %452 = math.tanh %451 : vector<2x32xf32>
    %453 = arith.mulf %446, %452 : vector<2x32xf32>
    %454 = vector.shape_cast %453 : vector<2x32xf32> to vector<2x1x32xf32>
    %c0_115 = arith.constant 0 : index
    %c4_116 = arith.constant 4 : index
    %c0_117 = arith.constant 0 : index
    %455 = vector.load %arg6[%c0_115, %c4_116, %c0_117] : memref<2x8x64xf32, #tpu.memory_space<vmem>>, vector<2x1x32xf32>
    tpu.vector_store %arg6[%c0_115, %c4_116, %c0_117], %454 {strides = array<i32>} : memref<2x8x64xf32, #tpu.memory_space<vmem>>, vector<2x1x32xf32>,
    %456 = vector.extract_strided_slice %350 {offsets = [0, 5, 0], sizes = [2, 1, 128], strides = [1, 1, 1]} : vector<2x8x128xf32> to vector<2x1x128xf32>
    %457 = vector.shape_cast %456 : vector<2x1x128xf32> to vector<2x128xf32>
    %cst_118 = arith.constant dense<0.000000e+00> : vector<2x128xf32>
    %458 = tpu.matmul %453, %3, %cst_118 {dimension_numbers = #tpu.dot_dimension_numbers<[1], [0], [0], [1], [0, 0, 1, 1], [], []>} : vector<2x32xf32>, vector<32x128xf32>, vector<2x128xf32> -> vector<2x128xf32>
    %459 = arith.addf %457, %458 : vector<2x128xf32>
    %460 = arith.negf %459 : vector<2x128xf32>
    %461 = math.exp %460 : vector<2x128xf32>
    %cst_119 = arith.constant 1.000000e+00 : f32
    %462 = vector.broadcast %cst_119 : f32 to vector<2x128xf32>
    %463 = arith.addf %462, %461 : vector<2x128xf32>
    %464 = arith.divf %462, %463 : vector<2x128xf32>
    %465 = vector.extract_strided_slice %464 {offsets = [0, 0], sizes = [2, 32], strides = [1, 1]} : vector<2x128xf32> to vector<2x32xf32>
    %466 = vector.extract_strided_slice %464 {offsets = [0, 32], sizes = [2, 32], strides = [1, 1]} : vector<2x128xf32> to vector<2x32xf32>
    %467 = vector.extract_strided_slice %464 {offsets = [0, 96], sizes = [2, 32], strides = [1, 1]} : vector<2x128xf32> to vector<2x32xf32>
    %468 = vector.extract_strided_slice %459 {offsets = [0, 64], sizes = [2, 32], strides = [1, 1]} : vector<2x128xf32> to vector<2x32xf32>
    %469 = math.tanh %468 : vector<2x32xf32>
    %470 = arith.mulf %466, %451 : vector<2x32xf32>
    %471 = arith.mulf %465, %469 : vector<2x32xf32>
    %472 = arith.addf %470, %471 : vector<2x32xf32>
    %473 = math.tanh %472 : vector<2x32xf32>
    %474 = arith.mulf %467, %473 : vector<2x32xf32>
    %475 = vector.shape_cast %474 : vector<2x32xf32> to vector<2x1x32xf32>
    %c0_120 = arith.constant 0 : index
    %c5_121 = arith.constant 5 : index
    %c0_122 = arith.constant 0 : index
    %476 = vector.load %arg6[%c0_120, %c5_121, %c0_122] : memref<2x8x64xf32, #tpu.memory_space<vmem>>, vector<2x1x32xf32>
    tpu.vector_store %arg6[%c0_120, %c5_121, %c0_122], %475 {strides = array<i32>} : memref<2x8x64xf32, #tpu.memory_space<vmem>>, vector<2x1x32xf32>,
    %477 = vector.extract_strided_slice %350 {offsets = [0, 6, 0], sizes = [2, 1, 128], strides = [1, 1, 1]} : vector<2x8x128xf32> to vector<2x1x128xf32>
    %478 = vector.shape_cast %477 : vector<2x1x128xf32> to vector<2x128xf32>
    %cst_123 = arith.constant dense<0.000000e+00> : vector<2x128xf32>
    %479 = tpu.matmul %474, %3, %cst_123 {dimension_numbers = #tpu.dot_dimension_numbers<[1], [0], [0], [1], [0, 0, 1, 1], [], []>} : vector<2x32xf32>, vector<32x128xf32>, vector<2x128xf32> -> vector<2x128xf32>
    %480 = arith.addf %478, %479 : vector<2x128xf32>
    %481 = arith.negf %480 : vector<2x128xf32>
    %482 = math.exp %481 : vector<2x128xf32>
    %cst_124 = arith.constant 1.000000e+00 : f32
    %483 = vector.broadcast %cst_124 : f32 to vector<2x128xf32>
    %484 = arith.addf %483, %482 : vector<2x128xf32>
    %485 = arith.divf %483, %484 : vector<2x128xf32>
    %486 = vector.extract_strided_slice %485 {offsets = [0, 0], sizes = [2, 32], strides = [1, 1]} : vector<2x128xf32> to vector<2x32xf32>
    %487 = vector.extract_strided_slice %485 {offsets = [0, 32], sizes = [2, 32], strides = [1, 1]} : vector<2x128xf32> to vector<2x32xf32>
    %488 = vector.extract_strided_slice %485 {offsets = [0, 96], sizes = [2, 32], strides = [1, 1]} : vector<2x128xf32> to vector<2x32xf32>
    %489 = vector.extract_strided_slice %480 {offsets = [0, 64], sizes = [2, 32], strides = [1, 1]} : vector<2x128xf32> to vector<2x32xf32>
    %490 = math.tanh %489 : vector<2x32xf32>
    %491 = arith.mulf %487, %472 : vector<2x32xf32>
    %492 = arith.mulf %486, %490 : vector<2x32xf32>
    %493 = arith.addf %491, %492 : vector<2x32xf32>
    %494 = math.tanh %493 : vector<2x32xf32>
    %495 = arith.mulf %488, %494 : vector<2x32xf32>
    %496 = vector.shape_cast %495 : vector<2x32xf32> to vector<2x1x32xf32>
    %c0_125 = arith.constant 0 : index
    %c6_126 = arith.constant 6 : index
    %c0_127 = arith.constant 0 : index
    %497 = vector.load %arg6[%c0_125, %c6_126, %c0_127] : memref<2x8x64xf32, #tpu.memory_space<vmem>>, vector<2x1x32xf32>
    tpu.vector_store %arg6[%c0_125, %c6_126, %c0_127], %496 {strides = array<i32>} : memref<2x8x64xf32, #tpu.memory_space<vmem>>, vector<2x1x32xf32>,
    %498 = vector.extract_strided_slice %350 {offsets = [0, 7, 0], sizes = [2, 1, 128], strides = [1, 1, 1]} : vector<2x8x128xf32> to vector<2x1x128xf32>
    %499 = vector.shape_cast %498 : vector<2x1x128xf32> to vector<2x128xf32>
    %cst_128 = arith.constant dense<0.000000e+00> : vector<2x128xf32>
    %500 = tpu.matmul %495, %3, %cst_128 {dimension_numbers = #tpu.dot_dimension_numbers<[1], [0], [0], [1], [0, 0, 1, 1], [], []>} : vector<2x32xf32>, vector<32x128xf32>, vector<2x128xf32> -> vector<2x128xf32>
    %501 = arith.addf %499, %500 : vector<2x128xf32>
    %502 = arith.negf %501 : vector<2x128xf32>
    %503 = math.exp %502 : vector<2x128xf32>
    %cst_129 = arith.constant 1.000000e+00 : f32
    %504 = vector.broadcast %cst_129 : f32 to vector<2x128xf32>
    %505 = arith.addf %504, %503 : vector<2x128xf32>
    %506 = arith.divf %504, %505 : vector<2x128xf32>
    %507 = vector.extract_strided_slice %506 {offsets = [0, 0], sizes = [2, 32], strides = [1, 1]} : vector<2x128xf32> to vector<2x32xf32>
    %508 = vector.extract_strided_slice %506 {offsets = [0, 32], sizes = [2, 32], strides = [1, 1]} : vector<2x128xf32> to vector<2x32xf32>
    %509 = vector.extract_strided_slice %506 {offsets = [0, 96], sizes = [2, 32], strides = [1, 1]} : vector<2x128xf32> to vector<2x32xf32>
    %510 = vector.extract_strided_slice %501 {offsets = [0, 64], sizes = [2, 32], strides = [1, 1]} : vector<2x128xf32> to vector<2x32xf32>
    %511 = math.tanh %510 : vector<2x32xf32>
    %512 = arith.mulf %508, %493 : vector<2x32xf32>
    %513 = arith.mulf %507, %511 : vector<2x32xf32>
    %514 = arith.addf %512, %513 : vector<2x32xf32>
    %515 = math.tanh %514 : vector<2x32xf32>
    %516 = arith.mulf %509, %515 : vector<2x32xf32>
    %517 = vector.shape_cast %516 : vector<2x32xf32> to vector<2x1x32xf32>
    %c0_130 = arith.constant 0 : index
    %c7_131 = arith.constant 7 : index
    %c0_132 = arith.constant 0 : index
    %518 = vector.load %arg6[%c0_130, %c7_131, %c0_132] : memref<2x8x64xf32, #tpu.memory_space<vmem>>, vector<2x1x32xf32>
    tpu.vector_store %arg6[%c0_130, %c7_131, %c0_132], %517 {strides = array<i32>} : memref<2x8x64xf32, #tpu.memory_space<vmem>>, vector<2x1x32xf32>,
    %c0_133 = arith.constant 0 : index
    %c0_134 = arith.constant 0 : index
    %c32 = arith.constant 32 : index
    %519 = vector.load %arg6[%c0_133, %c0_134, %c32] : memref<2x8x64xf32, #tpu.memory_space<vmem>>, vector<2x8x32xf32>
    tpu.vector_store %arg6[%c0_133, %c0_134, %c32], %0 {strides = array<i32>} : memref<2x8x64xf32, #tpu.memory_space<vmem>>, vector<2x8x32xf32>,
    return
  }
  func.func @transform_0(%arg0: i32) -> (i32, i32, i32) {
    %c0_i32 = arith.constant 0 : i32
    %c0_i32_0 = arith.constant 0 : i32
    %c0_i32_1 = arith.constant 0 : i32
    return %arg0, %c0_i32, %c0_i32_0 : i32, i32, i32
  }
  func.func @transform_1(%arg0: i32) -> (i32, i32) {
    %c0_i32 = arith.constant 0 : i32
    %c0_i32_0 = arith.constant 0 : i32
    %c0_i32_1 = arith.constant 0 : i32
    return %c0_i32, %c0_i32_0 : i32, i32
  }
  func.func @transform_2(%arg0: i32) -> (i32, i32) {
    %c0_i32 = arith.constant 0 : i32
    %c0_i32_0 = arith.constant 0 : i32
    %c0_i32_1 = arith.constant 0 : i32
    return %c0_i32, %c0_i32_0 : i32, i32
  }
  func.func @transform_3(%arg0: i32) -> (i32, i32) {
    %c0_i32 = arith.constant 0 : i32
    %c0_i32_0 = arith.constant 0 : i32
    %c0_i32_1 = arith.constant 0 : i32
    return %c0_i32, %c0_i32_0 : i32, i32
  }
  func.func @transform_4(%arg0: i32) -> (i32, i32) {
    %c0_i32 = arith.constant 0 : i32
    %c0_i32_0 = arith.constant 0 : i32
    %c0_i32_1 = arith.constant 0 : i32
    return %c0_i32, %c0_i32_0 : i32, i32
  }
  func.func @transform_5(%arg0: i32) -> (i32, i32, i32) {
    %c0_i32 = arith.constant 0 : i32
    %c0_i32_0 = arith.constant 0 : i32
    %c0_i32_1 = arith.constant 0 : i32
    return %arg0, %c0_i32, %c0_i32_0 : i32, i32, i32
  }
}

</mosaic_0001>

<llo_original>
// kernel: tpu_custom_call.1
$region0: #{tpu_custom_call.1}
  #allocation0 [shape = 'u32[]', space=smem, size = 0x4, offset = 0x4, fixed_abs, tag = 'smem constant byte address 0x4 - core index']
  #allocation1 [shape = 'u32[144,128]{1,0:T(1,128)}', space=vmem, size = 0x12000, scoped, tag = 'internal scratch']
  %s0 = inlined_call_operand.hbm [shape: f32[2,8,32], index: 0, kind: input, shape index: {}]
  %s1 = inlined_call_operand.hbm [shape: f32[32,128], index: 1, kind: input, shape index: {}]
  %s2 = inlined_call_operand.hbm [shape: f32[32,128], index: 2, kind: input, shape index: {}]
  %s3 = inlined_call_operand.hbm [shape: f32[32,128], index: 3, kind: input, shape index: {}]
  %s4 = inlined_call_operand.vmem [shape: f32[1,128], index: 4, kind: input, shape index: {}]
  %s5 = inlined_call_operand.hbm [shape: f32[2,8,64], index: 5, kind: output, shape index: {}]
  %s6 = sld [smem:[#allocation0]]
  $region46: #{tpu_custom_call.1} parent=0
    _
  %s8 = ssub.s32 1, %s6
  %s9 = scalar_select 0, %s8, %s6
  $region1: #{tpu_custom_call.1} parent=0
    #allocation2 [shape = 'u8[8192]{0}', space=vmem, size = 0x2000, scoped, tag = 'input window, operand 0, single buffered']
    #allocation3 [shape = 's32[1]{0}', space=sflag, size = 0x4, scoped, tag = 'scoped memory for tpu_custom_call.1']
    #allocation4 [shape = 's32[1]{0}', space=sflag, size = 0x4, scoped, tag = 'scoped memory for tpu_custom_call.1']
    #allocation5 [shape = 'u8[16384]{0}', space=vmem, size = 0x4000, scoped, tag = 'input window, operand 1, single buffered']
    #allocation6 [shape = 's32[1]{0}', space=sflag, size = 0x4, scoped, tag = 'scoped memory for tpu_custom_call.1']
    #allocation7 [shape = 'u8[16384]{0}', space=vmem, size = 0x4000, scoped, tag = 'input window, operand 2, single buffered']
    #allocation8 [shape = 'u8[16384]{0}', space=vmem, size = 0x4000, scoped, tag = 'input window, operand 3, single buffered']
    #allocation9 [shape = 's32[1]{0}', space=sflag, size = 0x4, scoped, tag = 'scoped memory for tpu_custom_call.1']
    #allocation10 [shape = 'u8[8192]{0}', space=vmem, size = 0x2000, scoped, tag = 'output window, operand 0, single buffered']
    %10 = vsyncpa [#allocation3], 0
    %11 = vsyncpa [#allocation6], 0
    %12 = vsyncpa [#allocation9], 0
    %13 = vsyncpa [#allocation4], 0
    // Predicated region
    $region2: #{tpu_custom_call.1} parent=1 // pred_check
      _
    $region3: #{tpu_custom_call.1} parent=1 // pred_check_branch
      %15 = sbr.rel (0) target = $region5
    $region4: #{tpu_custom_call.1} parent=1 // pred_region
      %s17 = ssub.s32 256, 256
      %18 = vsyncadd [#allocation3], %s17
      %s19 = sshll.u32 [#allocation2], 4
      %s20 = int_to_ptr.vmem [resolvable:$true] %s19
      %25 = dma.hbm_to_vmem [thread:$0]  %s0, 256, %s20, [#allocation3], 128, 128, 8
    $region5: #{tpu_custom_call.1} parent=1 // pred_fallthru
      _
    // Predicated region
    $region6: #{tpu_custom_call.1} parent=1 // pred_check
      _
    $region7: #{tpu_custom_call.1} parent=1 // pred_check_branch
      %27 = sbr.rel (0) target = $region9
    $region8: #{tpu_custom_call.1} parent=1 // pred_region
      %s29 = ssub.s32 512, 512
      %30 = vsyncadd [#allocation6], %s29
      %s31 = sshll.u32 [#allocation5], 4
      %s32 = int_to_ptr.vmem [resolvable:$true] %s31
      %37 = dma.hbm_to_vmem [thread:$0]  %s1, 512, %s32, [#allocation6], 128, 128, 8
    $region9: #{tpu_custom_call.1} parent=1 // pred_fallthru
      _
    // Predicated region
    $region10: #{tpu_custom_call.1} parent=1 // pred_check
      _
    $region11: #{tpu_custom_call.1} parent=1 // pred_check_branch
      %39 = sbr.rel (0) target = $region13
    $region12: #{tpu_custom_call.1} parent=1 // pred_region
      %s41 = ssub.s32 512, 512
      %42 = vsyncadd [#allocation6], %s41
      %s43 = sshll.u32 [#allocation7], 4
      %s44 = int_to_ptr.vmem [resolvable:$true] %s43
      %49 = dma.hbm_to_vmem [thread:$0]  %s2, 512, %s44, [#allocation6], 128, 128, 8
    $region13: #{tpu_custom_call.1} parent=1 // pred_fallthru
      _
    // Predicated region
    $region14: #{tpu_custom_call.1} parent=1 // pred_check
      _
    $region15: #{tpu_custom_call.1} parent=1 // pred_check_branch
      %51 = sbr.rel (0) target = $region17
    $region16: #{tpu_custom_call.1} parent=1 // pred_region
      %s53 = ssub.s32 512, 512
      %54 = vsyncadd [#allocation9], %s53
      %s55 = sshll.u32 [#allocation8], 4
      %s56 = int_to_ptr.vmem [resolvable:$true] %s55
      %61 = dma.hbm_to_vmem [thread:$0]  %s3, 512, %s56, [#allocation9], 128, 128, 8
    $region17: #{tpu_custom_call.1} parent=1 // pred_fallthru
      _
    // Predicated region
    $region18: #{tpu_custom_call.1} parent=1 // pred_check
      _
    $region19: #{tpu_custom_call.1} parent=1 // pred_check_branch
      %63 = sbr.rel (0) target = $region21
    $region20: #{tpu_custom_call.1} parent=1 // pred_region
      _
    $region21: #{tpu_custom_call.1} parent=1 // pred_fallthru
      _
    // Predicated region
    $region22: #{tpu_custom_call.1} parent=1 // pred_check
      _
    $region23: #{tpu_custom_call.1} parent=1 // pred_check_branch
      %65 = sbr.rel (0) target = $region25
    $region24: #{tpu_custom_call.1} parent=1 // pred_region
      %66 = dma.done [#allocation3], 256
    $region25: #{tpu_custom_call.1} parent=1 // pred_fallthru
      _
    // Predicated region
    $region26: #{tpu_custom_call.1} parent=1 // pred_check
      _
    $region27: #{tpu_custom_call.1} parent=1 // pred_check_branch
      %68 = sbr.rel (0) target = $region29
    $region28: #{tpu_custom_call.1} parent=1 // pred_region
      %69 = dma.done [#allocation6], 512
    $region29: #{tpu_custom_call.1} parent=1 // pred_fallthru
      _
    // Predicated region
    $region30: #{tpu_custom_call.1} parent=1 // pred_check
      _
    $region31: #{tpu_custom_call.1} parent=1 // pred_check_branch
      %71 = sbr.rel (0) target = $region33
    $region32: #{tpu_custom_call.1} parent=1 // pred_region
      %72 = dma.done [#allocation6], 512
    $region33: #{tpu_custom_call.1} parent=1 // pred_fallthru
      _
    // Predicated region
    $region34: #{tpu_custom_call.1} parent=1 // pred_check
      _
    $region35: #{tpu_custom_call.1} parent=1 // pred_check_branch
      %74 = sbr.rel (0) target = $region37
    $region36: #{tpu_custom_call.1} parent=1 // pred_region
      %75 = dma.done [#allocation9], 512
    $region37: #{tpu_custom_call.1} parent=1 // pred_fallthru
      _
    %v76 = vld [vmem:[#allocation2] sm:$0xff]
    %v77 = vld [vmem:[#allocation2 + $0x8] sm:$0xff]
    %v78 = vld [vmem:[#allocation5] sm:$0xff]
    %v79 = vld [vmem:[#allocation5 + $0x8] sm:$0xff]
    %v80 = vld [vmem:[#allocation5 + $0x10] sm:$0xff]
    %v81 = vld [vmem:[#allocation5 + $0x18] sm:$0xff]
    %v82 = vld [vmem:[#allocation7] sm:$0xff]
    %v83 = vld [vmem:[#allocation7 + $0x8] sm:$0xff]
    %v84 = vld [vmem:[#allocation7 + $0x10] sm:$0xff]
    %v85 = vld [vmem:[#allocation7 + $0x18] sm:$0xff]
    %v86 = vld [vmem:[#allocation8] sm:$0xff]
    %v87 = vld [vmem:[#allocation8 + $0x8] sm:$0xff]
    %v88 = vld [vmem:[#allocation8 + $0x10] sm:$0xff]
    %v89 = vld [vmem:[#allocation8 + $0x18] sm:$0xff]
    %v90 = vld [vmem:[%s4] sm:$0x1]
    %vm91 = vcmask 261120
    %v93 = vsel %vm91, %v76, 0
    %v96 = vsel %vm91, %v77, 0
    %98 = vmatprep.subr.mxu0 0.0
    %99 = vmatpush1.msra.mxu0 %v82
    %100 = vmatprep.subr.mxu0 0.0
    %101 = vmatpush1.msra.mxu0 %v83
    %102 = vmatprep.subr.mxu0 0.0
    %103 = vmatpush1.msra.mxu0 %v84
    %104 = vmatprep.subr.mxu0 0.0
    %105 = vmatpush1.msra.mxu0 %v85
    %106 = vmatprep.subr.mxu0 0.0
    %107 = vmatpush1.msra.mxu0 0.0
    %108 = vmatprep.subr.mxu0 0.0
    %109 = vmatpush1.msra.mxu0 0.0
    %110 = vmatprep.subr.mxu0 0.0
    %111 = vmatpush1.msra.mxu0 0.0
    %112 = vmatprep.subr.mxu0 0.0
    %113 = vmatpush1.msra.mxu0 0.0
    %114 = vmatprep.subr.mxu0 0.0
    %115 = vmatpush1.msra.mxu0 0.0
    %116 = vmatprep.subr.mxu0 0.0
    %117 = vmatpush1.msra.mxu0 0.0
    %118 = vmatprep.subr.mxu0 0.0
    %119 = vmatpush1.msra.mxu0 0.0
    %120 = vmatprep.subr.mxu0 0.0
    %121 = vmatpush1.msra.mxu0 0.0
    %122 = vmatprep.subr.mxu0 0.0
    %123 = vmatpush1.msra.mxu0 0.0
    %124 = vmatprep.subr.mxu0 0.0
    %125 = vmatpush1.msra.mxu0 0.0
    %126 = vmatprep.subr.mxu0 0.0
    %127 = vmatpush1.msra.mxu0 0.0
    %128 = vmatprep.subr.mxu0 0.0
    %129 = vmatpush1.msra.mxu0 0.0
    %130 = vmatprep.subr.mxu0 0.0
    %131 = vmatpush1.msra.mxu0 0.0
    %132 = vmatprep.subr.mxu0 0.0
    %133 = vmatpush1.msra.mxu0 0.0
    %134 = vmatprep.subr.mxu0 0.0
    %135 = vmatpush1.msra.mxu0 0.0
    %136 = vmatprep.subr.mxu0 0.0
    %137 = vmatpush1.msra.mxu0 0.0
    %138 = vmatprep.subr.mxu0 0.0
    %139 = vmatpush1.msra.mxu0 0.0
    %140 = vmatprep.subr.mxu0 0.0
    %141 = vmatpush1.msra.mxu0 0.0
    %142 = vmatprep.subr.mxu0 0.0
    %143 = vmatpush1.msra.mxu0 0.0
    %144 = vmatprep.subr.mxu0 0.0
    %145 = vmatpush1.msra.mxu0 0.0
    %146 = vmatprep.subr.mxu0 0.0
    %147 = vmatpush1.msra.mxu0 0.0
    %148 = vmatprep.subr.mxu0 0.0
    %149 = vmatpush1.msra.mxu0 0.0
    %150 = vmatprep.subr.mxu0 0.0
    %151 = vmatpush1.msra.mxu0 0.0
    %152 = vmatprep.subr.mxu0 0.0
    %153 = vmatpush1.msra.mxu0 0.0
    %154 = vmatprep.subr.mxu0 0.0
    %155 = vmatpush1.msra.mxu0 0.0
    %156 = vmatprep.subr.mxu0 0.0
    %157 = vmatpush1.msra.mxu0 0.0
    %158 = vmatprep.subr.mxu0 0.0
    %159 = vmatpush1.msra.mxu0 0.0
    %160 = vmatprep.subr.mxu0 0.0
    %161 = vmatpush1.msra.mxu0 0.0
    %162 = vmatprep.mubr.f32.mxu0 0.0
    %163 = vmatmul.mubr.f32.gmra.mrb[0].mxu0 %v93
    %v164 = vpop.f32.mrb[0].mxu0
    %v165 = vadd.f32 0.0, %v164
    %v166 = vpop.f32.mrb[0].mxu0
    %167 = vmatprep.mubr.f32.mxu0 0.0
    %168 = vmatmul.mubr.f32.gmra.mrb[0].mxu0 %v96
    %v169 = vpop.f32.mrb[0].mxu0
    %v170 = vadd.f32 0.0, %v169
    %v171 = vpop.f32.mrb[0].mxu0
    %172 = vdwg.mxu0
    %v174 = vlaneseq
    %v175 = vshrl.u32 %v174, 7
    %v176 = vsub.s32 0, %v175
    %v177 = vrot.slane %v90, %v176
    %v179 = vadd.f32 %v165, %v177
    %v180 = vadd.f32 %v170, %v177
    %v182 = vsel %vm91, 0.0, 0
    %184 = vmatprep.subr.mxu0 0.0
    %185 = vmatpush1.msra.mxu0 %v86
    %186 = vmatprep.subr.mxu0 0.0
    %187 = vmatpush1.msra.mxu0 %v87
    %188 = vmatprep.subr.mxu0 0.0
    %189 = vmatpush1.msra.mxu0 %v88
    %190 = vmatprep.subr.mxu0 0.0
    %191 = vmatpush1.msra.mxu0 %v89
    %192 = vmatprep.subr.mxu0 0.0
    %193 = vmatpush1.msra.mxu0 0.0
    %194 = vmatprep.subr.mxu0 0.0
    %195 = vmatpush1.msra.mxu0 0.0
    %196 = vmatprep.subr.mxu0 0.0
    %197 = vmatpush1.msra.mxu0 0.0
    %198 = vmatprep.subr.mxu0 0.0
    %199 = vmatpush1.msra.mxu0 0.0
    %200 = vmatprep.subr.mxu0 0.0
    %201 = vmatpush1.msra.mxu0 0.0
    %202 = vmatprep.subr.mxu0 0.0
    %203 = vmatpush1.msra.mxu0 0.0
    %204 = vmatprep.subr.mxu0 0.0
    %205 = vmatpush1.msra.mxu0 0.0
    %206 = vmatprep.subr.mxu0 0.0
    %207 = vmatpush1.msra.mxu0 0.0
    %208 = vmatprep.subr.mxu0 0.0
    %209 = vmatpush1.msra.mxu0 0.0
    %210 = vmatprep.subr.mxu0 0.0
    %211 = vmatpush1.msra.mxu0 0.0
    %212 = vmatprep.subr.mxu0 0.0
    %213 = vmatpush1.msra.mxu0 0.0
    %214 = vmatprep.subr.mxu0 0.0
    %215 = vmatpush1.msra.mxu0 0.0
    %216 = vmatprep.subr.mxu0 0.0
    %217 = vmatpush1.msra.mxu0 0.0
    %218 = vmatprep.subr.mxu0 0.0
    %219 = vmatpush1.msra.mxu0 0.0
    %220 = vmatprep.subr.mxu0 0.0
    %221 = vmatpush1.msra.mxu0 0.0
    %222 = vmatprep.subr.mxu0 0.0
    %223 = vmatpush1.msra.mxu0 0.0
    %224 = vmatprep.subr.mxu0 0.0
    %225 = vmatpush1.msra.mxu0 0.0
    %226 = vmatprep.subr.mxu0 0.0
    %227 = vmatpush1.msra.mxu0 0.0
    %228 = vmatprep.subr.mxu0 0.0
    %229 = vmatpush1.msra.mxu0 0.0
    %230 = vmatprep.subr.mxu0 0.0
    %231 = vmatpush1.msra.mxu0 0.0
    %232 = vmatprep.subr.mxu0 0.0
    %233 = vmatpush1.msra.mxu0 0.0
    %234 = vmatprep.subr.mxu0 0.0
    %235 = vmatpush1.msra.mxu0 0.0
    %236 = vmatprep.subr.mxu0 0.0
    %237 = vmatpush1.msra.mxu0 0.0
    %238 = vmatprep.subr.mxu0 0.0
    %239 = vmatpush1.msra.mxu0 0.0
    %240 = vmatprep.subr.mxu0 0.0
    %241 = vmatpush1.msra.mxu0 0.0
    %242 = vmatprep.subr.mxu0 0.0
    %243 = vmatpush1.msra.mxu0 0.0
    %244 = vmatprep.subr.mxu0 0.0
    %245 = vmatpush1.msra.mxu0 0.0
    %246 = vmatprep.subr.mxu0 0.0
    %247 = vmatpush1.msra.mxu0 0.0
    %248 = vmatprep.mubr.f32.mxu0 0.0
    %249 = vmatmul.mubr.f32.gmra.mrb[0].mxu0 %v182
    %v250 = vpop.f32.mrb[0].mxu0
    %v251 = vadd.f32 0.0, %v250
    %v252 = vpop.f32.mrb[0].mxu0
    %253 = vdwg.mxu0
    %v254 = vadd.f32 %v177, %v251
    %v255 = vxor.u32 %v254, 2147483648
    %v256 = vmul.f32 %v255, 1.442695
    %v257 = vpow.pop %v256
    %v258 = vadd.f32 %v257, 1.0
    %v259 = vrcp.pop %v258
    %v260 = vmul.f32 1.0, %v259
    %v261 = vtanh.pop %v254
    %v262 = vmul.f32 %v260, 0.0
    %264 = vrot.lane.b32.xlu0 %v261, 64
    %v265 = vpop.permute.xlu0 %264
    %v267 = vmul.f32 %v260, %v265
    %269 = vrot.lane.b32.xlu0 %v267, 32
    %v270 = vpop.permute.xlu0 %269
    %v272 = vadd.f32 %v262, %v270
    %v273 = vtanh.pop %v272
    %275 = vrot.lane.b32.xlu0 %v273, 64
    %v276 = vpop.permute.xlu0 %275
    %v278 = vmul.f32 %v260, %v276
    %v281 = vunpack.c.l.s4 1966171168
    %v282 = vunpack.c.0.s8 %v281
    %v283 = vlaneseq
    %v284 = vshrl.u32 %v283, 7
    %v285 = vsub.s32 %v282, %v284
    %v286 = vrot.slane %v278, %v285
    %v287 = vcombine.high %v286, %v286
    %v289 = vunpack.c.l.s4 1966171168
    %v290 = vunpack.c.0.s8 %v289
    %v291 = vlaneseq
    %v292 = vshrl.u32 %v291, 7
    %v293 = vsub.s32 %v290, %v292
    %v294 = vrot.slane %v286, %v293
    %v296 = vunpack.c.l.s4 1966171168
    %v297 = vunpack.c.0.s8 %v296
    %v298 = vlaneseq
    %v299 = vshrl.u32 %v298, 7
    %v300 = vsub.s32 %v297, %v299
    %v301 = vrot.slane %v287, %v300
    %v302 = vlaneseq
    %v303 = vshrl.u32 %v302, 7
    %v304 = vsub.s32 0, %v303
    %v305 = vrot.slane %v294, %v304
    %v306 = vlaneseq
    %v307 = vshrl.u32 %v306, 7
    %v308 = vsub.s32 0, %v307
    %v309 = vrot.slane %v301, %v308
    %310 = vrot.lane.b32.xlu0 %v305, 32
    %v311 = vpop.permute.xlu0 %310
    %312 = vrot.lane.b32.xlu0 %v309, 32
    %v313 = vpop.permute.xlu0 %312
    %vm316 = vcmask 253952
    %317 = vst.msk [vmem:[#allocation10] sm:$0x1] %vm316, %v311
    %318 = vst.msk [vmem:[#allocation10 + $0x8] sm:$0x1] %vm316, %v313
    %319 = vrot.lane.b32.xlu0 %v278, 32
    %v320 = vpop.permute.xlu0 %319
    %v321 = vsel %vm91, %v320, 0
    %323 = vmatprep.subr.mxu0 0.0
    %324 = vmatpush1.msra.mxu0 %v86
    %325 = vmatprep.subr.mxu0 0.0
    %326 = vmatpush1.msra.mxu0 %v87
    %327 = vmatprep.subr.mxu0 0.0
    %328 = vmatpush1.msra.mxu0 %v88
    %329 = vmatprep.subr.mxu0 0.0
    %330 = vmatpush1.msra.mxu0 %v89
    %331 = vmatprep.subr.mxu0 0.0
    %332 = vmatpush1.msra.mxu0 0.0
    %333 = vmatprep.subr.mxu0 0.0
    %334 = vmatpush1.msra.mxu0 0.0
    %335 = vmatprep.subr.mxu0 0.0
    %336 = vmatpush1.msra.mxu0 0.0
    %337 = vmatprep.subr.mxu0 0.0
    %338 = vmatpush1.msra.mxu0 0.0
    %339 = vmatprep.subr.mxu0 0.0
    %340 = vmatpush1.msra.mxu0 0.0
    %341 = vmatprep.subr.mxu0 0.0
    %342 = vmatpush1.msra.mxu0 0.0
    %343 = vmatprep.subr.mxu0 0.0
    %344 = vmatpush1.msra.mxu0 0.0
    %345 = vmatprep.subr.mxu0 0.0
    %346 = vmatpush1.msra.mxu0 0.0
    %347 = vmatprep.subr.mxu0 0.0
    %348 = vmatpush1.msra.mxu0 0.0
    %349 = vmatprep.subr.mxu0 0.0
    %350 = vmatpush1.msra.mxu0 0.0
    %351 = vmatprep.subr.mxu0 0.0
    %352 = vmatpush1.msra.mxu0 0.0
    %353 = vmatprep.subr.mxu0 0.0
    %354 = vmatpush1.msra.mxu0 0.0
    %355 = vmatprep.subr.mxu0 0.0
    %356 = vmatpush1.msra.mxu0 0.0
    %357 = vmatprep.subr.mxu0 0.0
    %358 = vmatpush1.msra.mxu0 0.0
    %359 = vmatprep.subr.mxu0 0.0
    %360 = vmatpush1.msra.mxu0 0.0
    %361 = vmatprep.subr.mxu0 0.0
    %362 = vmatpush1.msra.mxu0 0.0
    %363 = vmatprep.subr.mxu0 0.0
    %364 = vmatpush1.msra.mxu0 0.0
    %365 = vmatprep.subr.mxu0 0.0
    %366 = vmatpush1.msra.mxu0 0.0
    %367 = vmatprep.subr.mxu0 0.0
    %368 = vmatpush1.msra.mxu0 0.0
    %369 = vmatprep.subr.mxu0 0.0
    %370 = vmatpush1.msra.mxu0 0.0
    %371 = vmatprep.subr.mxu0 0.0
    %372 = vmatpush1.msra.mxu0 0.0
    %373 = vmatprep.subr.mxu0 0.0
    %374 = vmatpush1.msra.mxu0 0.0
    %375 = vmatprep.subr.mxu0 0.0
    %376 = vmatpush1.msra.mxu0 0.0
    %377 = vmatprep.subr.mxu0 0.0
    %378 = vmatpush1.msra.mxu0 0.0
    %379 = vmatprep.subr.mxu0 0.0
    %380 = vmatpush1.msra.mxu0 0.0
    %381 = vmatprep.subr.mxu0 0.0
    %382 = vmatpush1.msra.mxu0 0.0
    %383 = vmatprep.subr.mxu0 0.0
    %384 = vmatpush1.msra.mxu0 0.0
    %385 = vmatprep.subr.mxu0 0.0
    %386 = vmatpush1.msra.mxu0 0.0
    %387 = vmatprep.mubr.f32.mxu0 0.0
    %388 = vmatmul.mubr.f32.gmra.mrb[0].mxu0 %v321
    %v389 = vpop.f32.mrb[0].mxu0
    %v390 = vadd.f32 0.0, %v389
    %v391 = vpop.f32.mrb[0].mxu0
    %392 = vdwg.mxu0
    %v393 = vadd.f32 %v177, %v390
    %v394 = vxor.u32 %v393, 2147483648
    %v395 = vmul.f32 %v394, 1.442695
    %v396 = vpow.pop %v395
    %v397 = vadd.f32 %v396, 1.0
    %v398 = vrcp.pop %v397
    %v399 = vmul.f32 1.0, %v398
    %v400 = vtanh.pop %v393
    %v401 = vmul.f32 %v399, %v272
    %403 = vrot.lane.b32.xlu0 %v400, 64
    %v404 = vpop.permute.xlu0 %403
    %v406 = vmul.f32 %v399, %v404
    %408 = vrot.lane.b32.xlu0 %v406, 32
    %v409 = vpop.permute.xlu0 %408
    %v411 = vadd.f32 %v401, %v409
    %v412 = vtanh.pop %v411
    %414 = vrot.lane.b32.xlu0 %v412, 64
    %v415 = vpop.permute.xlu0 %414
    %v417 = vmul.f32 %v399, %v415
    %v420 = vunpack.c.l.s4 1966171168
    %v421 = vunpack.c.0.s8 %v420
    %v422 = vlaneseq
    %v423 = vshrl.u32 %v422, 7
    %v424 = vsub.s32 %v421, %v423
    %v425 = vrot.slane %v417, %v424
    %v426 = vcombine.high %v425, %v425
    %v428 = vunpack.c.l.s4 1966171168
    %v429 = vunpack.c.0.s8 %v428
    %v430 = vlaneseq
    %v431 = vshrl.u32 %v430, 7
    %v432 = vsub.s32 %v429, %v431
    %v433 = vrot.slane %v425, %v432
    %v435 = vunpack.c.l.s4 1966171168
    %v436 = vunpack.c.0.s8 %v435
    %v437 = vlaneseq
    %v438 = vshrl.u32 %v437, 7
    %v439 = vsub.s32 %v436, %v438
    %v440 = vrot.slane %v426, %v439
    %v441 = vlaneseq
    %v442 = vshrl.u32 %v441, 7
    %v443 = vsub.s32 0, %v442
    %v444 = vrot.slane %v433, %v443
    %v445 = vlaneseq
    %v446 = vshrl.u32 %v445, 7
    %v447 = vsub.s32 0, %v446
    %v448 = vrot.slane %v440, %v447
    %449 = vrot.lane.b32.xlu0 %v444, 32
    %v450 = vpop.permute.xlu0 %449
    %451 = vrot.lane.b32.xlu0 %v448, 32
    %v452 = vpop.permute.xlu0 %451
    %455 = vst.msk [vmem:[#allocation10 + $0x1] sm:$0x1] %vm316, %v450
    %456 = vst.msk [vmem:[#allocation10 + $0x9] sm:$0x1] %vm316, %v452
    %457 = vrot.lane.b32.xlu0 %v417, 32
    %v458 = vpop.permute.xlu0 %457
    %v459 = vsel %vm91, %v458, 0
    %461 = vmatprep.subr.mxu0 0.0
    %462 = vmatpush1.msra.mxu0 %v86
    %463 = vmatprep.subr.mxu0 0.0
    %464 = vmatpush1.msra.mxu0 %v87
    %465 = vmatprep.subr.mxu0 0.0
    %466 = vmatpush1.msra.mxu0 %v88
    %467 = vmatprep.subr.mxu0 0.0
    %468 = vmatpush1.msra.mxu0 %v89
    %469 = vmatprep.subr.mxu0 0.0
    %470 = vmatpush1.msra.mxu0 0.0
    %471 = vmatprep.subr.mxu0 0.0
    %472 = vmatpush1.msra.mxu0 0.0
    %473 = vmatprep.subr.mxu0 0.0
    %474 = vmatpush1.msra.mxu0 0.0
    %475 = vmatprep.subr.mxu0 0.0
    %476 = vmatpush1.msra.mxu0 0.0
    %477 = vmatprep.subr.mxu0 0.0
    %478 = vmatpush1.msra.mxu0 0.0
    %479 = vmatprep.subr.mxu0 0.0
    %480 = vmatpush1.msra.mxu0 0.0
    %481 = vmatprep.subr.mxu0 0.0
    %482 = vmatpush1.msra.mxu0 0.0
    %483 = vmatprep.subr.mxu0 0.0
    %484 = vmatpush1.msra.mxu0 0.0
    %485 = vmatprep.subr.mxu0 0.0
    %486 = vmatpush1.msra.mxu0 0.0
    %487 = vmatprep.subr.mxu0 0.0
    %488 = vmatpush1.msra.mxu0 0.0
    %489 = vmatprep.subr.mxu0 0.0
    %490 = vmatpush1.msra.mxu0 0.0
    %491 = vmatprep.subr.mxu0 0.0
    %492 = vmatpush1.msra.mxu0 0.0
    %493 = vmatprep.subr.mxu0 0.0
    %494 = vmatpush1.msra.mxu0 0.0
    %495 = vmatprep.subr.mxu0 0.0
    %496 = vmatpush1.msra.mxu0 0.0
    %497 = vmatprep.subr.mxu0 0.0
    %498 = vmatpush1.msra.mxu0 0.0
    %499 = vmatprep.subr.mxu0 0.0
    %500 = vmatpush1.msra.mxu0 0.0
    %501 = vmatprep.subr.mxu0 0.0
    %502 = vmatpush1.msra.mxu0 0.0
    %503 = vmatprep.subr.mxu0 0.0
    %504 = vmatpush1.msra.mxu0 0.0
    %505 = vmatprep.subr.mxu0 0.0
    %506 = vmatpush1.msra.mxu0 0.0
    %507 = vmatprep.subr.mxu0 0.0
    %508 = vmatpush1.msra.mxu0 0.0
    %509 = vmatprep.subr.mxu0 0.0
    %510 = vmatpush1.msra.mxu0 0.0
    %511 = vmatprep.subr.mxu0 0.0
    %512 = vmatpush1.msra.mxu0 0.0
    %513 = vmatprep.subr.mxu0 0.0
    %514 = vmatpush1.msra.mxu0 0.0
    %515 = vmatprep.subr.mxu0 0.0
    %516 = vmatpush1.msra.mxu0 0.0
    %517 = vmatprep.subr.mxu0 0.0
    %518 = vmatpush1.msra.mxu0 0.0
    %519 = vmatprep.subr.mxu0 0.0
    %520 = vmatpush1.msra.mxu0 0.0
    %521 = vmatprep.subr.mxu0 0.0
    %522 = vmatpush1.msra.mxu0 0.0
    %523 = vmatprep.subr.mxu0 0.0
    %524 = vmatpush1.msra.mxu0 0.0
    %525 = vmatprep.mubr.f32.mxu0 0.0
    %526 = vmatmul.mubr.f32.gmra.mrb[0].mxu0 %v459
    %v527 = vpop.f32.mrb[0].mxu0
    %v528 = vadd.f32 0.0, %v527
    %v529 = vpop.f32.mrb[0].mxu0
    %530 = vdwg.mxu0
    %v531 = vadd.f32 %v177, %v528
    %v532 = vxor.u32 %v531, 2147483648
    %v533 = vmul.f32 %v532, 1.442695
    %v534 = vpow.pop %v533
    %v535 = vadd.f32 %v534, 1.0
    %v536 = vrcp.pop %v535
    %v537 = vmul.f32 1.0, %v536
    %v538 = vtanh.pop %v531
    %v539 = vmul.f32 %v537, %v411
    %541 = vrot.lane.b32.xlu0 %v538, 64
    %v542 = vpop.permute.xlu0 %541
    %v544 = vmul.f32 %v537, %v542
    %546 = vrot.lane.b32.xlu0 %v544, 32
    %v547 = vpop.permute.xlu0 %546
    %v549 = vadd.f32 %v539, %v547
    %v550 = vtanh.pop %v549
    %552 = vrot.lane.b32.xlu0 %v550, 64
    %v553 = vpop.permute.xlu0 %552
    %v555 = vmul.f32 %v537, %v553
    %v558 = vunpack.c.l.s4 1966171168
    %v559 = vunpack.c.0.s8 %v558
    %v560 = vlaneseq
    %v561 = vshrl.u32 %v560, 7
    %v562 = vsub.s32 %v559, %v561
    %v563 = vrot.slane %v555, %v562
    %v564 = vcombine.high %v563, %v563
    %v566 = vunpack.c.l.s4 1966171168
    %v567 = vunpack.c.0.s8 %v566
    %v568 = vlaneseq
    %v569 = vshrl.u32 %v568, 7
    %v570 = vsub.s32 %v567, %v569
    %v571 = vrot.slane %v563, %v570
    %v573 = vunpack.c.l.s4 1966171168
    %v574 = vunpack.c.0.s8 %v573
    %v575 = vlaneseq
    %v576 = vshrl.u32 %v575, 7
    %v577 = vsub.s32 %v574, %v576
    %v578 = vrot.slane %v564, %v577
    %v579 = vlaneseq
    %v580 = vshrl.u32 %v579, 7
    %v581 = vsub.s32 0, %v580
    %v582 = vrot.slane %v571, %v581
    %v583 = vlaneseq
    %v584 = vshrl.u32 %v583, 7
    %v585 = vsub.s32 0, %v584
    %v586 = vrot.slane %v578, %v585
    %587 = vrot.lane.b32.xlu0 %v582, 32
    %v588 = vpop.permute.xlu0 %587
    %589 = vrot.lane.b32.xlu0 %v586, 32
    %v590 = vpop.permute.xlu0 %589
    %593 = vst.msk [vmem:[#allocation10 + $0x2] sm:$0x1] %vm316, %v588
    %594 = vst.msk [vmem:[#allocation10 + $0xa] sm:$0x1] %vm316, %v590
    %595 = vrot.lane.b32.xlu0 %v555, 32
    %v596 = vpop.permute.xlu0 %595
    %v597 = vsel %vm91, %v596, 0
    %599 = vmatprep.subr.mxu0 0.0
    %600 = vmatpush1.msra.mxu0 %v86
    %601 = vmatprep.subr.mxu0 0.0
    %602 = vmatpush1.msra.mxu0 %v87
    %603 = vmatprep.subr.mxu0 0.0
    %604 = vmatpush1.msra.mxu0 %v88
    %605 = vmatprep.subr.mxu0 0.0
    %606 = vmatpush1.msra.mxu0 %v89
    %607 = vmatprep.subr.mxu0 0.0
    %608 = vmatpush1.msra.mxu0 0.0
    %609 = vmatprep.subr.mxu0 0.0
    %610 = vmatpush1.msra.mxu0 0.0
    %611 = vmatprep.subr.mxu0 0.0
    %612 = vmatpush1.msra.mxu0 0.0
    %613 = vmatprep.subr.mxu0 0.0
    %614 = vmatpush1.msra.mxu0 0.0
    %615 = vmatprep.subr.mxu0 0.0
    %616 = vmatpush1.msra.mxu0 0.0
    %617 = vmatprep.subr.mxu0 0.0
    %618 = vmatpush1.msra.mxu0 0.0
    %619 = vmatprep.subr.mxu0 0.0
    %620 = vmatpush1.msra.mxu0 0.0
    %621 = vmatprep.subr.mxu0 0.0
    %622 = vmatpush1.msra.mxu0 0.0
    %623 = vmatprep.subr.mxu0 0.0
    %624 = vmatpush1.msra.mxu0 0.0
    %625 = vmatprep.subr.mxu0 0.0
    %626 = vmatpush1.msra.mxu0 0.0
    %627 = vmatprep.subr.mxu0 0.0
    %628 = vmatpush1.msra.mxu0 0.0
    %629 = vmatprep.subr.mxu0 0.0
    %630 = vmatpush1.msra.mxu0 0.0
    %631 = vmatprep.subr.mxu0 0.0
    %632 = vmatpush1.msra.mxu0 0.0
    %633 = vmatprep.subr.mxu0 0.0
    %634 = vmatpush1.msra.mxu0 0.0
    %635 = vmatprep.subr.mxu0 0.0
    %636 = vmatpush1.msra.mxu0 0.0
    %637 = vmatprep.subr.mxu0 0.0
    %638 = vmatpush1.msra.mxu0 0.0
    %639 = vmatprep.subr.mxu0 0.0
    %640 = vmatpush1.msra.mxu0 0.0
    %641 = vmatprep.subr.mxu0 0.0
    %642 = vmatpush1.msra.mxu0 0.0
    %643 = vmatprep.subr.mxu0 0.0
    %644 = vmatpush1.msra.mxu0 0.0
    %645 = vmatprep.subr.mxu0 0.0
    %646 = vmatpush1.msra.mxu0 0.0
    %647 = vmatprep.subr.mxu0 0.0
    %648 = vmatpush1.msra.mxu0 0.0
    %649 = vmatprep.subr.mxu0 0.0
    %650 = vmatpush1.msra.mxu0 0.0
    %651 = vmatprep.subr.mxu0 0.0
    %652 = vmatpush1.msra.mxu0 0.0
    %653 = vmatprep.subr.mxu0 0.0
    %654 = vmatpush1.msra.mxu0 0.0
    %655 = vmatprep.subr.mxu0 0.0
    %656 = vmatpush1.msra.mxu0 0.0
    %657 = vmatprep.subr.mxu0 0.0
    %658 = vmatpush1.msra.mxu0 0.0
    %659 = vmatprep.subr.mxu0 0.0
    %660 = vmatpush1.msra.mxu0 0.0
    %661 = vmatprep.subr.mxu0 0.0
    %662 = vmatpush1.msra.mxu0 0.0
    %663 = vmatprep.mubr.f32.mxu0 0.0
    %664 = vmatmul.mubr.f32.gmra.mrb[0].mxu0 %v597
    %v665 = vpop.f32.mrb[0].mxu0
    %v666 = vadd.f32 0.0, %v665
    %v667 = vpop.f32.mrb[0].mxu0
    %668 = vdwg.mxu0
    %v669 = vadd.f32 %v177, %v666
    %v670 = vxor.u32 %v669, 2147483648
    %v671 = vmul.f32 %v670, 1.442695
    %v672 = vpow.pop %v671
    %v673 = vadd.f32 %v672, 1.0
    %v674 = vrcp.pop %v673
    %v675 = vmul.f32 1.0, %v674
    %v676 = vtanh.pop %v669
    %v677 = vmul.f32 %v675, %v549
    %679 = vrot.lane.b32.xlu0 %v676, 64
    %v680 = vpop.permute.xlu0 %679
    %v682 = vmul.f32 %v675, %v680
    %684 = vrot.lane.b32.xlu0 %v682, 32
    %v685 = vpop.permute.xlu0 %684
    %v687 = vadd.f32 %v677, %v685
    %v688 = vtanh.pop %v687
    %690 = vrot.lane.b32.xlu0 %v688, 64
    %v691 = vpop.permute.xlu0 %690
    %v693 = vmul.f32 %v675, %v691
    %v696 = vunpack.c.l.s4 1966171168
    %v697 = vunpack.c.0.s8 %v696
    %v698 = vlaneseq
    %v699 = vshrl.u32 %v698, 7
    %v700 = vsub.s32 %v697, %v699
    %v701 = vrot.slane %v693, %v700
    %v702 = vcombine.high %v701, %v701
    %v704 = vunpack.c.l.s4 1966171168
    %v705 = vunpack.c.0.s8 %v704
    %v706 = vlaneseq
    %v707 = vshrl.u32 %v706, 7
    %v708 = vsub.s32 %v705, %v707
    %v709 = vrot.slane %v701, %v708
    %v711 = vunpack.c.l.s4 1966171168
    %v712 = vunpack.c.0.s8 %v711
    %v713 = vlaneseq
    %v714 = vshrl.u32 %v713, 7
    %v715 = vsub.s32 %v712, %v714
    %v716 = vrot.slane %v702, %v715
    %v717 = vlaneseq
    %v718 = vshrl.u32 %v717, 7
    %v719 = vsub.s32 0, %v718
    %v720 = vrot.slane %v709, %v719
    %v721 = vlaneseq
    %v722 = vshrl.u32 %v721, 7
    %v723 = vsub.s32 0, %v722
    %v724 = vrot.slane %v716, %v723
    %725 = vrot.lane.b32.xlu0 %v720, 32
    %v726 = vpop.permute.xlu0 %725
    %727 = vrot.lane.b32.xlu0 %v724, 32
    %v728 = vpop.permute.xlu0 %727
    %731 = vst.msk [vmem:[#allocation10 + $0x3] sm:$0x1] %vm316, %v726
    %732 = vst.msk [vmem:[#allocation10 + $0xb] sm:$0x1] %vm316, %v728
    %733 = vrot.lane.b32.xlu0 %v693, 32
    %v734 = vpop.permute.xlu0 %733
    %v735 = vsel %vm91, %v734, 0
    %737 = vmatprep.subr.mxu0 0.0
    %738 = vmatpush1.msra.mxu0 %v86
    %739 = vmatprep.subr.mxu0 0.0
    %740 = vmatpush1.msra.mxu0 %v87
    %741 = vmatprep.subr.mxu0 0.0
    %742 = vmatpush1.msra.mxu0 %v88
    %743 = vmatprep.subr.mxu0 0.0
    %744 = vmatpush1.msra.mxu0 %v89
    %745 = vmatprep.subr.mxu0 0.0
    %746 = vmatpush1.msra.mxu0 0.0
    %747 = vmatprep.subr.mxu0 0.0
    %748 = vmatpush1.msra.mxu0 0.0
    %749 = vmatprep.subr.mxu0 0.0
    %750 = vmatpush1.msra.mxu0 0.0
    %751 = vmatprep.subr.mxu0 0.0
    %752 = vmatpush1.msra.mxu0 0.0
    %753 = vmatprep.subr.mxu0 0.0
    %754 = vmatpush1.msra.mxu0 0.0
    %755 = vmatprep.subr.mxu0 0.0
    %756 = vmatpush1.msra.mxu0 0.0
    %757 = vmatprep.subr.mxu0 0.0
    %758 = vmatpush1.msra.mxu0 0.0
    %759 = vmatprep.subr.mxu0 0.0
    %760 = vmatpush1.msra.mxu0 0.0
    %761 = vmatprep.subr.mxu0 0.0
    %762 = vmatpush1.msra.mxu0 0.0
    %763 = vmatprep.subr.mxu0 0.0
    %764 = vmatpush1.msra.mxu0 0.0
    %765 = vmatprep.subr.mxu0 0.0
    %766 = vmatpush1.msra.mxu0 0.0
    %767 = vmatprep.subr.mxu0 0.0
    %768 = vmatpush1.msra.mxu0 0.0
    %769 = vmatprep.subr.mxu0 0.0
    %770 = vmatpush1.msra.mxu0 0.0
    %771 = vmatprep.subr.mxu0 0.0
    %772 = vmatpush1.msra.mxu0 0.0
    %773 = vmatprep.subr.mxu0 0.0
    %774 = vmatpush1.msra.mxu0 0.0
    %775 = vmatprep.subr.mxu0 0.0
    %776 = vmatpush1.msra.mxu0 0.0
    %777 = vmatprep.subr.mxu0 0.0
    %778 = vmatpush1.msra.mxu0 0.0
    %779 = vmatprep.subr.mxu0 0.0
    %780 = vmatpush1.msra.mxu0 0.0
    %781 = vmatprep.subr.mxu0 0.0
    %782 = vmatpush1.msra.mxu0 0.0
    %783 = vmatprep.subr.mxu0 0.0
    %784 = vmatpush1.msra.mxu0 0.0
    %785 = vmatprep.subr.mxu0 0.0
    %786 = vmatpush1.msra.mxu0 0.0
    %787 = vmatprep.subr.mxu0 0.0
    %788 = vmatpush1.msra.mxu0 0.0
    %789 = vmatprep.subr.mxu0 0.0
    %790 = vmatpush1.msra.mxu0 0.0
    %791 = vmatprep.subr.mxu0 0.0
    %792 = vmatpush1.msra.mxu0 0.0
    %793 = vmatprep.subr.mxu0 0.0
    %794 = vmatpush1.msra.mxu0 0.0
    %795 = vmatprep.subr.mxu0 0.0
    %796 = vmatpush1.msra.mxu0 0.0
    %797 = vmatprep.subr.mxu0 0.0
    %798 = vmatpush1.msra.mxu0 0.0
    %799 = vmatprep.subr.mxu0 0.0
    %800 = vmatpush1.msra.mxu0 0.0
    %801 = vmatprep.mubr.f32.mxu0 0.0
    %802 = vmatmul.mubr.f32.gmra.mrb[0].mxu0 %v735
    %v803 = vpop.f32.mrb[0].mxu0
    %v804 = vadd.f32 0.0, %v803
    %v805 = vpop.f32.mrb[0].mxu0
    %806 = vdwg.mxu0
    %v807 = vadd.f32 %v177, %v804
    %v808 = vxor.u32 %v807, 2147483648
    %v809 = vmul.f32 %v808, 1.442695
    %v810 = vpow.pop %v809
    %v811 = vadd.f32 %v810, 1.0
    %v812 = vrcp.pop %v811
    %v813 = vmul.f32 1.0, %v812
    %v814 = vtanh.pop %v807
    %v815 = vmul.f32 %v813, %v687
    %817 = vrot.lane.b32.xlu0 %v814, 64
    %v818 = vpop.permute.xlu0 %817
    %v820 = vmul.f32 %v813, %v818
    %822 = vrot.lane.b32.xlu0 %v820, 32
    %v823 = vpop.permute.xlu0 %822
    %v825 = vadd.f32 %v815, %v823
    %v826 = vtanh.pop %v825
    %828 = vrot.lane.b32.xlu0 %v826, 64
    %v829 = vpop.permute.xlu0 %828
    %v831 = vmul.f32 %v813, %v829
    %v834 = vunpack.c.l.s4 1966171168
    %v835 = vunpack.c.0.s8 %v834
    %v836 = vlaneseq
    %v837 = vshrl.u32 %v836, 7
    %v838 = vsub.s32 %v835, %v837
    %v839 = vrot.slane %v831, %v838
    %v840 = vcombine.high %v839, %v839
    %v842 = vunpack.c.l.s4 1966171168
    %v843 = vunpack.c.0.s8 %v842
    %v844 = vlaneseq
    %v845 = vshrl.u32 %v844, 7
    %v846 = vsub.s32 %v843, %v845
    %v847 = vrot.slane %v839, %v846
    %v849 = vunpack.c.l.s4 1966171168
    %v850 = vunpack.c.0.s8 %v849
    %v851 = vlaneseq
    %v852 = vshrl.u32 %v851, 7
    %v853 = vsub.s32 %v850, %v852
    %v854 = vrot.slane %v840, %v853
    %v855 = vlaneseq
    %v856 = vshrl.u32 %v855, 7
    %v857 = vsub.s32 0, %v856
    %v858 = vrot.slane %v847, %v857
    %v859 = vlaneseq
    %v860 = vshrl.u32 %v859, 7
    %v861 = vsub.s32 0, %v860
    %v862 = vrot.slane %v854, %v861
    %863 = vrot.lane.b32.xlu0 %v858, 32
    %v864 = vpop.permute.xlu0 %863
    %865 = vrot.lane.b32.xlu0 %v862, 32
    %v866 = vpop.permute.xlu0 %865
    %869 = vst.msk [vmem:[#allocation10 + $0x4] sm:$0x1] %vm316, %v864
    %870 = vst.msk [vmem:[#allocation10 + $0xc] sm:$0x1] %vm316, %v866
    %871 = vrot.lane.b32.xlu0 %v831, 32
    %v872 = vpop.permute.xlu0 %871
    %v873 = vsel %vm91, %v872, 0
    %875 = vmatprep.subr.mxu0 0.0
    %876 = vmatpush1.msra.mxu0 %v86
    %877 = vmatprep.subr.mxu0 0.0
    %878 = vmatpush1.msra.mxu0 %v87
    %879 = vmatprep.subr.mxu0 0.0
    %880 = vmatpush1.msra.mxu0 %v88
    %881 = vmatprep.subr.mxu0 0.0
    %882 = vmatpush1.msra.mxu0 %v89
    %883 = vmatprep.subr.mxu0 0.0
    %884 = vmatpush1.msra.mxu0 0.0
    %885 = vmatprep.subr.mxu0 0.0
    %886 = vmatpush1.msra.mxu0 0.0
    %887 = vmatprep.subr.mxu0 0.0
    %888 = vmatpush1.msra.mxu0 0.0
    %889 = vmatprep.subr.mxu0 0.0
    %890 = vmatpush1.msra.mxu0 0.0
    %891 = vmatprep.subr.mxu0 0.0
    %892 = vmatpush1.msra.mxu0 0.0
    %893 = vmatprep.subr.mxu0 0.0
    %894 = vmatpush1.msra.mxu0 0.0
    %895 = vmatprep.subr.mxu0 0.0
    %896 = vmatpush1.msra.mxu0 0.0
    %897 = vmatprep.subr.mxu0 0.0
    %898 = vmatpush1.msra.mxu0 0.0
    %899 = vmatprep.subr.mxu0 0.0
    %900 = vmatpush1.msra.mxu0 0.0
    %901 = vmatprep.subr.mxu0 0.0
    %902 = vmatpush1.msra.mxu0 0.0
    %903 = vmatprep.subr.mxu0 0.0
    %904 = vmatpush1.msra.mxu0 0.0
    %905 = vmatprep.subr.mxu0 0.0
    %906 = vmatpush1.msra.mxu0 0.0
    %907 = vmatprep.subr.mxu0 0.0
    %908 = vmatpush1.msra.mxu0 0.0
    %909 = vmatprep.subr.mxu0 0.0
    %910 = vmatpush1.msra.mxu0 0.0
    %911 = vmatprep.subr.mxu0 0.0
    %912 = vmatpush1.msra.mxu0 0.0
    %913 = vmatprep.subr.mxu0 0.0
    %914 = vmatpush1.msra.mxu0 0.0
    %915 = vmatprep.subr.mxu0 0.0
    %916 = vmatpush1.msra.mxu0 0.0
    %917 = vmatprep.subr.mxu0 0.0
    %918 = vmatpush1.msra.mxu0 0.0
    %919 = vmatprep.subr.mxu0 0.0
    %920 = vmatpush1.msra.mxu0 0.0
    %921 = vmatprep.subr.mxu0 0.0
    %922 = vmatpush1.msra.mxu0 0.0
    %923 = vmatprep.subr.mxu0 0.0
    %924 = vmatpush1.msra.mxu0 0.0
    %925 = vmatprep.subr.mxu0 0.0
    %926 = vmatpush1.msra.mxu0 0.0
    %927 = vmatprep.subr.mxu0 0.0
    %928 = vmatpush1.msra.mxu0 0.0
    %929 = vmatprep.subr.mxu0 0.0
    %930 = vmatpush1.msra.mxu0 0.0
    %931 = vmatprep.subr.mxu0 0.0
    %932 = vmatpush1.msra.mxu0 0.0
    %933 = vmatprep.subr.mxu0 0.0
    %934 = vmatpush1.msra.mxu0 0.0
    %935 = vmatprep.subr.mxu0 0.0
    %936 = vmatpush1.msra.mxu0 0.0
    %937 = vmatprep.subr.mxu0 0.0
    %938 = vmatpush1.msra.mxu0 0.0
    %939 = vmatprep.mubr.f32.mxu0 0.0
    %940 = vmatmul.mubr.f32.gmra.mrb[0].mxu0 %v873
    %v941 = vpop.f32.mrb[0].mxu0
    %v942 = vadd.f32 0.0, %v941
    %v943 = vpop.f32.mrb[0].mxu0
    %944 = vdwg.mxu0
    %v945 = vadd.f32 %v177, %v942
    %v946 = vxor.u32 %v945, 2147483648
    %v947 = vmul.f32 %v946, 1.442695
    %v948 = vpow.pop %v947
    %v949 = vadd.f32 %v948, 1.0
    %v950 = vrcp.pop %v949
    %v951 = vmul.f32 1.0, %v950
    %v952 = vtanh.pop %v945
    %v953 = vmul.f32 %v951, %v825
    %955 = vrot.lane.b32.xlu0 %v952, 64
    %v956 = vpop.permute.xlu0 %955
    %v958 = vmul.f32 %v951, %v956
    %960 = vrot.lane.b32.xlu0 %v958, 32
    %v961 = vpop.permute.xlu0 %960
    %v963 = vadd.f32 %v953, %v961
    %v964 = vtanh.pop %v963
    %966 = vrot.lane.b32.xlu0 %v964, 64
    %v967 = vpop.permute.xlu0 %966
    %v969 = vmul.f32 %v951, %v967
    %v972 = vunpack.c.l.s4 1966171168
    %v973 = vunpack.c.0.s8 %v972
    %v974 = vlaneseq
    %v975 = vshrl.u32 %v974, 7
    %v976 = vsub.s32 %v973, %v975
    %v977 = vrot.slane %v969, %v976
    %v978 = vcombine.high %v977, %v977
    %v980 = vunpack.c.l.s4 1966171168
    %v981 = vunpack.c.0.s8 %v980
    %v982 = vlaneseq
    %v983 = vshrl.u32 %v982, 7
    %v984 = vsub.s32 %v981, %v983
    %v985 = vrot.slane %v977, %v984
    %v987 = vunpack.c.l.s4 1966171168
    %v988 = vunpack.c.0.s8 %v987
    %v989 = vlaneseq
    %v990 = vshrl.u32 %v989, 7
    %v991 = vsub.s32 %v988, %v990
    %v992 = vrot.slane %v978, %v991
    %v993 = vlaneseq
    %v994 = vshrl.u32 %v993, 7
    %v995 = vsub.s32 0, %v994
    %v996 = vrot.slane %v985, %v995
    %v997 = vlaneseq
    %v998 = vshrl.u32 %v997, 7
    %v999 = vsub.s32 0, %v998
    %v1000 = vrot.slane %v992, %v999
    %1001 = vrot.lane.b32.xlu0 %v996, 32
    %v1002 = vpop.permute.xlu0 %1001
    %1003 = vrot.lane.b32.xlu0 %v1000, 32
    %v1004 = vpop.permute.xlu0 %1003
    %1007 = vst.msk [vmem:[#allocation10 + $0x5] sm:$0x1] %vm316, %v1002
    %1008 = vst.msk [vmem:[#allocation10 + $0xd] sm:$0x1] %vm316, %v1004
    %1009 = vrot.lane.b32.xlu0 %v969, 32
    %v1010 = vpop.permute.xlu0 %1009
    %v1011 = vsel %vm91, %v1010, 0
    %1013 = vmatprep.subr.mxu0 0.0
    %1014 = vmatpush1.msra.mxu0 %v86
    %1015 = vmatprep.subr.mxu0 0.0
    %1016 = vmatpush1.msra.mxu0 %v87
    %1017 = vmatprep.subr.mxu0 0.0
    %1018 = vmatpush1.msra.mxu0 %v88
    %1019 = vmatprep.subr.mxu0 0.0
    %1020 = vmatpush1.msra.mxu0 %v89
    %1021 = vmatprep.subr.mxu0 0.0
    %1022 = vmatpush1.msra.mxu0 0.0
    %1023 = vmatprep.subr.mxu0 0.0
    %1024 = vmatpush1.msra.mxu0 0.0
    %1025 = vmatprep.subr.mxu0 0.0
    %1026 = vmatpush1.msra.mxu0 0.0
    %1027 = vmatprep.subr.mxu0 0.0
    %1028 = vmatpush1.msra.mxu0 0.0
    %1029 = vmatprep.subr.mxu0 0.0
    %1030 = vmatpush1.msra.mxu0 0.0
    %1031 = vmatprep.subr.mxu0 0.0
    %1032 = vmatpush1.msra.mxu0 0.0
    %1033 = vmatprep.subr.mxu0 0.0
    %1034 = vmatpush1.msra.mxu0 0.0
    %1035 = vmatprep.subr.mxu0 0.0
    %1036 = vmatpush1.msra.mxu0 0.0
    %1037 = vmatprep.subr.mxu0 0.0
    %1038 = vmatpush1.msra.mxu0 0.0
    %1039 = vmatprep.subr.mxu0 0.0
    %1040 = vmatpush1.msra.mxu0 0.0
    %1041 = vmatprep.subr.mxu0 0.0
    %1042 = vmatpush1.msra.mxu0 0.0
    %1043 = vmatprep.subr.mxu0 0.0
    %1044 = vmatpush1.msra.mxu0 0.0
    %1045 = vmatprep.subr.mxu0 0.0
    %1046 = vmatpush1.msra.mxu0 0.0
    %1047 = vmatprep.subr.mxu0 0.0
    %1048 = vmatpush1.msra.mxu0 0.0
    %1049 = vmatprep.subr.mxu0 0.0
    %1050 = vmatpush1.msra.mxu0 0.0
    %1051 = vmatprep.subr.mxu0 0.0
    %1052 = vmatpush1.msra.mxu0 0.0
    %1053 = vmatprep.subr.mxu0 0.0
    %1054 = vmatpush1.msra.mxu0 0.0
    %1055 = vmatprep.subr.mxu0 0.0
    %1056 = vmatpush1.msra.mxu0 0.0
    %1057 = vmatprep.subr.mxu0 0.0
    %1058 = vmatpush1.msra.mxu0 0.0
    %1059 = vmatprep.subr.mxu0 0.0
    %1060 = vmatpush1.msra.mxu0 0.0
    %1061 = vmatprep.subr.mxu0 0.0
    %1062 = vmatpush1.msra.mxu0 0.0
    %1063 = vmatprep.subr.mxu0 0.0
    %1064 = vmatpush1.msra.mxu0 0.0
    %1065 = vmatprep.subr.mxu0 0.0
    %1066 = vmatpush1.msra.mxu0 0.0
    %1067 = vmatprep.subr.mxu0 0.0
    %1068 = vmatpush1.msra.mxu0 0.0
    %1069 = vmatprep.subr.mxu0 0.0
    %1070 = vmatpush1.msra.mxu0 0.0
    %1071 = vmatprep.subr.mxu0 0.0
    %1072 = vmatpush1.msra.mxu0 0.0
    %1073 = vmatprep.subr.mxu0 0.0
    %1074 = vmatpush1.msra.mxu0 0.0
    %1075 = vmatprep.subr.mxu0 0.0
    %1076 = vmatpush1.msra.mxu0 0.0
    %1077 = vmatprep.mubr.f32.mxu0 0.0
    %1078 = vmatmul.mubr.f32.gmra.mrb[0].mxu0 %v1011
    %v1079 = vpop.f32.mrb[0].mxu0
    %v1080 = vadd.f32 0.0, %v1079
    %v1081 = vpop.f32.mrb[0].mxu0
    %1082 = vdwg.mxu0
    %v1083 = vadd.f32 %v177, %v1080
    %v1084 = vxor.u32 %v1083, 2147483648
    %v1085 = vmul.f32 %v1084, 1.442695
    %v1086 = vpow.pop %v1085
    %v1087 = vadd.f32 %v1086, 1.0
    %v1088 = vrcp.pop %v1087
    %v1089 = vmul.f32 1.0, %v1088
    %v1090 = vtanh.pop %v1083
    %v1091 = vmul.f32 %v1089, %v963
    %1093 = vrot.lane.b32.xlu0 %v1090, 64
    %v1094 = vpop.permute.xlu0 %1093
    %v1096 = vmul.f32 %v1089, %v1094
    %1098 = vrot.lane.b32.xlu0 %v1096, 32
    %v1099 = vpop.permute.xlu0 %1098
    %v1101 = vadd.f32 %v1091, %v1099
    %v1102 = vtanh.pop %v1101
    %1104 = vrot.lane.b32.xlu0 %v1102, 64
    %v1105 = vpop.permute.xlu0 %1104
    %v1107 = vmul.f32 %v1089, %v1105
    %v1110 = vunpack.c.l.s4 1966171168
    %v1111 = vunpack.c.0.s8 %v1110
    %v1112 = vlaneseq
    %v1113 = vshrl.u32 %v1112, 7
    %v1114 = vsub.s32 %v1111, %v1113
    %v1115 = vrot.slane %v1107, %v1114
    %v1116 = vcombine.high %v1115, %v1115
    %v1118 = vunpack.c.l.s4 1966171168
    %v1119 = vunpack.c.0.s8 %v1118
    %v1120 = vlaneseq
    %v1121 = vshrl.u32 %v1120, 7
    %v1122 = vsub.s32 %v1119, %v1121
    %v1123 = vrot.slane %v1115, %v1122
    %v1125 = vunpack.c.l.s4 1966171168
    %v1126 = vunpack.c.0.s8 %v1125
    %v1127 = vlaneseq
    %v1128 = vshrl.u32 %v1127, 7
    %v1129 = vsub.s32 %v1126, %v1128
    %v1130 = vrot.slane %v1116, %v1129
    %v1131 = vlaneseq
    %v1132 = vshrl.u32 %v1131, 7
    %v1133 = vsub.s32 0, %v1132
    %v1134 = vrot.slane %v1123, %v1133
    %v1135 = vlaneseq
    %v1136 = vshrl.u32 %v1135, 7
    %v1137 = vsub.s32 0, %v1136
    %v1138 = vrot.slane %v1130, %v1137
    %1139 = vrot.lane.b32.xlu0 %v1134, 32
    %v1140 = vpop.permute.xlu0 %1139
    %1141 = vrot.lane.b32.xlu0 %v1138, 32
    %v1142 = vpop.permute.xlu0 %1141
    %1145 = vst.msk [vmem:[#allocation10 + $0x6] sm:$0x1] %vm316, %v1140
    %1146 = vst.msk [vmem:[#allocation10 + $0xe] sm:$0x1] %vm316, %v1142
    %1147 = vrot.lane.b32.xlu0 %v1107, 32
    %v1148 = vpop.permute.xlu0 %1147
    %v1149 = vsel %vm91, %v1148, 0
    %1151 = vmatprep.subr.mxu0 0.0
    %1152 = vmatpush1.msra.mxu0 %v86
    %1153 = vmatprep.subr.mxu0 0.0
    %1154 = vmatpush1.msra.mxu0 %v87
    %1155 = vmatprep.subr.mxu0 0.0
    %1156 = vmatpush1.msra.mxu0 %v88
    %1157 = vmatprep.subr.mxu0 0.0
    %1158 = vmatpush1.msra.mxu0 %v89
    %1159 = vmatprep.subr.mxu0 0.0
    %1160 = vmatpush1.msra.mxu0 0.0
    %1161 = vmatprep.subr.mxu0 0.0
    %1162 = vmatpush1.msra.mxu0 0.0
    %1163 = vmatprep.subr.mxu0 0.0
    %1164 = vmatpush1.msra.mxu0 0.0
    %1165 = vmatprep.subr.mxu0 0.0
    %1166 = vmatpush1.msra.mxu0 0.0
    %1167 = vmatprep.subr.mxu0 0.0
    %1168 = vmatpush1.msra.mxu0 0.0
    %1169 = vmatprep.subr.mxu0 0.0
    %1170 = vmatpush1.msra.mxu0 0.0
    %1171 = vmatprep.subr.mxu0 0.0
    %1172 = vmatpush1.msra.mxu0 0.0
    %1173 = vmatprep.subr.mxu0 0.0
    %1174 = vmatpush1.msra.mxu0 0.0
    %1175 = vmatprep.subr.mxu0 0.0
    %1176 = vmatpush1.msra.mxu0 0.0
    %1177 = vmatprep.subr.mxu0 0.0
    %1178 = vmatpush1.msra.mxu0 0.0
    %1179 = vmatprep.subr.mxu0 0.0
    %1180 = vmatpush1.msra.mxu0 0.0
    %1181 = vmatprep.subr.mxu0 0.0
    %1182 = vmatpush1.msra.mxu0 0.0
    %1183 = vmatprep.subr.mxu0 0.0
    %1184 = vmatpush1.msra.mxu0 0.0
    %1185 = vmatprep.subr.mxu0 0.0
    %1186 = vmatpush1.msra.mxu0 0.0
    %1187 = vmatprep.subr.mxu0 0.0
    %1188 = vmatpush1.msra.mxu0 0.0
    %1189 = vmatprep.subr.mxu0 0.0
    %1190 = vmatpush1.msra.mxu0 0.0
    %1191 = vmatprep.subr.mxu0 0.0
    %1192 = vmatpush1.msra.mxu0 0.0
    %1193 = vmatprep.subr.mxu0 0.0
    %1194 = vmatpush1.msra.mxu0 0.0
    %1195 = vmatprep.subr.mxu0 0.0
    %1196 = vmatpush1.msra.mxu0 0.0
    %1197 = vmatprep.subr.mxu0 0.0
    %1198 = vmatpush1.msra.mxu0 0.0
    %1199 = vmatprep.subr.mxu0 0.0
    %1200 = vmatpush1.msra.mxu0 0.0
    %1201 = vmatprep.subr.mxu0 0.0
    %1202 = vmatpush1.msra.mxu0 0.0
    %1203 = vmatprep.subr.mxu0 0.0
    %1204 = vmatpush1.msra.mxu0 0.0
    %1205 = vmatprep.subr.mxu0 0.0
    %1206 = vmatpush1.msra.mxu0 0.0
    %1207 = vmatprep.subr.mxu0 0.0
    %1208 = vmatpush1.msra.mxu0 0.0
    %1209 = vmatprep.subr.mxu0 0.0
    %1210 = vmatpush1.msra.mxu0 0.0
    %1211 = vmatprep.subr.mxu0 0.0
    %1212 = vmatpush1.msra.mxu0 0.0
    %1213 = vmatprep.subr.mxu0 0.0
    %1214 = vmatpush1.msra.mxu0 0.0
    %1215 = vmatprep.mubr.f32.mxu0 0.0
    %1216 = vmatmul.mubr.f32.gmra.mrb[0].mxu0 %v1149
    %v1217 = vpop.f32.mrb[0].mxu0
    %v1218 = vadd.f32 0.0, %v1217
    %v1219 = vpop.f32.mrb[0].mxu0
    %1220 = vdwg.mxu0
    %v1221 = vadd.f32 %v177, %v1218
    %v1222 = vxor.u32 %v1221, 2147483648
    %v1223 = vmul.f32 %v1222, 1.442695
    %v1224 = vpow.pop %v1223
    %v1225 = vadd.f32 %v1224, 1.0
    %v1226 = vrcp.pop %v1225
    %v1227 = vmul.f32 1.0, %v1226
    %v1228 = vtanh.pop %v1221
    %v1229 = vmul.f32 %v1227, %v1101
    %1231 = vrot.lane.b32.xlu0 %v1228, 64
    %v1232 = vpop.permute.xlu0 %1231
    %v1234 = vmul.f32 %v1227, %v1232
    %1236 = vrot.lane.b32.xlu0 %v1234, 32
    %v1237 = vpop.permute.xlu0 %1236
    %v1239 = vadd.f32 %v1229, %v1237
    %v1240 = vtanh.pop %v1239
    %1242 = vrot.lane.b32.xlu0 %v1240, 64
    %v1243 = vpop.permute.xlu0 %1242
    %v1245 = vmul.f32 %v1227, %v1243
    %v1248 = vunpack.c.l.s4 1966171168
    %v1249 = vunpack.c.0.s8 %v1248
    %v1250 = vlaneseq
    %v1251 = vshrl.u32 %v1250, 7
    %v1252 = vsub.s32 %v1249, %v1251
    %v1253 = vrot.slane %v1245, %v1252
    %v1254 = vcombine.high %v1253, %v1253
    %v1256 = vunpack.c.l.s4 1966171168
    %v1257 = vunpack.c.0.s8 %v1256
    %v1258 = vlaneseq
    %v1259 = vshrl.u32 %v1258, 7
    %v1260 = vsub.s32 %v1257, %v1259
    %v1261 = vrot.slane %v1253, %v1260
    %v1263 = vunpack.c.l.s4 1966171168
    %v1264 = vunpack.c.0.s8 %v1263
    %v1265 = vlaneseq
    %v1266 = vshrl.u32 %v1265, 7
    %v1267 = vsub.s32 %v1264, %v1266
    %v1268 = vrot.slane %v1254, %v1267
    %v1269 = vlaneseq
    %v1270 = vshrl.u32 %v1269, 7
    %v1271 = vsub.s32 0, %v1270
    %v1272 = vrot.slane %v1261, %v1271
    %v1273 = vlaneseq
    %v1274 = vshrl.u32 %v1273, 7
    %v1275 = vsub.s32 0, %v1274
    %v1276 = vrot.slane %v1268, %v1275
    %1277 = vrot.lane.b32.xlu0 %v1272, 32
    %v1278 = vpop.permute.xlu0 %1277
    %1279 = vrot.lane.b32.xlu0 %v1276, 32
    %v1280 = vpop.permute.xlu0 %1279
    %1283 = vst.msk [vmem:[#allocation10 + $0x7] sm:$0x1] %vm316, %v1278
    %1284 = vst.msk [vmem:[#allocation10 + $0xf] sm:$0x1] %vm316, %v1280
    %v1285 = vld [vmem:[#allocation10] sm:$0xff]
    %v1286 = vld [vmem:[#allocation10 + $0x8] sm:$0xff]
    %v1288 = vsel %vm91, %v1285, 0
    %v1291 = vsel %vm91, %v1286, 0
    %1293 = vmatprep.subr.mxu0 0.0
    %1294 = vmatpush1.msra.mxu0 %v78
    %1295 = vmatprep.subr.mxu0 0.0
    %1296 = vmatpush1.msra.mxu0 %v79
    %1297 = vmatprep.subr.mxu0 0.0
    %1298 = vmatpush1.msra.mxu0 %v80
    %1299 = vmatprep.subr.mxu0 0.0
    %1300 = vmatpush1.msra.mxu0 %v81
    %1301 = vmatprep.subr.mxu0 0.0
    %1302 = vmatpush1.msra.mxu0 0.0
    %1303 = vmatprep.subr.mxu0 0.0
    %1304 = vmatpush1.msra.mxu0 0.0
    %1305 = vmatprep.subr.mxu0 0.0
    %1306 = vmatpush1.msra.mxu0 0.0
    %1307 = vmatprep.subr.mxu0 0.0
    %1308 = vmatpush1.msra.mxu0 0.0
    %1309 = vmatprep.subr.mxu0 0.0
    %1310 = vmatpush1.msra.mxu0 0.0
    %1311 = vmatprep.subr.mxu0 0.0
    %1312 = vmatpush1.msra.mxu0 0.0
    %1313 = vmatprep.subr.mxu0 0.0
    %1314 = vmatpush1.msra.mxu0 0.0
    %1315 = vmatprep.subr.mxu0 0.0
    %1316 = vmatpush1.msra.mxu0 0.0
    %1317 = vmatprep.subr.mxu0 0.0
    %1318 = vmatpush1.msra.mxu0 0.0
    %1319 = vmatprep.subr.mxu0 0.0
    %1320 = vmatpush1.msra.mxu0 0.0
    %1321 = vmatprep.subr.mxu0 0.0
    %1322 = vmatpush1.msra.mxu0 0.0
    %1323 = vmatprep.subr.mxu0 0.0
    %1324 = vmatpush1.msra.mxu0 0.0
    %1325 = vmatprep.subr.mxu0 0.0
    %1326 = vmatpush1.msra.mxu0 0.0
    %1327 = vmatprep.subr.mxu0 0.0
    %1328 = vmatpush1.msra.mxu0 0.0
    %1329 = vmatprep.subr.mxu0 0.0
    %1330 = vmatpush1.msra.mxu0 0.0
    %1331 = vmatprep.subr.mxu0 0.0
    %1332 = vmatpush1.msra.mxu0 0.0
    %1333 = vmatprep.subr.mxu0 0.0
    %1334 = vmatpush1.msra.mxu0 0.0
    %1335 = vmatprep.subr.mxu0 0.0
    %1336 = vmatpush1.msra.mxu0 0.0
    %1337 = vmatprep.subr.mxu0 0.0
    %1338 = vmatpush1.msra.mxu0 0.0
    %1339 = vmatprep.subr.mxu0 0.0
    %1340 = vmatpush1.msra.mxu0 0.0
    %1341 = vmatprep.subr.mxu0 0.0
    %1342 = vmatpush1.msra.mxu0 0.0
    %1343 = vmatprep.subr.mxu0 0.0
    %1344 = vmatpush1.msra.mxu0 0.0
    %1345 = vmatprep.subr.mxu0 0.0
    %1346 = vmatpush1.msra.mxu0 0.0
    %1347 = vmatprep.subr.mxu0 0.0
    %1348 = vmatpush1.msra.mxu0 0.0
    %1349 = vmatprep.subr.mxu0 0.0
    %1350 = vmatpush1.msra.mxu0 0.0
    %1351 = vmatprep.subr.mxu0 0.0
    %1352 = vmatpush1.msra.mxu0 0.0
    %1353 = vmatprep.subr.mxu0 0.0
    %1354 = vmatpush1.msra.mxu0 0.0
    %1355 = vmatprep.subr.mxu0 0.0
    %1356 = vmatpush1.msra.mxu0 0.0
    %1357 = vmatprep.mubr.f32.mxu0 0.0
    %1358 = vmatmul.mubr.f32.gmra.mrb[0].mxu0 %v1288
    %v1359 = vpop.f32.mrb[0].mxu0
    %v1360 = vadd.f32 0.0, %v1359
    %v1361 = vpop.f32.mrb[0].mxu0
    %1362 = vmatprep.mubr.f32.mxu0 0.0
    %1363 = vmatmul.mubr.f32.gmra.mrb[0].mxu0 %v1291
    %v1364 = vpop.f32.mrb[0].mxu0
    %v1365 = vadd.f32 0.0, %v1364
    %v1366 = vpop.f32.mrb[0].mxu0
    %1367 = vdwg.mxu0
    %v1368 = vadd.f32 %v1360, %v179
    %v1369 = vadd.f32 %v1365, %v180
    %1370 = vrot.lane.b32.xlu0 %v1245, 32
    %v1371 = vpop.permute.xlu0 %1370
    %v1372 = vsel %vm91, %v1371, 0
    %1374 = vmatprep.subr.mxu0 0.0
    %1375 = vmatpush1.msra.mxu0 %v86
    %1376 = vmatprep.subr.mxu0 0.0
    %1377 = vmatpush1.msra.mxu0 %v87
    %1378 = vmatprep.subr.mxu0 0.0
    %1379 = vmatpush1.msra.mxu0 %v88
    %1380 = vmatprep.subr.mxu0 0.0
    %1381 = vmatpush1.msra.mxu0 %v89
    %1382 = vmatprep.subr.mxu0 0.0
    %1383 = vmatpush1.msra.mxu0 0.0
    %1384 = vmatprep.subr.mxu0 0.0
    %1385 = vmatpush1.msra.mxu0 0.0
    %1386 = vmatprep.subr.mxu0 0.0
    %1387 = vmatpush1.msra.mxu0 0.0
    %1388 = vmatprep.subr.mxu0 0.0
    %1389 = vmatpush1.msra.mxu0 0.0
    %1390 = vmatprep.subr.mxu0 0.0
    %1391 = vmatpush1.msra.mxu0 0.0
    %1392 = vmatprep.subr.mxu0 0.0
    %1393 = vmatpush1.msra.mxu0 0.0
    %1394 = vmatprep.subr.mxu0 0.0
    %1395 = vmatpush1.msra.mxu0 0.0
    %1396 = vmatprep.subr.mxu0 0.0
    %1397 = vmatpush1.msra.mxu0 0.0
    %1398 = vmatprep.subr.mxu0 0.0
    %1399 = vmatpush1.msra.mxu0 0.0
    %1400 = vmatprep.subr.mxu0 0.0
    %1401 = vmatpush1.msra.mxu0 0.0
    %1402 = vmatprep.subr.mxu0 0.0
    %1403 = vmatpush1.msra.mxu0 0.0
    %1404 = vmatprep.subr.mxu0 0.0
    %1405 = vmatpush1.msra.mxu0 0.0
    %1406 = vmatprep.subr.mxu0 0.0
    %1407 = vmatpush1.msra.mxu0 0.0
    %1408 = vmatprep.subr.mxu0 0.0
    %1409 = vmatpush1.msra.mxu0 0.0
    %1410 = vmatprep.subr.mxu0 0.0
    %1411 = vmatpush1.msra.mxu0 0.0
    %1412 = vmatprep.subr.mxu0 0.0
    %1413 = vmatpush1.msra.mxu0 0.0
    %1414 = vmatprep.subr.mxu0 0.0
    %1415 = vmatpush1.msra.mxu0 0.0
    %1416 = vmatprep.subr.mxu0 0.0
    %1417 = vmatpush1.msra.mxu0 0.0
    %1418 = vmatprep.subr.mxu0 0.0
    %1419 = vmatpush1.msra.mxu0 0.0
    %1420 = vmatprep.subr.mxu0 0.0
    %1421 = vmatpush1.msra.mxu0 0.0
    %1422 = vmatprep.subr.mxu0 0.0
    %1423 = vmatpush1.msra.mxu0 0.0
    %1424 = vmatprep.subr.mxu0 0.0
    %1425 = vmatpush1.msra.mxu0 0.0
    %1426 = vmatprep.subr.mxu0 0.0
    %1427 = vmatpush1.msra.mxu0 0.0
    %1428 = vmatprep.subr.mxu0 0.0
    %1429 = vmatpush1.msra.mxu0 0.0
    %1430 = vmatprep.subr.mxu0 0.0
    %1431 = vmatpush1.msra.mxu0 0.0
    %1432 = vmatprep.subr.mxu0 0.0
    %1433 = vmatpush1.msra.mxu0 0.0
    %1434 = vmatprep.subr.mxu0 0.0
    %1435 = vmatpush1.msra.mxu0 0.0
    %1436 = vmatprep.subr.mxu0 0.0
    %1437 = vmatpush1.msra.mxu0 0.0
    %1438 = vmatprep.mubr.f32.mxu0 0.0
    %1439 = vmatmul.mubr.f32.gmra.mrb[0].mxu0 %v1372
    %v1440 = vpop.f32.mrb[0].mxu0
    %v1441 = vadd.f32 0.0, %v1440
    %v1442 = vpop.f32.mrb[0].mxu0
    %1443 = vdwg.mxu0
    %v1445 = vrot.slane %v1441, 1
    %v1448 = vadd.f32 %v1368, %v1441
    %v1449 = vadd.f32 %v1369, %v1445
    %v1450 = vxor.u32 %v1448, 2147483648
    %v1451 = vxor.u32 %v1449, 2147483648
    %v1452 = vmul.f32 %v1450, 1.442695
    %v1453 = vpow.pop %v1452
    %v1454 = vmul.f32 %v1451, 1.442695
    %v1455 = vpow.pop %v1454
    %v1456 = vadd.f32 %v1453, 1.0
    %v1457 = vadd.f32 %v1455, 1.0
    %v1458 = vrcp.pop %v1456
    %v1459 = vmul.f32 1.0, %v1458
    %v1460 = vrcp.pop %v1457
    %v1461 = vmul.f32 1.0, %v1460
    %v1462 = vtanh.pop %v1448
    %v1463 = vtanh.pop %v1449
    %v1465 = vrot.slane %v1239, 1
    %v1468 = vmul.f32 %v1459, %v1239
    %v1469 = vmul.f32 %v1461, %v1465
    %1472 = vrot.lane.b32.xlu0 %v1462, 64
    %v1473 = vpop.permute.xlu0 %1472
    %1474 = vrot.lane.b32.xlu0 %v1463, 64
    %v1475 = vpop.permute.xlu0 %1474
    %v1478 = vmul.f32 %v1459, %v1473
    %v1479 = vmul.f32 %v1461, %v1475
    %1482 = vrot.lane.b32.xlu0 %v1478, 32
    %v1483 = vpop.permute.xlu0 %1482
    %1484 = vrot.lane.b32.xlu0 %v1479, 32
    %v1485 = vpop.permute.xlu0 %1484
    %v1488 = vadd.f32 %v1468, %v1483
    %v1489 = vadd.f32 %v1469, %v1485
    %v1490 = vtanh.pop %v1488
    %v1491 = vtanh.pop %v1489
    %1494 = vrot.lane.b32.xlu0 %v1490, 64
    %v1495 = vpop.permute.xlu0 %1494
    %1496 = vrot.lane.b32.xlu0 %v1491, 64
    %v1497 = vpop.permute.xlu0 %1496
    %v1500 = vmul.f32 %v1459, %v1495
    %v1501 = vmul.f32 %v1461, %v1497
    %1504 = vrot.lane.b32.xlu0 %v1500, 32
    %v1505 = vpop.permute.xlu0 %1504
    %1506 = vrot.lane.b32.xlu0 %v1501, 32
    %v1507 = vpop.permute.xlu0 %1506
    %1510 = vst.msk [vmem:[#allocation10] sm:$0x1] %vm316, %v1505
    %1511 = vst.msk [vmem:[#allocation10 + $0x8] sm:$0x1] %vm316, %v1507
    %v1512 = vrot.slane %v1501, 7
    %vm1513 = vcmask 1041409
    %v1514 = vsel %vm1513, %v1512, %v1500
    %1515 = vrot.lane.b32.xlu0 %v1514, 32
    %v1516 = vpop.permute.xlu0 %1515
    %v1517 = vsel %vm91, %v1516, 0
    %1519 = vmatprep.subr.mxu0 0.0
    %1520 = vmatpush1.msra.mxu0 %v86
    %1521 = vmatprep.subr.mxu0 0.0
    %1522 = vmatpush1.msra.mxu0 %v87
    %1523 = vmatprep.subr.mxu0 0.0
    %1524 = vmatpush1.msra.mxu0 %v88
    %1525 = vmatprep.subr.mxu0 0.0
    %1526 = vmatpush1.msra.mxu0 %v89
    %1527 = vmatprep.subr.mxu0 0.0
    %1528 = vmatpush1.msra.mxu0 0.0
    %1529 = vmatprep.subr.mxu0 0.0
    %1530 = vmatpush1.msra.mxu0 0.0
    %1531 = vmatprep.subr.mxu0 0.0
    %1532 = vmatpush1.msra.mxu0 0.0
    %1533 = vmatprep.subr.mxu0 0.0
    %1534 = vmatpush1.msra.mxu0 0.0
    %1535 = vmatprep.subr.mxu0 0.0
    %1536 = vmatpush1.msra.mxu0 0.0
    %1537 = vmatprep.subr.mxu0 0.0
    %1538 = vmatpush1.msra.mxu0 0.0
    %1539 = vmatprep.subr.mxu0 0.0
    %1540 = vmatpush1.msra.mxu0 0.0
    %1541 = vmatprep.subr.mxu0 0.0
    %1542 = vmatpush1.msra.mxu0 0.0
    %1543 = vmatprep.subr.mxu0 0.0
    %1544 = vmatpush1.msra.mxu0 0.0
    %1545 = vmatprep.subr.mxu0 0.0
    %1546 = vmatpush1.msra.mxu0 0.0
    %1547 = vmatprep.subr.mxu0 0.0
    %1548 = vmatpush1.msra.mxu0 0.0
    %1549 = vmatprep.subr.mxu0 0.0
    %1550 = vmatpush1.msra.mxu0 0.0
    %1551 = vmatprep.subr.mxu0 0.0
    %1552 = vmatpush1.msra.mxu0 0.0
    %1553 = vmatprep.subr.mxu0 0.0
    %1554 = vmatpush1.msra.mxu0 0.0
    %1555 = vmatprep.subr.mxu0 0.0
    %1556 = vmatpush1.msra.mxu0 0.0
    %1557 = vmatprep.subr.mxu0 0.0
    %1558 = vmatpush1.msra.mxu0 0.0
    %1559 = vmatprep.subr.mxu0 0.0
    %1560 = vmatpush1.msra.mxu0 0.0
    %1561 = vmatprep.subr.mxu0 0.0
    %1562 = vmatpush1.msra.mxu0 0.0
    %1563 = vmatprep.subr.mxu0 0.0
    %1564 = vmatpush1.msra.mxu0 0.0
    %1565 = vmatprep.subr.mxu0 0.0
    %1566 = vmatpush1.msra.mxu0 0.0
    %1567 = vmatprep.subr.mxu0 0.0
    %1568 = vmatpush1.msra.mxu0 0.0
    %1569 = vmatprep.subr.mxu0 0.0
    %1570 = vmatpush1.msra.mxu0 0.0
    %1571 = vmatprep.subr.mxu0 0.0
    %1572 = vmatpush1.msra.mxu0 0.0
    %1573 = vmatprep.subr.mxu0 0.0
    %1574 = vmatpush1.msra.mxu0 0.0
    %1575 = vmatprep.subr.mxu0 0.0
    %1576 = vmatpush1.msra.mxu0 0.0
    %1577 = vmatprep.subr.mxu0 0.0
    %1578 = vmatpush1.msra.mxu0 0.0
    %1579 = vmatprep.subr.mxu0 0.0
    %1580 = vmatpush1.msra.mxu0 0.0
    %1581 = vmatprep.subr.mxu0 0.0
    %1582 = vmatpush1.msra.mxu0 0.0
    %1583 = vmatprep.mubr.f32.mxu0 0.0
    %1584 = vmatmul.mubr.f32.gmra.mrb[0].mxu0 %v1517
    %v1585 = vpop.f32.mrb[0].mxu0
    %v1586 = vadd.f32 0.0, %v1585
    %v1587 = vpop.f32.mrb[0].mxu0
    %1588 = vdwg.mxu0
    %v1590 = vrot.slane %v1586, 7
    %v1593 = vadd.f32 %v1368, %v1590
    %v1594 = vadd.f32 %v1369, %v1586
    %v1595 = vxor.u32 %v1593, 2147483648
    %v1596 = vxor.u32 %v1594, 2147483648
    %v1597 = vmul.f32 %v1595, 1.442695
    %v1598 = vpow.pop %v1597
    %v1599 = vmul.f32 %v1596, 1.442695
    %v1600 = vpow.pop %v1599
    %v1601 = vadd.f32 %v1598, 1.0
    %v1602 = vadd.f32 %v1600, 1.0
    %v1603 = vrcp.pop %v1601
    %v1604 = vmul.f32 1.0, %v1603
    %v1605 = vrcp.pop %v1602
    %v1606 = vmul.f32 1.0, %v1605
    %v1607 = vtanh.pop %v1593
    %v1608 = vtanh.pop %v1594
    %v1611 = vrot.slane %v1488, 7
    %v1612 = vrot.slane %v1489, 7
    %v1615 = vmul.f32 %v1604, %v1611
    %v1616 = vmul.f32 %v1606, %v1612
    %1619 = vrot.lane.b32.xlu0 %v1607, 64
    %v1620 = vpop.permute.xlu0 %1619
    %1621 = vrot.lane.b32.xlu0 %v1608, 64
    %v1622 = vpop.permute.xlu0 %1621
    %v1625 = vmul.f32 %v1604, %v1620
    %v1626 = vmul.f32 %v1606, %v1622
    %1629 = vrot.lane.b32.xlu0 %v1625, 32
    %v1630 = vpop.permute.xlu0 %1629
    %1631 = vrot.lane.b32.xlu0 %v1626, 32
    %v1632 = vpop.permute.xlu0 %1631
    %v1635 = vadd.f32 %v1615, %v1630
    %v1636 = vadd.f32 %v1616, %v1632
    %v1637 = vtanh.pop %v1635
    %v1638 = vtanh.pop %v1636
    %1641 = vrot.lane.b32.xlu0 %v1637, 64
    %v1642 = vpop.permute.xlu0 %1641
    %1643 = vrot.lane.b32.xlu0 %v1638, 64
    %v1644 = vpop.permute.xlu0 %1643
    %v1647 = vmul.f32 %v1604, %v1642
    %v1648 = vmul.f32 %v1606, %v1644
    %1651 = vrot.lane.b32.xlu0 %v1647, 32
    %v1652 = vpop.permute.xlu0 %1651
    %1653 = vrot.lane.b32.xlu0 %v1648, 32
    %v1654 = vpop.permute.xlu0 %1653
    %vm1657 = vcmask 254977
    %1658 = vst.msk [vmem:[#allocation10] sm:$0x2] %vm1657, %v1652
    %1659 = vst.msk [vmem:[#allocation10 + $0x8] sm:$0x2] %vm1657, %v1654
    %v1660 = vrot.slane %v1647, 1
    %v1661 = vsel %vm1513, %v1648, %v1660
    %1662 = vrot.lane.b32.xlu0 %v1661, 32
    %v1663 = vpop.permute.xlu0 %1662
    %v1664 = vsel %vm91, %v1663, 0
    %1666 = vmatprep.subr.mxu0 0.0
    %1667 = vmatpush1.msra.mxu0 %v86
    %1668 = vmatprep.subr.mxu0 0.0
    %1669 = vmatpush1.msra.mxu0 %v87
    %1670 = vmatprep.subr.mxu0 0.0
    %1671 = vmatpush1.msra.mxu0 %v88
    %1672 = vmatprep.subr.mxu0 0.0
    %1673 = vmatpush1.msra.mxu0 %v89
    %1674 = vmatprep.subr.mxu0 0.0
    %1675 = vmatpush1.msra.mxu0 0.0
    %1676 = vmatprep.subr.mxu0 0.0
    %1677 = vmatpush1.msra.mxu0 0.0
    %1678 = vmatprep.subr.mxu0 0.0
    %1679 = vmatpush1.msra.mxu0 0.0
    %1680 = vmatprep.subr.mxu0 0.0
    %1681 = vmatpush1.msra.mxu0 0.0
    %1682 = vmatprep.subr.mxu0 0.0
    %1683 = vmatpush1.msra.mxu0 0.0
    %1684 = vmatprep.subr.mxu0 0.0
    %1685 = vmatpush1.msra.mxu0 0.0
    %1686 = vmatprep.subr.mxu0 0.0
    %1687 = vmatpush1.msra.mxu0 0.0
    %1688 = vmatprep.subr.mxu0 0.0
    %1689 = vmatpush1.msra.mxu0 0.0
    %1690 = vmatprep.subr.mxu0 0.0
    %1691 = vmatpush1.msra.mxu0 0.0
    %1692 = vmatprep.subr.mxu0 0.0
    %1693 = vmatpush1.msra.mxu0 0.0
    %1694 = vmatprep.subr.mxu0 0.0
    %1695 = vmatpush1.msra.mxu0 0.0
    %1696 = vmatprep.subr.mxu0 0.0
    %1697 = vmatpush1.msra.mxu0 0.0
    %1698 = vmatprep.subr.mxu0 0.0
    %1699 = vmatpush1.msra.mxu0 0.0
    %1700 = vmatprep.subr.mxu0 0.0
    %1701 = vmatpush1.msra.mxu0 0.0
    %1702 = vmatprep.subr.mxu0 0.0
    %1703 = vmatpush1.msra.mxu0 0.0
    %1704 = vmatprep.subr.mxu0 0.0
    %1705 = vmatpush1.msra.mxu0 0.0
    %1706 = vmatprep.subr.mxu0 0.0
    %1707 = vmatpush1.msra.mxu0 0.0
    %1708 = vmatprep.subr.mxu0 0.0
    %1709 = vmatpush1.msra.mxu0 0.0
    %1710 = vmatprep.subr.mxu0 0.0
    %1711 = vmatpush1.msra.mxu0 0.0
    %1712 = vmatprep.subr.mxu0 0.0
    %1713 = vmatpush1.msra.mxu0 0.0
    %1714 = vmatprep.subr.mxu0 0.0
    %1715 = vmatpush1.msra.mxu0 0.0
    %1716 = vmatprep.subr.mxu0 0.0
    %1717 = vmatpush1.msra.mxu0 0.0
    %1718 = vmatprep.subr.mxu0 0.0
    %1719 = vmatpush1.msra.mxu0 0.0
    %1720 = vmatprep.subr.mxu0 0.0
    %1721 = vmatpush1.msra.mxu0 0.0
    %1722 = vmatprep.subr.mxu0 0.0
    %1723 = vmatpush1.msra.mxu0 0.0
    %1724 = vmatprep.subr.mxu0 0.0
    %1725 = vmatpush1.msra.mxu0 0.0
    %1726 = vmatprep.subr.mxu0 0.0
    %1727 = vmatpush1.msra.mxu0 0.0
    %1728 = vmatprep.subr.mxu0 0.0
    %1729 = vmatpush1.msra.mxu0 0.0
    %1730 = vmatprep.mubr.f32.mxu0 0.0
    %1731 = vmatmul.mubr.f32.gmra.mrb[0].mxu0 %v1664
    %v1732 = vpop.f32.mrb[0].mxu0
    %v1733 = vadd.f32 0.0, %v1732
    %v1734 = vpop.f32.mrb[0].mxu0
    %1735 = vdwg.mxu0
    %v1737 = vrot.slane %v1733, 6
    %v1738 = vrot.slane %v1733, 7
    %v1741 = vadd.f32 %v1368, %v1737
    %v1742 = vadd.f32 %v1369, %v1738
    %v1743 = vxor.u32 %v1741, 2147483648
    %v1744 = vxor.u32 %v1742, 2147483648
    %v1745 = vmul.f32 %v1743, 1.442695
    %v1746 = vpow.pop %v1745
    %v1747 = vmul.f32 %v1744, 1.442695
    %v1748 = vpow.pop %v1747
    %v1749 = vadd.f32 %v1746, 1.0
    %v1750 = vadd.f32 %v1748, 1.0
    %v1751 = vrcp.pop %v1749
    %v1752 = vmul.f32 1.0, %v1751
    %v1753 = vrcp.pop %v1750
    %v1754 = vmul.f32 1.0, %v1753
    %v1755 = vtanh.pop %v1741
    %v1756 = vtanh.pop %v1742
    %v1759 = vrot.slane %v1635, 7
    %v1760 = vrot.slane %v1636, 7
    %v1763 = vmul.f32 %v1752, %v1759
    %v1764 = vmul.f32 %v1754, %v1760
    %1767 = vrot.lane.b32.xlu0 %v1755, 64
    %v1768 = vpop.permute.xlu0 %1767
    %1769 = vrot.lane.b32.xlu0 %v1756, 64
    %v1770 = vpop.permute.xlu0 %1769
    %v1773 = vmul.f32 %v1752, %v1768
    %v1774 = vmul.f32 %v1754, %v1770
    %1777 = vrot.lane.b32.xlu0 %v1773, 32
    %v1778 = vpop.permute.xlu0 %1777
    %1779 = vrot.lane.b32.xlu0 %v1774, 32
    %v1780 = vpop.permute.xlu0 %1779
    %v1783 = vadd.f32 %v1763, %v1778
    %v1784 = vadd.f32 %v1764, %v1780
    %v1785 = vtanh.pop %v1783
    %v1786 = vtanh.pop %v1784
    %1789 = vrot.lane.b32.xlu0 %v1785, 64
    %v1790 = vpop.permute.xlu0 %1789
    %1791 = vrot.lane.b32.xlu0 %v1786, 64
    %v1792 = vpop.permute.xlu0 %1791
    %v1795 = vmul.f32 %v1752, %v1790
    %v1796 = vmul.f32 %v1754, %v1792
    %1799 = vrot.lane.b32.xlu0 %v1795, 32
    %v1800 = vpop.permute.xlu0 %1799
    %1801 = vrot.lane.b32.xlu0 %v1796, 32
    %v1802 = vpop.permute.xlu0 %1801
    %vm1805 = vcmask 256002
    %1806 = vst.msk [vmem:[#allocation10] sm:$0x4] %vm1805, %v1800
    %1807 = vst.msk [vmem:[#allocation10 + $0x8] sm:$0x4] %vm1805, %v1802
    %v1808 = vrot.slane %v1795, 2
    %v1809 = vrot.slane %v1796, 1
    %v1810 = vsel %vm1513, %v1809, %v1808
    %1811 = vrot.lane.b32.xlu0 %v1810, 32
    %v1812 = vpop.permute.xlu0 %1811
    %v1813 = vsel %vm91, %v1812, 0
    %1815 = vmatprep.subr.mxu0 0.0
    %1816 = vmatpush1.msra.mxu0 %v86
    %1817 = vmatprep.subr.mxu0 0.0
    %1818 = vmatpush1.msra.mxu0 %v87
    %1819 = vmatprep.subr.mxu0 0.0
    %1820 = vmatpush1.msra.mxu0 %v88
    %1821 = vmatprep.subr.mxu0 0.0
    %1822 = vmatpush1.msra.mxu0 %v89
    %1823 = vmatprep.subr.mxu0 0.0
    %1824 = vmatpush1.msra.mxu0 0.0
    %1825 = vmatprep.subr.mxu0 0.0
    %1826 = vmatpush1.msra.mxu0 0.0
    %1827 = vmatprep.subr.mxu0 0.0
    %1828 = vmatpush1.msra.mxu0 0.0
    %1829 = vmatprep.subr.mxu0 0.0
    %1830 = vmatpush1.msra.mxu0 0.0
    %1831 = vmatprep.subr.mxu0 0.0
    %1832 = vmatpush1.msra.mxu0 0.0
    %1833 = vmatprep.subr.mxu0 0.0
    %1834 = vmatpush1.msra.mxu0 0.0
    %1835 = vmatprep.subr.mxu0 0.0
    %1836 = vmatpush1.msra.mxu0 0.0
    %1837 = vmatprep.subr.mxu0 0.0
    %1838 = vmatpush1.msra.mxu0 0.0
    %1839 = vmatprep.subr.mxu0 0.0
    %1840 = vmatpush1.msra.mxu0 0.0
    %1841 = vmatprep.subr.mxu0 0.0
    %1842 = vmatpush1.msra.mxu0 0.0
    %1843 = vmatprep.subr.mxu0 0.0
    %1844 = vmatpush1.msra.mxu0 0.0
    %1845 = vmatprep.subr.mxu0 0.0
    %1846 = vmatpush1.msra.mxu0 0.0
    %1847 = vmatprep.subr.mxu0 0.0
    %1848 = vmatpush1.msra.mxu0 0.0
    %1849 = vmatprep.subr.mxu0 0.0
    %1850 = vmatpush1.msra.mxu0 0.0
    %1851 = vmatprep.subr.mxu0 0.0
    %1852 = vmatpush1.msra.mxu0 0.0
    %1853 = vmatprep.subr.mxu0 0.0
    %1854 = vmatpush1.msra.mxu0 0.0
    %1855 = vmatprep.subr.mxu0 0.0
    %1856 = vmatpush1.msra.mxu0 0.0
    %1857 = vmatprep.subr.mxu0 0.0
    %1858 = vmatpush1.msra.mxu0 0.0
    %1859 = vmatprep.subr.mxu0 0.0
    %1860 = vmatpush1.msra.mxu0 0.0
    %1861 = vmatprep.subr.mxu0 0.0
    %1862 = vmatpush1.msra.mxu0 0.0
    %1863 = vmatprep.subr.mxu0 0.0
    %1864 = vmatpush1.msra.mxu0 0.0
    %1865 = vmatprep.subr.mxu0 0.0
    %1866 = vmatpush1.msra.mxu0 0.0
    %1867 = vmatprep.subr.mxu0 0.0
    %1868 = vmatpush1.msra.mxu0 0.0
    %1869 = vmatprep.subr.mxu0 0.0
    %1870 = vmatpush1.msra.mxu0 0.0
    %1871 = vmatprep.subr.mxu0 0.0
    %1872 = vmatpush1.msra.mxu0 0.0
    %1873 = vmatprep.subr.mxu0 0.0
    %1874 = vmatpush1.msra.mxu0 0.0
    %1875 = vmatprep.subr.mxu0 0.0
    %1876 = vmatpush1.msra.mxu0 0.0
    %1877 = vmatprep.subr.mxu0 0.0
    %1878 = vmatpush1.msra.mxu0 0.0
    %1879 = vmatprep.mubr.f32.mxu0 0.0
    %1880 = vmatmul.mubr.f32.gmra.mrb[0].mxu0 %v1813
    %v1881 = vpop.f32.mrb[0].mxu0
    %v1882 = vadd.f32 0.0, %v1881
    %v1883 = vpop.f32.mrb[0].mxu0
    %1884 = vdwg.mxu0
    %v1886 = vrot.slane %v1882, 5
    %v1887 = vrot.slane %v1882, 6
    %v1890 = vadd.f32 %v1368, %v1886
    %v1891 = vadd.f32 %v1369, %v1887
    %v1892 = vxor.u32 %v1890, 2147483648
    %v1893 = vxor.u32 %v1891, 2147483648
    %v1894 = vmul.f32 %v1892, 1.442695
    %v1895 = vpow.pop %v1894
    %v1896 = vmul.f32 %v1893, 1.442695
    %v1897 = vpow.pop %v1896
    %v1898 = vadd.f32 %v1895, 1.0
    %v1899 = vadd.f32 %v1897, 1.0
    %v1900 = vrcp.pop %v1898
    %v1901 = vmul.f32 1.0, %v1900
    %v1902 = vrcp.pop %v1899
    %v1903 = vmul.f32 1.0, %v1902
    %v1904 = vtanh.pop %v1890
    %v1905 = vtanh.pop %v1891
    %v1908 = vrot.slane %v1783, 7
    %v1909 = vrot.slane %v1784, 7
    %v1912 = vmul.f32 %v1901, %v1908
    %v1913 = vmul.f32 %v1903, %v1909
    %1916 = vrot.lane.b32.xlu0 %v1904, 64
    %v1917 = vpop.permute.xlu0 %1916
    %1918 = vrot.lane.b32.xlu0 %v1905, 64
    %v1919 = vpop.permute.xlu0 %1918
    %v1922 = vmul.f32 %v1901, %v1917
    %v1923 = vmul.f32 %v1903, %v1919
    %1926 = vrot.lane.b32.xlu0 %v1922, 32
    %v1927 = vpop.permute.xlu0 %1926
    %1928 = vrot.lane.b32.xlu0 %v1923, 32
    %v1929 = vpop.permute.xlu0 %1928
    %v1932 = vadd.f32 %v1912, %v1927
    %v1933 = vadd.f32 %v1913, %v1929
    %v1934 = vtanh.pop %v1932
    %v1935 = vtanh.pop %v1933
    %1938 = vrot.lane.b32.xlu0 %v1934, 64
    %v1939 = vpop.permute.xlu0 %1938
    %1940 = vrot.lane.b32.xlu0 %v1935, 64
    %v1941 = vpop.permute.xlu0 %1940
    %v1944 = vmul.f32 %v1901, %v1939
    %v1945 = vmul.f32 %v1903, %v1941
    %1948 = vrot.lane.b32.xlu0 %v1944, 32
    %v1949 = vpop.permute.xlu0 %1948
    %1950 = vrot.lane.b32.xlu0 %v1945, 32
    %v1951 = vpop.permute.xlu0 %1950
    %vm1954 = vcmask 257027
    %1955 = vst.msk [vmem:[#allocation10] sm:$0x8] %vm1954, %v1949
    %1956 = vst.msk [vmem:[#allocation10 + $0x8] sm:$0x8] %vm1954, %v1951
    %v1957 = vrot.slane %v1944, 3
    %v1958 = vrot.slane %v1945, 2
    %v1959 = vsel %vm1513, %v1958, %v1957
    %1960 = vrot.lane.b32.xlu0 %v1959, 32
    %v1961 = vpop.permute.xlu0 %1960
    %v1962 = vsel %vm91, %v1961, 0
    %1964 = vmatprep.subr.mxu0 0.0
    %1965 = vmatpush1.msra.mxu0 %v86
    %1966 = vmatprep.subr.mxu0 0.0
    %1967 = vmatpush1.msra.mxu0 %v87
    %1968 = vmatprep.subr.mxu0 0.0
    %1969 = vmatpush1.msra.mxu0 %v88
    %1970 = vmatprep.subr.mxu0 0.0
    %1971 = vmatpush1.msra.mxu0 %v89
    %1972 = vmatprep.subr.mxu0 0.0
    %1973 = vmatpush1.msra.mxu0 0.0
    %1974 = vmatprep.subr.mxu0 0.0
    %1975 = vmatpush1.msra.mxu0 0.0
    %1976 = vmatprep.subr.mxu0 0.0
    %1977 = vmatpush1.msra.mxu0 0.0
    %1978 = vmatprep.subr.mxu0 0.0
    %1979 = vmatpush1.msra.mxu0 0.0
    %1980 = vmatprep.subr.mxu0 0.0
    %1981 = vmatpush1.msra.mxu0 0.0
    %1982 = vmatprep.subr.mxu0 0.0
    %1983 = vmatpush1.msra.mxu0 0.0
    %1984 = vmatprep.subr.mxu0 0.0
    %1985 = vmatpush1.msra.mxu0 0.0
    %1986 = vmatprep.subr.mxu0 0.0
    %1987 = vmatpush1.msra.mxu0 0.0
    %1988 = vmatprep.subr.mxu0 0.0
    %1989 = vmatpush1.msra.mxu0 0.0
    %1990 = vmatprep.subr.mxu0 0.0
    %1991 = vmatpush1.msra.mxu0 0.0
    %1992 = vmatprep.subr.mxu0 0.0
    %1993 = vmatpush1.msra.mxu0 0.0
    %1994 = vmatprep.subr.mxu0 0.0
    %1995 = vmatpush1.msra.mxu0 0.0
    %1996 = vmatprep.subr.mxu0 0.0
    %1997 = vmatpush1.msra.mxu0 0.0
    %1998 = vmatprep.subr.mxu0 0.0
    %1999 = vmatpush1.msra.mxu0 0.0
    %2000 = vmatprep.subr.mxu0 0.0
    %2001 = vmatpush1.msra.mxu0 0.0
    %2002 = vmatprep.subr.mxu0 0.0
    %2003 = vmatpush1.msra.mxu0 0.0
    %2004 = vmatprep.subr.mxu0 0.0
    %2005 = vmatpush1.msra.mxu0 0.0
    %2006 = vmatprep.subr.mxu0 0.0
    %2007 = vmatpush1.msra.mxu0 0.0
    %2008 = vmatprep.subr.mxu0 0.0
    %2009 = vmatpush1.msra.mxu0 0.0
    %2010 = vmatprep.subr.mxu0 0.0
    %2011 = vmatpush1.msra.mxu0 0.0
    %2012 = vmatprep.subr.mxu0 0.0
    %2013 = vmatpush1.msra.mxu0 0.0
    %2014 = vmatprep.subr.mxu0 0.0
    %2015 = vmatpush1.msra.mxu0 0.0
    %2016 = vmatprep.subr.mxu0 0.0
    %2017 = vmatpush1.msra.mxu0 0.0
    %2018 = vmatprep.subr.mxu0 0.0
    %2019 = vmatpush1.msra.mxu0 0.0
    %2020 = vmatprep.subr.mxu0 0.0
    %2021 = vmatpush1.msra.mxu0 0.0
    %2022 = vmatprep.subr.mxu0 0.0
    %2023 = vmatpush1.msra.mxu0 0.0
    %2024 = vmatprep.subr.mxu0 0.0
    %2025 = vmatpush1.msra.mxu0 0.0
    %2026 = vmatprep.subr.mxu0 0.0
    %2027 = vmatpush1.msra.mxu0 0.0
    %2028 = vmatprep.mubr.f32.mxu0 0.0
    %2029 = vmatmul.mubr.f32.gmra.mrb[0].mxu0 %v1962
    %v2030 = vpop.f32.mrb[0].mxu0
    %v2031 = vadd.f32 0.0, %v2030
    %v2032 = vpop.f32.mrb[0].mxu0
    %2033 = vdwg.mxu0
    %v2035 = vrot.slane %v2031, 4
    %v2036 = vrot.slane %v2031, 5
    %v2039 = vadd.f32 %v1368, %v2035
    %v2040 = vadd.f32 %v1369, %v2036
    %v2041 = vxor.u32 %v2039, 2147483648
    %v2042 = vxor.u32 %v2040, 2147483648
    %v2043 = vmul.f32 %v2041, 1.442695
    %v2044 = vpow.pop %v2043
    %v2045 = vmul.f32 %v2042, 1.442695
    %v2046 = vpow.pop %v2045
    %v2047 = vadd.f32 %v2044, 1.0
    %v2048 = vadd.f32 %v2046, 1.0
    %v2049 = vrcp.pop %v2047
    %v2050 = vmul.f32 1.0, %v2049
    %v2051 = vrcp.pop %v2048
    %v2052 = vmul.f32 1.0, %v2051
    %v2053 = vtanh.pop %v2039
    %v2054 = vtanh.pop %v2040
    %v2057 = vrot.slane %v1932, 7
    %v2058 = vrot.slane %v1933, 7
    %v2061 = vmul.f32 %v2050, %v2057
    %v2062 = vmul.f32 %v2052, %v2058
    %2065 = vrot.lane.b32.xlu0 %v2053, 64
    %v2066 = vpop.permute.xlu0 %2065
    %2067 = vrot.lane.b32.xlu0 %v2054, 64
    %v2068 = vpop.permute.xlu0 %2067
    %v2071 = vmul.f32 %v2050, %v2066
    %v2072 = vmul.f32 %v2052, %v2068
    %2075 = vrot.lane.b32.xlu0 %v2071, 32
    %v2076 = vpop.permute.xlu0 %2075
    %2077 = vrot.lane.b32.xlu0 %v2072, 32
    %v2078 = vpop.permute.xlu0 %2077
    %v2081 = vadd.f32 %v2061, %v2076
    %v2082 = vadd.f32 %v2062, %v2078
    %v2083 = vtanh.pop %v2081
    %v2084 = vtanh.pop %v2082
    %2087 = vrot.lane.b32.xlu0 %v2083, 64
    %v2088 = vpop.permute.xlu0 %2087
    %2089 = vrot.lane.b32.xlu0 %v2084, 64
    %v2090 = vpop.permute.xlu0 %2089
    %v2093 = vmul.f32 %v2050, %v2088
    %v2094 = vmul.f32 %v2052, %v2090
    %2097 = vrot.lane.b32.xlu0 %v2093, 32
    %v2098 = vpop.permute.xlu0 %2097
    %2099 = vrot.lane.b32.xlu0 %v2094, 32
    %v2100 = vpop.permute.xlu0 %2099
    %vm2103 = vcmask 258052
    %2104 = vst.msk [vmem:[#allocation10] sm:$0x10] %vm2103, %v2098
    %2105 = vst.msk [vmem:[#allocation10 + $0x8] sm:$0x10] %vm2103, %v2100
    %v2106 = vrot.slane %v2093, 4
    %v2107 = vrot.slane %v2094, 3
    %v2108 = vsel %vm1513, %v2107, %v2106
    %2109 = vrot.lane.b32.xlu0 %v2108, 32
    %v2110 = vpop.permute.xlu0 %2109
    %v2111 = vsel %vm91, %v2110, 0
    %2113 = vmatprep.subr.mxu0 0.0
    %2114 = vmatpush1.msra.mxu0 %v86
    %2115 = vmatprep.subr.mxu0 0.0
    %2116 = vmatpush1.msra.mxu0 %v87
    %2117 = vmatprep.subr.mxu0 0.0
    %2118 = vmatpush1.msra.mxu0 %v88
    %2119 = vmatprep.subr.mxu0 0.0
    %2120 = vmatpush1.msra.mxu0 %v89
    %2121 = vmatprep.subr.mxu0 0.0
    %2122 = vmatpush1.msra.mxu0 0.0
    %2123 = vmatprep.subr.mxu0 0.0
    %2124 = vmatpush1.msra.mxu0 0.0
    %2125 = vmatprep.subr.mxu0 0.0
    %2126 = vmatpush1.msra.mxu0 0.0
    %2127 = vmatprep.subr.mxu0 0.0
    %2128 = vmatpush1.msra.mxu0 0.0
    %2129 = vmatprep.subr.mxu0 0.0
    %2130 = vmatpush1.msra.mxu0 0.0
    %2131 = vmatprep.subr.mxu0 0.0
    %2132 = vmatpush1.msra.mxu0 0.0
    %2133 = vmatprep.subr.mxu0 0.0
    %2134 = vmatpush1.msra.mxu0 0.0
    %2135 = vmatprep.subr.mxu0 0.0
    %2136 = vmatpush1.msra.mxu0 0.0
    %2137 = vmatprep.subr.mxu0 0.0
    %2138 = vmatpush1.msra.mxu0 0.0
    %2139 = vmatprep.subr.mxu0 0.0
    %2140 = vmatpush1.msra.mxu0 0.0
    %2141 = vmatprep.subr.mxu0 0.0
    %2142 = vmatpush1.msra.mxu0 0.0
    %2143 = vmatprep.subr.mxu0 0.0
    %2144 = vmatpush1.msra.mxu0 0.0
    %2145 = vmatprep.subr.mxu0 0.0
    %2146 = vmatpush1.msra.mxu0 0.0
    %2147 = vmatprep.subr.mxu0 0.0
    %2148 = vmatpush1.msra.mxu0 0.0
    %2149 = vmatprep.subr.mxu0 0.0
    %2150 = vmatpush1.msra.mxu0 0.0
    %2151 = vmatprep.subr.mxu0 0.0
    %2152 = vmatpush1.msra.mxu0 0.0
    %2153 = vmatprep.subr.mxu0 0.0
    %2154 = vmatpush1.msra.mxu0 0.0
    %2155 = vmatprep.subr.mxu0 0.0
    %2156 = vmatpush1.msra.mxu0 0.0
    %2157 = vmatprep.subr.mxu0 0.0
    %2158 = vmatpush1.msra.mxu0 0.0
    %2159 = vmatprep.subr.mxu0 0.0
    %2160 = vmatpush1.msra.mxu0 0.0
    %2161 = vmatprep.subr.mxu0 0.0
    %2162 = vmatpush1.msra.mxu0 0.0
    %2163 = vmatprep.subr.mxu0 0.0
    %2164 = vmatpush1.msra.mxu0 0.0
    %2165 = vmatprep.subr.mxu0 0.0
    %2166 = vmatpush1.msra.mxu0 0.0
    %2167 = vmatprep.subr.mxu0 0.0
    %2168 = vmatpush1.msra.mxu0 0.0
    %2169 = vmatprep.subr.mxu0 0.0
    %2170 = vmatpush1.msra.mxu0 0.0
    %2171 = vmatprep.subr.mxu0 0.0
    %2172 = vmatpush1.msra.mxu0 0.0
    %2173 = vmatprep.subr.mxu0 0.0
    %2174 = vmatpush1.msra.mxu0 0.0
    %2175 = vmatprep.subr.mxu0 0.0
    %2176 = vmatpush1.msra.mxu0 0.0
    %2177 = vmatprep.mubr.f32.mxu0 0.0
    %2178 = vmatmul.mubr.f32.gmra.mrb[0].mxu0 %v2111
    %v2179 = vpop.f32.mrb[0].mxu0
    %v2180 = vadd.f32 0.0, %v2179
    %v2181 = vpop.f32.mrb[0].mxu0
    %2182 = vdwg.mxu0
    %v2184 = vrot.slane %v2180, 3
    %v2185 = vrot.slane %v2180, 4
    %v2188 = vadd.f32 %v1368, %v2184
    %v2189 = vadd.f32 %v1369, %v2185
    %v2190 = vxor.u32 %v2188, 2147483648
    %v2191 = vxor.u32 %v2189, 2147483648
    %v2192 = vmul.f32 %v2190, 1.442695
    %v2193 = vpow.pop %v2192
    %v2194 = vmul.f32 %v2191, 1.442695
    %v2195 = vpow.pop %v2194
    %v2196 = vadd.f32 %v2193, 1.0
    %v2197 = vadd.f32 %v2195, 1.0
    %v2198 = vrcp.pop %v2196
    %v2199 = vmul.f32 1.0, %v2198
    %v2200 = vrcp.pop %v2197
    %v2201 = vmul.f32 1.0, %v2200
    %v2202 = vtanh.pop %v2188
    %v2203 = vtanh.pop %v2189
    %v2206 = vrot.slane %v2081, 7
    %v2207 = vrot.slane %v2082, 7
    %v2210 = vmul.f32 %v2199, %v2206
    %v2211 = vmul.f32 %v2201, %v2207
    %2214 = vrot.lane.b32.xlu0 %v2202, 64
    %v2215 = vpop.permute.xlu0 %2214
    %2216 = vrot.lane.b32.xlu0 %v2203, 64
    %v2217 = vpop.permute.xlu0 %2216
    %v2220 = vmul.f32 %v2199, %v2215
    %v2221 = vmul.f32 %v2201, %v2217
    %2224 = vrot.lane.b32.xlu0 %v2220, 32
    %v2225 = vpop.permute.xlu0 %2224
    %2226 = vrot.lane.b32.xlu0 %v2221, 32
    %v2227 = vpop.permute.xlu0 %2226
    %v2230 = vadd.f32 %v2210, %v2225
    %v2231 = vadd.f32 %v2211, %v2227
    %v2232 = vtanh.pop %v2230
    %v2233 = vtanh.pop %v2231
    %2236 = vrot.lane.b32.xlu0 %v2232, 64
    %v2237 = vpop.permute.xlu0 %2236
    %2238 = vrot.lane.b32.xlu0 %v2233, 64
    %v2239 = vpop.permute.xlu0 %2238
    %v2242 = vmul.f32 %v2199, %v2237
    %v2243 = vmul.f32 %v2201, %v2239
    %2246 = vrot.lane.b32.xlu0 %v2242, 32
    %v2247 = vpop.permute.xlu0 %2246
    %2248 = vrot.lane.b32.xlu0 %v2243, 32
    %v2249 = vpop.permute.xlu0 %2248
    %vm2252 = vcmask 259077
    %2253 = vst.msk [vmem:[#allocation10] sm:$0x20] %vm2252, %v2247
    %2254 = vst.msk [vmem:[#allocation10 + $0x8] sm:$0x20] %vm2252, %v2249
    %v2255 = vrot.slane %v2242, 5
    %v2256 = vrot.slane %v2243, 4
    %v2257 = vsel %vm1513, %v2256, %v2255
    %2258 = vrot.lane.b32.xlu0 %v2257, 32
    %v2259 = vpop.permute.xlu0 %2258
    %v2260 = vsel %vm91, %v2259, 0
    %2262 = vmatprep.subr.mxu0 0.0
    %2263 = vmatpush1.msra.mxu0 %v86
    %2264 = vmatprep.subr.mxu0 0.0
    %2265 = vmatpush1.msra.mxu0 %v87
    %2266 = vmatprep.subr.mxu0 0.0
    %2267 = vmatpush1.msra.mxu0 %v88
    %2268 = vmatprep.subr.mxu0 0.0
    %2269 = vmatpush1.msra.mxu0 %v89
    %2270 = vmatprep.subr.mxu0 0.0
    %2271 = vmatpush1.msra.mxu0 0.0
    %2272 = vmatprep.subr.mxu0 0.0
    %2273 = vmatpush1.msra.mxu0 0.0
    %2274 = vmatprep.subr.mxu0 0.0
    %2275 = vmatpush1.msra.mxu0 0.0
    %2276 = vmatprep.subr.mxu0 0.0
    %2277 = vmatpush1.msra.mxu0 0.0
    %2278 = vmatprep.subr.mxu0 0.0
    %2279 = vmatpush1.msra.mxu0 0.0
    %2280 = vmatprep.subr.mxu0 0.0
    %2281 = vmatpush1.msra.mxu0 0.0
    %2282 = vmatprep.subr.mxu0 0.0
    %2283 = vmatpush1.msra.mxu0 0.0
    %2284 = vmatprep.subr.mxu0 0.0
    %2285 = vmatpush1.msra.mxu0 0.0
    %2286 = vmatprep.subr.mxu0 0.0
    %2287 = vmatpush1.msra.mxu0 0.0
    %2288 = vmatprep.subr.mxu0 0.0
    %2289 = vmatpush1.msra.mxu0 0.0
    %2290 = vmatprep.subr.mxu0 0.0
    %2291 = vmatpush1.msra.mxu0 0.0
    %2292 = vmatprep.subr.mxu0 0.0
    %2293 = vmatpush1.msra.mxu0 0.0
    %2294 = vmatprep.subr.mxu0 0.0
    %2295 = vmatpush1.msra.mxu0 0.0
    %2296 = vmatprep.subr.mxu0 0.0
    %2297 = vmatpush1.msra.mxu0 0.0
    %2298 = vmatprep.subr.mxu0 0.0
    %2299 = vmatpush1.msra.mxu0 0.0
    %2300 = vmatprep.subr.mxu0 0.0
    %2301 = vmatpush1.msra.mxu0 0.0
    %2302 = vmatprep.subr.mxu0 0.0
    %2303 = vmatpush1.msra.mxu0 0.0
    %2304 = vmatprep.subr.mxu0 0.0
    %2305 = vmatpush1.msra.mxu0 0.0
    %2306 = vmatprep.subr.mxu0 0.0
    %2307 = vmatpush1.msra.mxu0 0.0
    %2308 = vmatprep.subr.mxu0 0.0
    %2309 = vmatpush1.msra.mxu0 0.0
    %2310 = vmatprep.subr.mxu0 0.0
    %2311 = vmatpush1.msra.mxu0 0.0
    %2312 = vmatprep.subr.mxu0 0.0
    %2313 = vmatpush1.msra.mxu0 0.0
    %2314 = vmatprep.subr.mxu0 0.0
    %2315 = vmatpush1.msra.mxu0 0.0
    %2316 = vmatprep.subr.mxu0 0.0
    %2317 = vmatpush1.msra.mxu0 0.0
    %2318 = vmatprep.subr.mxu0 0.0
    %2319 = vmatpush1.msra.mxu0 0.0
    %2320 = vmatprep.subr.mxu0 0.0
    %2321 = vmatpush1.msra.mxu0 0.0
    %2322 = vmatprep.subr.mxu0 0.0
    %2323 = vmatpush1.msra.mxu0 0.0
    %2324 = vmatprep.subr.mxu0 0.0
    %2325 = vmatpush1.msra.mxu0 0.0
    %2326 = vmatprep.mubr.f32.mxu0 0.0
    %2327 = vmatmul.mubr.f32.gmra.mrb[0].mxu0 %v2260
    %v2328 = vpop.f32.mrb[0].mxu0
    %v2329 = vadd.f32 0.0, %v2328
    %v2330 = vpop.f32.mrb[0].mxu0
    %2331 = vdwg.mxu0
    %v2333 = vrot.slane %v2329, 2
    %v2334 = vrot.slane %v2329, 3
    %v2337 = vadd.f32 %v1368, %v2333
    %v2338 = vadd.f32 %v1369, %v2334
    %v2339 = vxor.u32 %v2337, 2147483648
    %v2340 = vxor.u32 %v2338, 2147483648
    %v2341 = vmul.f32 %v2339, 1.442695
    %v2342 = vpow.pop %v2341
    %v2343 = vmul.f32 %v2340, 1.442695
    %v2344 = vpow.pop %v2343
    %v2345 = vadd.f32 %v2342, 1.0
    %v2346 = vadd.f32 %v2344, 1.0
    %v2347 = vrcp.pop %v2345
    %v2348 = vmul.f32 1.0, %v2347
    %v2349 = vrcp.pop %v2346
    %v2350 = vmul.f32 1.0, %v2349
    %v2351 = vtanh.pop %v2337
    %v2352 = vtanh.pop %v2338
    %v2355 = vrot.slane %v2230, 7
    %v2356 = vrot.slane %v2231, 7
    %v2359 = vmul.f32 %v2348, %v2355
    %v2360 = vmul.f32 %v2350, %v2356
    %2363 = vrot.lane.b32.xlu0 %v2351, 64
    %v2364 = vpop.permute.xlu0 %2363
    %2365 = vrot.lane.b32.xlu0 %v2352, 64
    %v2366 = vpop.permute.xlu0 %2365
    %v2369 = vmul.f32 %v2348, %v2364
    %v2370 = vmul.f32 %v2350, %v2366
    %2373 = vrot.lane.b32.xlu0 %v2369, 32
    %v2374 = vpop.permute.xlu0 %2373
    %2375 = vrot.lane.b32.xlu0 %v2370, 32
    %v2376 = vpop.permute.xlu0 %2375
    %v2379 = vadd.f32 %v2359, %v2374
    %v2380 = vadd.f32 %v2360, %v2376
    %v2381 = vtanh.pop %v2379
    %v2382 = vtanh.pop %v2380
    %2385 = vrot.lane.b32.xlu0 %v2381, 64
    %v2386 = vpop.permute.xlu0 %2385
    %2387 = vrot.lane.b32.xlu0 %v2382, 64
    %v2388 = vpop.permute.xlu0 %2387
    %v2391 = vmul.f32 %v2348, %v2386
    %v2392 = vmul.f32 %v2350, %v2388
    %2395 = vrot.lane.b32.xlu0 %v2391, 32
    %v2396 = vpop.permute.xlu0 %2395
    %2397 = vrot.lane.b32.xlu0 %v2392, 32
    %v2398 = vpop.permute.xlu0 %2397
    %vm2401 = vcmask 260102
    %2402 = vst.msk [vmem:[#allocation10] sm:$0x40] %vm2401, %v2396
    %2403 = vst.msk [vmem:[#allocation10 + $0x8] sm:$0x40] %vm2401, %v2398
    %v2404 = vrot.slane %v2391, 6
    %v2405 = vrot.slane %v2392, 5
    %v2406 = vsel %vm1513, %v2405, %v2404
    %2407 = vrot.lane.b32.xlu0 %v2406, 32
    %v2408 = vpop.permute.xlu0 %2407
    %v2409 = vsel %vm91, %v2408, 0
    %2411 = vmatprep.subr.mxu0 0.0
    %2412 = vmatpush1.msra.mxu0 %v86
    %2413 = vmatprep.subr.mxu0 0.0
    %2414 = vmatpush1.msra.mxu0 %v87
    %2415 = vmatprep.subr.mxu0 0.0
    %2416 = vmatpush1.msra.mxu0 %v88
    %2417 = vmatprep.subr.mxu0 0.0
    %2418 = vmatpush1.msra.mxu0 %v89
    %2419 = vmatprep.subr.mxu0 0.0
    %2420 = vmatpush1.msra.mxu0 0.0
    %2421 = vmatprep.subr.mxu0 0.0
    %2422 = vmatpush1.msra.mxu0 0.0
    %2423 = vmatprep.subr.mxu0 0.0
    %2424 = vmatpush1.msra.mxu0 0.0
    %2425 = vmatprep.subr.mxu0 0.0
    %2426 = vmatpush1.msra.mxu0 0.0
    %2427 = vmatprep.subr.mxu0 0.0
    %2428 = vmatpush1.msra.mxu0 0.0
    %2429 = vmatprep.subr.mxu0 0.0
    %2430 = vmatpush1.msra.mxu0 0.0
    %2431 = vmatprep.subr.mxu0 0.0
    %2432 = vmatpush1.msra.mxu0 0.0
    %2433 = vmatprep.subr.mxu0 0.0
    %2434 = vmatpush1.msra.mxu0 0.0
    %2435 = vmatprep.subr.mxu0 0.0
    %2436 = vmatpush1.msra.mxu0 0.0
    %2437 = vmatprep.subr.mxu0 0.0
    %2438 = vmatpush1.msra.mxu0 0.0
    %2439 = vmatprep.subr.mxu0 0.0
    %2440 = vmatpush1.msra.mxu0 0.0
    %2441 = vmatprep.subr.mxu0 0.0
    %2442 = vmatpush1.msra.mxu0 0.0
    %2443 = vmatprep.subr.mxu0 0.0
    %2444 = vmatpush1.msra.mxu0 0.0
    %2445 = vmatprep.subr.mxu0 0.0
    %2446 = vmatpush1.msra.mxu0 0.0
    %2447 = vmatprep.subr.mxu0 0.0
    %2448 = vmatpush1.msra.mxu0 0.0
    %2449 = vmatprep.subr.mxu0 0.0
    %2450 = vmatpush1.msra.mxu0 0.0
    %2451 = vmatprep.subr.mxu0 0.0
    %2452 = vmatpush1.msra.mxu0 0.0
    %2453 = vmatprep.subr.mxu0 0.0
    %2454 = vmatpush1.msra.mxu0 0.0
    %2455 = vmatprep.subr.mxu0 0.0
    %2456 = vmatpush1.msra.mxu0 0.0
    %2457 = vmatprep.subr.mxu0 0.0
    %2458 = vmatpush1.msra.mxu0 0.0
    %2459 = vmatprep.subr.mxu0 0.0
    %2460 = vmatpush1.msra.mxu0 0.0
    %2461 = vmatprep.subr.mxu0 0.0
    %2462 = vmatpush1.msra.mxu0 0.0
    %2463 = vmatprep.subr.mxu0 0.0
    %2464 = vmatpush1.msra.mxu0 0.0
    %2465 = vmatprep.subr.mxu0 0.0
    %2466 = vmatpush1.msra.mxu0 0.0
    %2467 = vmatprep.subr.mxu0 0.0
    %2468 = vmatpush1.msra.mxu0 0.0
    %2469 = vmatprep.subr.mxu0 0.0
    %2470 = vmatpush1.msra.mxu0 0.0
    %2471 = vmatprep.subr.mxu0 0.0
    %2472 = vmatpush1.msra.mxu0 0.0
    %2473 = vmatprep.subr.mxu0 0.0
    %2474 = vmatpush1.msra.mxu0 0.0
    %2475 = vmatprep.mubr.f32.mxu0 0.0
    %2476 = vmatmul.mubr.f32.gmra.mrb[0].mxu0 %v2409
    %v2477 = vpop.f32.mrb[0].mxu0
    %v2478 = vadd.f32 0.0, %v2477
    %v2479 = vpop.f32.mrb[0].mxu0
    %2480 = vdwg.mxu0
    %v2482 = vrot.slane %v2478, 1
    %v2483 = vrot.slane %v2478, 2
    %v2486 = vadd.f32 %v1368, %v2482
    %v2487 = vadd.f32 %v1369, %v2483
    %v2488 = vxor.u32 %v2486, 2147483648
    %v2489 = vxor.u32 %v2487, 2147483648
    %v2490 = vmul.f32 %v2488, 1.442695
    %v2491 = vpow.pop %v2490
    %v2492 = vmul.f32 %v2489, 1.442695
    %v2493 = vpow.pop %v2492
    %v2494 = vadd.f32 %v2491, 1.0
    %v2495 = vadd.f32 %v2493, 1.0
    %v2496 = vrcp.pop %v2494
    %v2497 = vmul.f32 1.0, %v2496
    %v2498 = vrcp.pop %v2495
    %v2499 = vmul.f32 1.0, %v2498
    %v2500 = vtanh.pop %v2486
    %v2501 = vtanh.pop %v2487
    %v2504 = vrot.slane %v2379, 7
    %v2505 = vrot.slane %v2380, 7
    %v2508 = vmul.f32 %v2497, %v2504
    %v2509 = vmul.f32 %v2499, %v2505
    %2512 = vrot.lane.b32.xlu0 %v2500, 64
    %v2513 = vpop.permute.xlu0 %2512
    %2514 = vrot.lane.b32.xlu0 %v2501, 64
    %v2515 = vpop.permute.xlu0 %2514
    %v2518 = vmul.f32 %v2497, %v2513
    %v2519 = vmul.f32 %v2499, %v2515
    %2522 = vrot.lane.b32.xlu0 %v2518, 32
    %v2523 = vpop.permute.xlu0 %2522
    %2524 = vrot.lane.b32.xlu0 %v2519, 32
    %v2525 = vpop.permute.xlu0 %2524
    %v2528 = vadd.f32 %v2508, %v2523
    %v2529 = vadd.f32 %v2509, %v2525
    %v2530 = vtanh.pop %v2528
    %v2531 = vtanh.pop %v2529
    %2534 = vrot.lane.b32.xlu0 %v2530, 64
    %v2535 = vpop.permute.xlu0 %2534
    %2536 = vrot.lane.b32.xlu0 %v2531, 64
    %v2537 = vpop.permute.xlu0 %2536
    %v2540 = vmul.f32 %v2497, %v2535
    %v2541 = vmul.f32 %v2499, %v2537
    %2544 = vrot.lane.b32.xlu0 %v2540, 32
    %v2545 = vpop.permute.xlu0 %2544
    %2546 = vrot.lane.b32.xlu0 %v2541, 32
    %v2547 = vpop.permute.xlu0 %2546
    %vm2550 = vcmask 261127
    %2551 = vst.msk [vmem:[#allocation10] sm:$0x80] %vm2550, %v2545
    %2552 = vst.msk [vmem:[#allocation10 + $0x8] sm:$0x80] %vm2550, %v2547
    %v2553 = vld [vmem:[#allocation10] sm:$0xff]
    %v2554 = vld [vmem:[#allocation10 + $0x8] sm:$0xff]
    %v2556 = vsel %vm91, %v2553, 0
    %v2559 = vsel %vm91, %v2554, 0
    %2561 = vmatprep.subr.mxu0 0.0
    %2562 = vmatpush1.msra.mxu0 %v78
    %2563 = vmatprep.subr.mxu0 0.0
    %2564 = vmatpush1.msra.mxu0 %v79
    %2565 = vmatprep.subr.mxu0 0.0
    %2566 = vmatpush1.msra.mxu0 %v80
    %2567 = vmatprep.subr.mxu0 0.0
    %2568 = vmatpush1.msra.mxu0 %v81
    %2569 = vmatprep.subr.mxu0 0.0
    %2570 = vmatpush1.msra.mxu0 0.0
    %2571 = vmatprep.subr.mxu0 0.0
    %2572 = vmatpush1.msra.mxu0 0.0
    %2573 = vmatprep.subr.mxu0 0.0
    %2574 = vmatpush1.msra.mxu0 0.0
    %2575 = vmatprep.subr.mxu0 0.0
    %2576 = vmatpush1.msra.mxu0 0.0
    %2577 = vmatprep.subr.mxu0 0.0
    %2578 = vmatpush1.msra.mxu0 0.0
    %2579 = vmatprep.subr.mxu0 0.0
    %2580 = vmatpush1.msra.mxu0 0.0
    %2581 = vmatprep.subr.mxu0 0.0
    %2582 = vmatpush1.msra.mxu0 0.0
    %2583 = vmatprep.subr.mxu0 0.0
    %2584 = vmatpush1.msra.mxu0 0.0
    %2585 = vmatprep.subr.mxu0 0.0
    %2586 = vmatpush1.msra.mxu0 0.0
    %2587 = vmatprep.subr.mxu0 0.0
    %2588 = vmatpush1.msra.mxu0 0.0
    %2589 = vmatprep.subr.mxu0 0.0
    %2590 = vmatpush1.msra.mxu0 0.0
    %2591 = vmatprep.subr.mxu0 0.0
    %2592 = vmatpush1.msra.mxu0 0.0
    %2593 = vmatprep.subr.mxu0 0.0
    %2594 = vmatpush1.msra.mxu0 0.0
    %2595 = vmatprep.subr.mxu0 0.0
    %2596 = vmatpush1.msra.mxu0 0.0
    %2597 = vmatprep.subr.mxu0 0.0
    %2598 = vmatpush1.msra.mxu0 0.0
    %2599 = vmatprep.subr.mxu0 0.0
    %2600 = vmatpush1.msra.mxu0 0.0
    %2601 = vmatprep.subr.mxu0 0.0
    %2602 = vmatpush1.msra.mxu0 0.0
    %2603 = vmatprep.subr.mxu0 0.0
    %2604 = vmatpush1.msra.mxu0 0.0
    %2605 = vmatprep.subr.mxu0 0.0
    %2606 = vmatpush1.msra.mxu0 0.0
    %2607 = vmatprep.subr.mxu0 0.0
    %2608 = vmatpush1.msra.mxu0 0.0
    %2609 = vmatprep.subr.mxu0 0.0
    %2610 = vmatpush1.msra.mxu0 0.0
    %2611 = vmatprep.subr.mxu0 0.0
    %2612 = vmatpush1.msra.mxu0 0.0
    %2613 = vmatprep.subr.mxu0 0.0
    %2614 = vmatpush1.msra.mxu0 0.0
    %2615 = vmatprep.subr.mxu0 0.0
    %2616 = vmatpush1.msra.mxu0 0.0
    %2617 = vmatprep.subr.mxu0 0.0
    %2618 = vmatpush1.msra.mxu0 0.0
    %2619 = vmatprep.subr.mxu0 0.0
    %2620 = vmatpush1.msra.mxu0 0.0
    %2621 = vmatprep.subr.mxu0 0.0
    %2622 = vmatpush1.msra.mxu0 0.0
    %2623 = vmatprep.subr.mxu0 0.0
    %2624 = vmatpush1.msra.mxu0 0.0
    %2625 = vmatprep.mubr.f32.mxu0 0.0
    %2626 = vmatmul.mubr.f32.gmra.mrb[0].mxu0 %v2556
    %v2627 = vpop.f32.mrb[0].mxu0
    %v2628 = vadd.f32 0.0, %v2627
    %v2629 = vpop.f32.mrb[0].mxu0
    %2630 = vmatprep.mubr.f32.mxu0 0.0
    %2631 = vmatmul.mubr.f32.gmra.mrb[0].mxu0 %v2559
    %v2632 = vpop.f32.mrb[0].mxu0
    %v2633 = vadd.f32 0.0, %v2632
    %v2634 = vpop.f32.mrb[0].mxu0
    %2635 = vdwg.mxu0
    %v2636 = vadd.f32 %v2628, %v179
    %v2637 = vadd.f32 %v2633, %v180
    %v2638 = vrot.slane %v2540, 7
    %v2639 = vrot.slane %v2541, 6
    %v2640 = vsel %vm1513, %v2639, %v2638
    %2641 = vrot.lane.b32.xlu0 %v2640, 32
    %v2642 = vpop.permute.xlu0 %2641
    %v2643 = vsel %vm91, %v2642, 0
    %2645 = vmatprep.subr.mxu0 0.0
    %2646 = vmatpush1.msra.mxu0 %v86
    %2647 = vmatprep.subr.mxu0 0.0
    %2648 = vmatpush1.msra.mxu0 %v87
    %2649 = vmatprep.subr.mxu0 0.0
    %2650 = vmatpush1.msra.mxu0 %v88
    %2651 = vmatprep.subr.mxu0 0.0
    %2652 = vmatpush1.msra.mxu0 %v89
    %2653 = vmatprep.subr.mxu0 0.0
    %2654 = vmatpush1.msra.mxu0 0.0
    %2655 = vmatprep.subr.mxu0 0.0
    %2656 = vmatpush1.msra.mxu0 0.0
    %2657 = vmatprep.subr.mxu0 0.0
    %2658 = vmatpush1.msra.mxu0 0.0
    %2659 = vmatprep.subr.mxu0 0.0
    %2660 = vmatpush1.msra.mxu0 0.0
    %2661 = vmatprep.subr.mxu0 0.0
    %2662 = vmatpush1.msra.mxu0 0.0
    %2663 = vmatprep.subr.mxu0 0.0
    %2664 = vmatpush1.msra.mxu0 0.0
    %2665 = vmatprep.subr.mxu0 0.0
    %2666 = vmatpush1.msra.mxu0 0.0
    %2667 = vmatprep.subr.mxu0 0.0
    %2668 = vmatpush1.msra.mxu0 0.0
    %2669 = vmatprep.subr.mxu0 0.0
    %2670 = vmatpush1.msra.mxu0 0.0
    %2671 = vmatprep.subr.mxu0 0.0
    %2672 = vmatpush1.msra.mxu0 0.0
    %2673 = vmatprep.subr.mxu0 0.0
    %2674 = vmatpush1.msra.mxu0 0.0
    %2675 = vmatprep.subr.mxu0 0.0
    %2676 = vmatpush1.msra.mxu0 0.0
    %2677 = vmatprep.subr.mxu0 0.0
    %2678 = vmatpush1.msra.mxu0 0.0
    %2679 = vmatprep.subr.mxu0 0.0
    %2680 = vmatpush1.msra.mxu0 0.0
    %2681 = vmatprep.subr.mxu0 0.0
    %2682 = vmatpush1.msra.mxu0 0.0
    %2683 = vmatprep.subr.mxu0 0.0
    %2684 = vmatpush1.msra.mxu0 0.0
    %2685 = vmatprep.subr.mxu0 0.0
    %2686 = vmatpush1.msra.mxu0 0.0
    %2687 = vmatprep.subr.mxu0 0.0
    %2688 = vmatpush1.msra.mxu0 0.0
    %2689 = vmatprep.subr.mxu0 0.0
    %2690 = vmatpush1.msra.mxu0 0.0
    %2691 = vmatprep.subr.mxu0 0.0
    %2692 = vmatpush1.msra.mxu0 0.0
    %2693 = vmatprep.subr.mxu0 0.0
    %2694 = vmatpush1.msra.mxu0 0.0
    %2695 = vmatprep.subr.mxu0 0.0
    %2696 = vmatpush1.msra.mxu0 0.0
    %2697 = vmatprep.subr.mxu0 0.0
    %2698 = vmatpush1.msra.mxu0 0.0
    %2699 = vmatprep.subr.mxu0 0.0
    %2700 = vmatpush1.msra.mxu0 0.0
    %2701 = vmatprep.subr.mxu0 0.0
    %2702 = vmatpush1.msra.mxu0 0.0
    %2703 = vmatprep.subr.mxu0 0.0
    %2704 = vmatpush1.msra.mxu0 0.0
    %2705 = vmatprep.subr.mxu0 0.0
    %2706 = vmatpush1.msra.mxu0 0.0
    %2707 = vmatprep.subr.mxu0 0.0
    %2708 = vmatpush1.msra.mxu0 0.0
    %2709 = vmatprep.mubr.f32.mxu0 0.0
    %2710 = vmatmul.mubr.f32.gmra.mrb[0].mxu0 %v2643
    %v2711 = vpop.f32.mrb[0].mxu0
    %v2712 = vadd.f32 0.0, %v2711
    %v2713 = vpop.f32.mrb[0].mxu0
    %2714 = vdwg.mxu0
    %v2716 = vrot.slane %v2712, 1
    %v2719 = vadd.f32 %v2636, %v2712
    %v2720 = vadd.f32 %v2637, %v2716
    %v2721 = vxor.u32 %v2719, 2147483648
    %v2722 = vxor.u32 %v2720, 2147483648
    %v2723 = vmul.f32 %v2721, 1.442695
    %v2724 = vpow.pop %v2723
    %v2725 = vmul.f32 %v2722, 1.442695
    %v2726 = vpow.pop %v2725
    %v2727 = vadd.f32 %v2724, 1.0
    %v2728 = vadd.f32 %v2726, 1.0
    %v2729 = vrcp.pop %v2727
    %v2730 = vmul.f32 1.0, %v2729
    %v2731 = vrcp.pop %v2728
    %v2732 = vmul.f32 1.0, %v2731
    %v2733 = vtanh.pop %v2719
    %v2734 = vtanh.pop %v2720
    %v2737 = vrot.slane %v2528, 7
    %v2738 = vrot.slane %v2529, 7
    %v2741 = vmul.f32 %v2730, %v2737
    %v2742 = vmul.f32 %v2732, %v2738
    %2745 = vrot.lane.b32.xlu0 %v2733, 64
    %v2746 = vpop.permute.xlu0 %2745
    %2747 = vrot.lane.b32.xlu0 %v2734, 64
    %v2748 = vpop.permute.xlu0 %2747
    %v2751 = vmul.f32 %v2730, %v2746
    %v2752 = vmul.f32 %v2732, %v2748
    %2755 = vrot.lane.b32.xlu0 %v2751, 32
    %v2756 = vpop.permute.xlu0 %2755
    %2757 = vrot.lane.b32.xlu0 %v2752, 32
    %v2758 = vpop.permute.xlu0 %2757
    %v2761 = vadd.f32 %v2741, %v2756
    %v2762 = vadd.f32 %v2742, %v2758
    %v2763 = vtanh.pop %v2761
    %v2764 = vtanh.pop %v2762
    %2767 = vrot.lane.b32.xlu0 %v2763, 64
    %v2768 = vpop.permute.xlu0 %2767
    %2769 = vrot.lane.b32.xlu0 %v2764, 64
    %v2770 = vpop.permute.xlu0 %2769
    %v2773 = vmul.f32 %v2730, %v2768
    %v2774 = vmul.f32 %v2732, %v2770
    %2777 = vrot.lane.b32.xlu0 %v2773, 32
    %v2778 = vpop.permute.xlu0 %2777
    %2779 = vrot.lane.b32.xlu0 %v2774, 32
    %v2780 = vpop.permute.xlu0 %2779
    %2783 = vst.msk [vmem:[#allocation10] sm:$0x1] %vm316, %v2778
    %2784 = vst.msk [vmem:[#allocation10 + $0x8] sm:$0x1] %vm316, %v2780
    %v2785 = vrot.slane %v2774, 7
    %v2786 = vsel %vm1513, %v2785, %v2773
    %2787 = vrot.lane.b32.xlu0 %v2786, 32
    %v2788 = vpop.permute.xlu0 %2787
    %v2789 = vsel %vm91, %v2788, 0
    %2791 = vmatprep.subr.mxu0 0.0
    %2792 = vmatpush1.msra.mxu0 %v86
    %2793 = vmatprep.subr.mxu0 0.0
    %2794 = vmatpush1.msra.mxu0 %v87
    %2795 = vmatprep.subr.mxu0 0.0
    %2796 = vmatpush1.msra.mxu0 %v88
    %2797 = vmatprep.subr.mxu0 0.0
    %2798 = vmatpush1.msra.mxu0 %v89
    %2799 = vmatprep.subr.mxu0 0.0
    %2800 = vmatpush1.msra.mxu0 0.0
    %2801 = vmatprep.subr.mxu0 0.0
    %2802 = vmatpush1.msra.mxu0 0.0
    %2803 = vmatprep.subr.mxu0 0.0
    %2804 = vmatpush1.msra.mxu0 0.0
    %2805 = vmatprep.subr.mxu0 0.0
    %2806 = vmatpush1.msra.mxu0 0.0
    %2807 = vmatprep.subr.mxu0 0.0
    %2808 = vmatpush1.msra.mxu0 0.0
    %2809 = vmatprep.subr.mxu0 0.0
    %2810 = vmatpush1.msra.mxu0 0.0
    %2811 = vmatprep.subr.mxu0 0.0
    %2812 = vmatpush1.msra.mxu0 0.0
    %2813 = vmatprep.subr.mxu0 0.0
    %2814 = vmatpush1.msra.mxu0 0.0
    %2815 = vmatprep.subr.mxu0 0.0
    %2816 = vmatpush1.msra.mxu0 0.0
    %2817 = vmatprep.subr.mxu0 0.0
    %2818 = vmatpush1.msra.mxu0 0.0
    %2819 = vmatprep.subr.mxu0 0.0
    %2820 = vmatpush1.msra.mxu0 0.0
    %2821 = vmatprep.subr.mxu0 0.0
    %2822 = vmatpush1.msra.mxu0 0.0
    %2823 = vmatprep.subr.mxu0 0.0
    %2824 = vmatpush1.msra.mxu0 0.0
    %2825 = vmatprep.subr.mxu0 0.0
    %2826 = vmatpush1.msra.mxu0 0.0
    %2827 = vmatprep.subr.mxu0 0.0
    %2828 = vmatpush1.msra.mxu0 0.0
    %2829 = vmatprep.subr.mxu0 0.0
    %2830 = vmatpush1.msra.mxu0 0.0
    %2831 = vmatprep.subr.mxu0 0.0
    %2832 = vmatpush1.msra.mxu0 0.0
    %2833 = vmatprep.subr.mxu0 0.0
    %2834 = vmatpush1.msra.mxu0 0.0
    %2835 = vmatprep.subr.mxu0 0.0
    %2836 = vmatpush1.msra.mxu0 0.0
    %2837 = vmatprep.subr.mxu0 0.0
    %2838 = vmatpush1.msra.mxu0 0.0
    %2839 = vmatprep.subr.mxu0 0.0
    %2840 = vmatpush1.msra.mxu0 0.0
    %2841 = vmatprep.subr.mxu0 0.0
    %2842 = vmatpush1.msra.mxu0 0.0
    %2843 = vmatprep.subr.mxu0 0.0
    %2844 = vmatpush1.msra.mxu0 0.0
    %2845 = vmatprep.subr.mxu0 0.0
    %2846 = vmatpush1.msra.mxu0 0.0
    %2847 = vmatprep.subr.mxu0 0.0
    %2848 = vmatpush1.msra.mxu0 0.0
    %2849 = vmatprep.subr.mxu0 0.0
    %2850 = vmatpush1.msra.mxu0 0.0
    %2851 = vmatprep.subr.mxu0 0.0
    %2852 = vmatpush1.msra.mxu0 0.0
    %2853 = vmatprep.subr.mxu0 0.0
    %2854 = vmatpush1.msra.mxu0 0.0
    %2855 = vmatprep.mubr.f32.mxu0 0.0
    %2856 = vmatmul.mubr.f32.gmra.mrb[0].mxu0 %v2789
    %v2857 = vpop.f32.mrb[0].mxu0
    %v2858 = vadd.f32 0.0, %v2857
    %v2859 = vpop.f32.mrb[0].mxu0
    %2860 = vdwg.mxu0
    %v2862 = vrot.slane %v2858, 7
    %v2865 = vadd.f32 %v2636, %v2862
    %v2866 = vadd.f32 %v2637, %v2858
    %v2867 = vxor.u32 %v2865, 2147483648
    %v2868 = vxor.u32 %v2866, 2147483648
    %v2869 = vmul.f32 %v2867, 1.442695
    %v2870 = vpow.pop %v2869
    %v2871 = vmul.f32 %v2868, 1.442695
    %v2872 = vpow.pop %v2871
    %v2873 = vadd.f32 %v2870, 1.0
    %v2874 = vadd.f32 %v2872, 1.0
    %v2875 = vrcp.pop %v2873
    %v2876 = vmul.f32 1.0, %v2875
    %v2877 = vrcp.pop %v2874
    %v2878 = vmul.f32 1.0, %v2877
    %v2879 = vtanh.pop %v2865
    %v2880 = vtanh.pop %v2866
    %v2883 = vrot.slane %v2761, 7
    %v2884 = vrot.slane %v2762, 7
    %v2887 = vmul.f32 %v2876, %v2883
    %v2888 = vmul.f32 %v2878, %v2884
    %2891 = vrot.lane.b32.xlu0 %v2879, 64
    %v2892 = vpop.permute.xlu0 %2891
    %2893 = vrot.lane.b32.xlu0 %v2880, 64
    %v2894 = vpop.permute.xlu0 %2893
    %v2897 = vmul.f32 %v2876, %v2892
    %v2898 = vmul.f32 %v2878, %v2894
    %2901 = vrot.lane.b32.xlu0 %v2897, 32
    %v2902 = vpop.permute.xlu0 %2901
    %2903 = vrot.lane.b32.xlu0 %v2898, 32
    %v2904 = vpop.permute.xlu0 %2903
    %v2907 = vadd.f32 %v2887, %v2902
    %v2908 = vadd.f32 %v2888, %v2904
    %v2909 = vtanh.pop %v2907
    %v2910 = vtanh.pop %v2908
    %2913 = vrot.lane.b32.xlu0 %v2909, 64
    %v2914 = vpop.permute.xlu0 %2913
    %2915 = vrot.lane.b32.xlu0 %v2910, 64
    %v2916 = vpop.permute.xlu0 %2915
    %v2919 = vmul.f32 %v2876, %v2914
    %v2920 = vmul.f32 %v2878, %v2916
    %2923 = vrot.lane.b32.xlu0 %v2919, 32
    %v2924 = vpop.permute.xlu0 %2923
    %2925 = vrot.lane.b32.xlu0 %v2920, 32
    %v2926 = vpop.permute.xlu0 %2925
    %2929 = vst.msk [vmem:[#allocation10] sm:$0x2] %vm1657, %v2924
    %2930 = vst.msk [vmem:[#allocation10 + $0x8] sm:$0x2] %vm1657, %v2926
    %v2931 = vrot.slane %v2919, 1
    %v2932 = vsel %vm1513, %v2920, %v2931
    %2933 = vrot.lane.b32.xlu0 %v2932, 32
    %v2934 = vpop.permute.xlu0 %2933
    %v2935 = vsel %vm91, %v2934, 0
    %2937 = vmatprep.subr.mxu0 0.0
    %2938 = vmatpush1.msra.mxu0 %v86
    %2939 = vmatprep.subr.mxu0 0.0
    %2940 = vmatpush1.msra.mxu0 %v87
    %2941 = vmatprep.subr.mxu0 0.0
    %2942 = vmatpush1.msra.mxu0 %v88
    %2943 = vmatprep.subr.mxu0 0.0
    %2944 = vmatpush1.msra.mxu0 %v89
    %2945 = vmatprep.subr.mxu0 0.0
    %2946 = vmatpush1.msra.mxu0 0.0
    %2947 = vmatprep.subr.mxu0 0.0
    %2948 = vmatpush1.msra.mxu0 0.0
    %2949 = vmatprep.subr.mxu0 0.0
    %2950 = vmatpush1.msra.mxu0 0.0
    %2951 = vmatprep.subr.mxu0 0.0
    %2952 = vmatpush1.msra.mxu0 0.0
    %2953 = vmatprep.subr.mxu0 0.0
    %2954 = vmatpush1.msra.mxu0 0.0
    %2955 = vmatprep.subr.mxu0 0.0
    %2956 = vmatpush1.msra.mxu0 0.0
    %2957 = vmatprep.subr.mxu0 0.0
    %2958 = vmatpush1.msra.mxu0 0.0
    %2959 = vmatprep.subr.mxu0 0.0
    %2960 = vmatpush1.msra.mxu0 0.0
    %2961 = vmatprep.subr.mxu0 0.0
    %2962 = vmatpush1.msra.mxu0 0.0
    %2963 = vmatprep.subr.mxu0 0.0
    %2964 = vmatpush1.msra.mxu0 0.0
    %2965 = vmatprep.subr.mxu0 0.0
    %2966 = vmatpush1.msra.mxu0 0.0
    %2967 = vmatprep.subr.mxu0 0.0
    %2968 = vmatpush1.msra.mxu0 0.0
    %2969 = vmatprep.subr.mxu0 0.0
    %2970 = vmatpush1.msra.mxu0 0.0
    %2971 = vmatprep.subr.mxu0 0.0
    %2972 = vmatpush1.msra.mxu0 0.0
    %2973 = vmatprep.subr.mxu0 0.0
    %2974 = vmatpush1.msra.mxu0 0.0
    %2975 = vmatprep.subr.mxu0 0.0
    %2976 = vmatpush1.msra.mxu0 0.0
    %2977 = vmatprep.subr.mxu0 0.0
    %2978 = vmatpush1.msra.mxu0 0.0
    %2979 = vmatprep.subr.mxu0 0.0
    %2980 = vmatpush1.msra.mxu0 0.0
    %2981 = vmatprep.subr.mxu0 0.0
    %2982 = vmatpush1.msra.mxu0 0.0
    %2983 = vmatprep.subr.mxu0 0.0
    %2984 = vmatpush1.msra.mxu0 0.0
    %2985 = vmatprep.subr.mxu0 0.0
    %2986 = vmatpush1.msra.mxu0 0.0
    %2987 = vmatprep.subr.mxu0 0.0
    %2988 = vmatpush1.msra.mxu0 0.0
    %2989 = vmatprep.subr.mxu0 0.0
    %2990 = vmatpush1.msra.mxu0 0.0
    %2991 = vmatprep.subr.mxu0 0.0
    %2992 = vmatpush1.msra.mxu0 0.0
    %2993 = vmatprep.subr.mxu0 0.0
    %2994 = vmatpush1.msra.mxu0 0.0
    %2995 = vmatprep.subr.mxu0 0.0
    %2996 = vmatpush1.msra.mxu0 0.0
    %2997 = vmatprep.subr.mxu0 0.0
    %2998 = vmatpush1.msra.mxu0 0.0
    %2999 = vmatprep.subr.mxu0 0.0
    %3000 = vmatpush1.msra.mxu0 0.0
    %3001 = vmatprep.mubr.f32.mxu0 0.0
    %3002 = vmatmul.mubr.f32.gmra.mrb[0].mxu0 %v2935
    %v3003 = vpop.f32.mrb[0].mxu0
    %v3004 = vadd.f32 0.0, %v3003
    %v3005 = vpop.f32.mrb[0].mxu0
    %3006 = vdwg.mxu0
    %v3008 = vrot.slane %v3004, 6
    %v3009 = vrot.slane %v3004, 7
    %v3012 = vadd.f32 %v2636, %v3008
    %v3013 = vadd.f32 %v2637, %v3009
    %v3014 = vxor.u32 %v3012, 2147483648
    %v3015 = vxor.u32 %v3013, 2147483648
    %v3016 = vmul.f32 %v3014, 1.442695
    %v3017 = vpow.pop %v3016
    %v3018 = vmul.f32 %v3015, 1.442695
    %v3019 = vpow.pop %v3018
    %v3020 = vadd.f32 %v3017, 1.0
    %v3021 = vadd.f32 %v3019, 1.0
    %v3022 = vrcp.pop %v3020
    %v3023 = vmul.f32 1.0, %v3022
    %v3024 = vrcp.pop %v3021
    %v3025 = vmul.f32 1.0, %v3024
    %v3026 = vtanh.pop %v3012
    %v3027 = vtanh.pop %v3013
    %v3030 = vrot.slane %v2907, 7
    %v3031 = vrot.slane %v2908, 7
    %v3034 = vmul.f32 %v3023, %v3030
    %v3035 = vmul.f32 %v3025, %v3031
    %3038 = vrot.lane.b32.xlu0 %v3026, 64
    %v3039 = vpop.permute.xlu0 %3038
    %3040 = vrot.lane.b32.xlu0 %v3027, 64
    %v3041 = vpop.permute.xlu0 %3040
    %v3044 = vmul.f32 %v3023, %v3039
    %v3045 = vmul.f32 %v3025, %v3041
    %3048 = vrot.lane.b32.xlu0 %v3044, 32
    %v3049 = vpop.permute.xlu0 %3048
    %3050 = vrot.lane.b32.xlu0 %v3045, 32
    %v3051 = vpop.permute.xlu0 %3050
    %v3054 = vadd.f32 %v3034, %v3049
    %v3055 = vadd.f32 %v3035, %v3051
    %v3056 = vtanh.pop %v3054
    %v3057 = vtanh.pop %v3055
    %3060 = vrot.lane.b32.xlu0 %v3056, 64
    %v3061 = vpop.permute.xlu0 %3060
    %3062 = vrot.lane.b32.xlu0 %v3057, 64
    %v3063 = vpop.permute.xlu0 %3062
    %v3066 = vmul.f32 %v3023, %v3061
    %v3067 = vmul.f32 %v3025, %v3063
    %3070 = vrot.lane.b32.xlu0 %v3066, 32
    %v3071 = vpop.permute.xlu0 %3070
    %3072 = vrot.lane.b32.xlu0 %v3067, 32
    %v3073 = vpop.permute.xlu0 %3072
    %3076 = vst.msk [vmem:[#allocation10] sm:$0x4] %vm1805, %v3071
    %3077 = vst.msk [vmem:[#allocation10 + $0x8] sm:$0x4] %vm1805, %v3073
    %v3078 = vrot.slane %v3066, 2
    %v3079 = vrot.slane %v3067, 1
    %v3080 = vsel %vm1513, %v3079, %v3078
    %3081 = vrot.lane.b32.xlu0 %v3080, 32
    %v3082 = vpop.permute.xlu0 %3081
    %v3083 = vsel %vm91, %v3082, 0
    %3085 = vmatprep.subr.mxu0 0.0
    %3086 = vmatpush1.msra.mxu0 %v86
    %3087 = vmatprep.subr.mxu0 0.0
    %3088 = vmatpush1.msra.mxu0 %v87
    %3089 = vmatprep.subr.mxu0 0.0
    %3090 = vmatpush1.msra.mxu0 %v88
    %3091 = vmatprep.subr.mxu0 0.0
    %3092 = vmatpush1.msra.mxu0 %v89
    %3093 = vmatprep.subr.mxu0 0.0
    %3094 = vmatpush1.msra.mxu0 0.0
    %3095 = vmatprep.subr.mxu0 0.0
    %3096 = vmatpush1.msra.mxu0 0.0
    %3097 = vmatprep.subr.mxu0 0.0
    %3098 = vmatpush1.msra.mxu0 0.0
    %3099 = vmatprep.subr.mxu0 0.0
    %3100 = vmatpush1.msra.mxu0 0.0
    %3101 = vmatprep.subr.mxu0 0.0
    %3102 = vmatpush1.msra.mxu0 0.0
    %3103 = vmatprep.subr.mxu0 0.0
    %3104 = vmatpush1.msra.mxu0 0.0
    %3105 = vmatprep.subr.mxu0 0.0
    %3106 = vmatpush1.msra.mxu0 0.0
    %3107 = vmatprep.subr.mxu0 0.0
    %3108 = vmatpush1.msra.mxu0 0.0
    %3109 = vmatprep.subr.mxu0 0.0
    %3110 = vmatpush1.msra.mxu0 0.0
    %3111 = vmatprep.subr.mxu0 0.0
    %3112 = vmatpush1.msra.mxu0 0.0
    %3113 = vmatprep.subr.mxu0 0.0
    %3114 = vmatpush1.msra.mxu0 0.0
    %3115 = vmatprep.subr.mxu0 0.0
    %3116 = vmatpush1.msra.mxu0 0.0
    %3117 = vmatprep.subr.mxu0 0.0
    %3118 = vmatpush1.msra.mxu0 0.0
    %3119 = vmatprep.subr.mxu0 0.0
    %3120 = vmatpush1.msra.mxu0 0.0
    %3121 = vmatprep.subr.mxu0 0.0
    %3122 = vmatpush1.msra.mxu0 0.0
    %3123 = vmatprep.subr.mxu0 0.0
    %3124 = vmatpush1.msra.mxu0 0.0
    %3125 = vmatprep.subr.mxu0 0.0
    %3126 = vmatpush1.msra.mxu0 0.0
    %3127 = vmatprep.subr.mxu0 0.0
    %3128 = vmatpush1.msra.mxu0 0.0
    %3129 = vmatprep.subr.mxu0 0.0
    %3130 = vmatpush1.msra.mxu0 0.0
    %3131 = vmatprep.subr.mxu0 0.0
    %3132 = vmatpush1.msra.mxu0 0.0
    %3133 = vmatprep.subr.mxu0 0.0
    %3134 = vmatpush1.msra.mxu0 0.0
    %3135 = vmatprep.subr.mxu0 0.0
    %3136 = vmatpush1.msra.mxu0 0.0
    %3137 = vmatprep.subr.mxu0 0.0
    %3138 = vmatpush1.msra.mxu0 0.0
    %3139 = vmatprep.subr.mxu0 0.0
    %3140 = vmatpush1.msra.mxu0 0.0
    %3141 = vmatprep.subr.mxu0 0.0
    %3142 = vmatpush1.msra.mxu0 0.0
    %3143 = vmatprep.subr.mxu0 0.0
    %3144 = vmatpush1.msra.mxu0 0.0
    %3145 = vmatprep.subr.mxu0 0.0
    %3146 = vmatpush1.msra.mxu0 0.0
    %3147 = vmatprep.subr.mxu0 0.0
    %3148 = vmatpush1.msra.mxu0 0.0
    %3149 = vmatprep.mubr.f32.mxu0 0.0
    %3150 = vmatmul.mubr.f32.gmra.mrb[0].mxu0 %v3083
    %v3151 = vpop.f32.mrb[0].mxu0
    %v3152 = vadd.f32 0.0, %v3151
    %v3153 = vpop.f32.mrb[0].mxu0
    %3154 = vdwg.mxu0
    %v3156 = vrot.slane %v3152, 5
    %v3157 = vrot.slane %v3152, 6
    %v3160 = vadd.f32 %v2636, %v3156
    %v3161 = vadd.f32 %v2637, %v3157
    %v3162 = vxor.u32 %v3160, 2147483648
    %v3163 = vxor.u32 %v3161, 2147483648
    %v3164 = vmul.f32 %v3162, 1.442695
    %v3165 = vpow.pop %v3164
    %v3166 = vmul.f32 %v3163, 1.442695
    %v3167 = vpow.pop %v3166
    %v3168 = vadd.f32 %v3165, 1.0
    %v3169 = vadd.f32 %v3167, 1.0
    %v3170 = vrcp.pop %v3168
    %v3171 = vmul.f32 1.0, %v3170
    %v3172 = vrcp.pop %v3169
    %v3173 = vmul.f32 1.0, %v3172
    %v3174 = vtanh.pop %v3160
    %v3175 = vtanh.pop %v3161
    %v3178 = vrot.slane %v3054, 7
    %v3179 = vrot.slane %v3055, 7
    %v3182 = vmul.f32 %v3171, %v3178
    %v3183 = vmul.f32 %v3173, %v3179
    %3186 = vrot.lane.b32.xlu0 %v3174, 64
    %v3187 = vpop.permute.xlu0 %3186
    %3188 = vrot.lane.b32.xlu0 %v3175, 64
    %v3189 = vpop.permute.xlu0 %3188
    %v3192 = vmul.f32 %v3171, %v3187
    %v3193 = vmul.f32 %v3173, %v3189
    %3196 = vrot.lane.b32.xlu0 %v3192, 32
    %v3197 = vpop.permute.xlu0 %3196
    %3198 = vrot.lane.b32.xlu0 %v3193, 32
    %v3199 = vpop.permute.xlu0 %3198
    %v3202 = vadd.f32 %v3182, %v3197
    %v3203 = vadd.f32 %v3183, %v3199
    %v3204 = vtanh.pop %v3202
    %v3205 = vtanh.pop %v3203
    %3208 = vrot.lane.b32.xlu0 %v3204, 64
    %v3209 = vpop.permute.xlu0 %3208
    %3210 = vrot.lane.b32.xlu0 %v3205, 64
    %v3211 = vpop.permute.xlu0 %3210
    %v3214 = vmul.f32 %v3171, %v3209
    %v3215 = vmul.f32 %v3173, %v3211
    %3218 = vrot.lane.b32.xlu0 %v3214, 32
    %v3219 = vpop.permute.xlu0 %3218
    %3220 = vrot.lane.b32.xlu0 %v3215, 32
    %v3221 = vpop.permute.xlu0 %3220
    %3224 = vst.msk [vmem:[#allocation10] sm:$0x8] %vm1954, %v3219
    %3225 = vst.msk [vmem:[#allocation10 + $0x8] sm:$0x8] %vm1954, %v3221
    %v3226 = vrot.slane %v3214, 3
    %v3227 = vrot.slane %v3215, 2
    %v3228 = vsel %vm1513, %v3227, %v3226
    %3229 = vrot.lane.b32.xlu0 %v3228, 32
    %v3230 = vpop.permute.xlu0 %3229
    %v3231 = vsel %vm91, %v3230, 0
    %3233 = vmatprep.subr.mxu0 0.0
    %3234 = vmatpush1.msra.mxu0 %v86
    %3235 = vmatprep.subr.mxu0 0.0
    %3236 = vmatpush1.msra.mxu0 %v87
    %3237 = vmatprep.subr.mxu0 0.0
    %3238 = vmatpush1.msra.mxu0 %v88
    %3239 = vmatprep.subr.mxu0 0.0
    %3240 = vmatpush1.msra.mxu0 %v89
    %3241 = vmatprep.subr.mxu0 0.0
    %3242 = vmatpush1.msra.mxu0 0.0
    %3243 = vmatprep.subr.mxu0 0.0
    %3244 = vmatpush1.msra.mxu0 0.0
    %3245 = vmatprep.subr.mxu0 0.0
    %3246 = vmatpush1.msra.mxu0 0.0
    %3247 = vmatprep.subr.mxu0 0.0
    %3248 = vmatpush1.msra.mxu0 0.0
    %3249 = vmatprep.subr.mxu0 0.0
    %3250 = vmatpush1.msra.mxu0 0.0
    %3251 = vmatprep.subr.mxu0 0.0
    %3252 = vmatpush1.msra.mxu0 0.0
    %3253 = vmatprep.subr.mxu0 0.0
    %3254 = vmatpush1.msra.mxu0 0.0
    %3255 = vmatprep.subr.mxu0 0.0
    %3256 = vmatpush1.msra.mxu0 0.0
    %3257 = vmatprep.subr.mxu0 0.0
    %3258 = vmatpush1.msra.mxu0 0.0
    %3259 = vmatprep.subr.mxu0 0.0
    %3260 = vmatpush1.msra.mxu0 0.0
    %3261 = vmatprep.subr.mxu0 0.0
    %3262 = vmatpush1.msra.mxu0 0.0
    %3263 = vmatprep.subr.mxu0 0.0
    %3264 = vmatpush1.msra.mxu0 0.0
    %3265 = vmatprep.subr.mxu0 0.0
    %3266 = vmatpush1.msra.mxu0 0.0
    %3267 = vmatprep.subr.mxu0 0.0
    %3268 = vmatpush1.msra.mxu0 0.0
    %3269 = vmatprep.subr.mxu0 0.0
    %3270 = vmatpush1.msra.mxu0 0.0
    %3271 = vmatprep.subr.mxu0 0.0
    %3272 = vmatpush1.msra.mxu0 0.0
    %3273 = vmatprep.subr.mxu0 0.0
    %3274 = vmatpush1.msra.mxu0 0.0
    %3275 = vmatprep.subr.mxu0 0.0
    %3276 = vmatpush1.msra.mxu0 0.0
    %3277 = vmatprep.subr.mxu0 0.0
    %3278 = vmatpush1.msra.mxu0 0.0
    %3279 = vmatprep.subr.mxu0 0.0
    %3280 = vmatpush1.msra.mxu0 0.0
    %3281 = vmatprep.subr.mxu0 0.0
    %3282 = vmatpush1.msra.mxu0 0.0
    %3283 = vmatprep.subr.mxu0 0.0
    %3284 = vmatpush1.msra.mxu0 0.0
    %3285 = vmatprep.subr.mxu0 0.0
    %3286 = vmatpush1.msra.mxu0 0.0
    %3287 = vmatprep.subr.mxu0 0.0
    %3288 = vmatpush1.msra.mxu0 0.0
    %3289 = vmatprep.subr.mxu0 0.0
    %3290 = vmatpush1.msra.mxu0 0.0
    %3291 = vmatprep.subr.mxu0 0.0
    %3292 = vmatpush1.msra.mxu0 0.0
    %3293 = vmatprep.subr.mxu0 0.0
    %3294 = vmatpush1.msra.mxu0 0.0
    %3295 = vmatprep.subr.mxu0 0.0
    %3296 = vmatpush1.msra.mxu0 0.0
    %3297 = vmatprep.mubr.f32.mxu0 0.0
    %3298 = vmatmul.mubr.f32.gmra.mrb[0].mxu0 %v3231
    %v3299 = vpop.f32.mrb[0].mxu0
    %v3300 = vadd.f32 0.0, %v3299
    %v3301 = vpop.f32.mrb[0].mxu0
    %3302 = vdwg.mxu0
    %v3304 = vrot.slane %v3300, 4
    %v3305 = vrot.slane %v3300, 5
    %v3308 = vadd.f32 %v2636, %v3304
    %v3309 = vadd.f32 %v2637, %v3305
    %v3310 = vxor.u32 %v3308, 2147483648
    %v3311 = vxor.u32 %v3309, 2147483648
    %v3312 = vmul.f32 %v3310, 1.442695
    %v3313 = vpow.pop %v3312
    %v3314 = vmul.f32 %v3311, 1.442695
    %v3315 = vpow.pop %v3314
    %v3316 = vadd.f32 %v3313, 1.0
    %v3317 = vadd.f32 %v3315, 1.0
    %v3318 = vrcp.pop %v3316
    %v3319 = vmul.f32 1.0, %v3318
    %v3320 = vrcp.pop %v3317
    %v3321 = vmul.f32 1.0, %v3320
    %v3322 = vtanh.pop %v3308
    %v3323 = vtanh.pop %v3309
    %v3326 = vrot.slane %v3202, 7
    %v3327 = vrot.slane %v3203, 7
    %v3330 = vmul.f32 %v3319, %v3326
    %v3331 = vmul.f32 %v3321, %v3327
    %3334 = vrot.lane.b32.xlu0 %v3322, 64
    %v3335 = vpop.permute.xlu0 %3334
    %3336 = vrot.lane.b32.xlu0 %v3323, 64
    %v3337 = vpop.permute.xlu0 %3336
    %v3340 = vmul.f32 %v3319, %v3335
    %v3341 = vmul.f32 %v3321, %v3337
    %3344 = vrot.lane.b32.xlu0 %v3340, 32
    %v3345 = vpop.permute.xlu0 %3344
    %3346 = vrot.lane.b32.xlu0 %v3341, 32
    %v3347 = vpop.permute.xlu0 %3346
    %v3350 = vadd.f32 %v3330, %v3345
    %v3351 = vadd.f32 %v3331, %v3347
    %v3352 = vtanh.pop %v3350
    %v3353 = vtanh.pop %v3351
    %3356 = vrot.lane.b32.xlu0 %v3352, 64
    %v3357 = vpop.permute.xlu0 %3356
    %3358 = vrot.lane.b32.xlu0 %v3353, 64
    %v3359 = vpop.permute.xlu0 %3358
    %v3362 = vmul.f32 %v3319, %v3357
    %v3363 = vmul.f32 %v3321, %v3359
    %3366 = vrot.lane.b32.xlu0 %v3362, 32
    %v3367 = vpop.permute.xlu0 %3366
    %3368 = vrot.lane.b32.xlu0 %v3363, 32
    %v3369 = vpop.permute.xlu0 %3368
    %3372 = vst.msk [vmem:[#allocation10] sm:$0x10] %vm2103, %v3367
    %3373 = vst.msk [vmem:[#allocation10 + $0x8] sm:$0x10] %vm2103, %v3369
    %v3374 = vrot.slane %v3362, 4
    %v3375 = vrot.slane %v3363, 3
    %v3376 = vsel %vm1513, %v3375, %v3374
    %3377 = vrot.lane.b32.xlu0 %v3376, 32
    %v3378 = vpop.permute.xlu0 %3377
    %v3379 = vsel %vm91, %v3378, 0
    %3381 = vmatprep.subr.mxu0 0.0
    %3382 = vmatpush1.msra.mxu0 %v86
    %3383 = vmatprep.subr.mxu0 0.0
    %3384 = vmatpush1.msra.mxu0 %v87
    %3385 = vmatprep.subr.mxu0 0.0
    %3386 = vmatpush1.msra.mxu0 %v88
    %3387 = vmatprep.subr.mxu0 0.0
    %3388 = vmatpush1.msra.mxu0 %v89
    %3389 = vmatprep.subr.mxu0 0.0
    %3390 = vmatpush1.msra.mxu0 0.0
    %3391 = vmatprep.subr.mxu0 0.0
    %3392 = vmatpush1.msra.mxu0 0.0
    %3393 = vmatprep.subr.mxu0 0.0
    %3394 = vmatpush1.msra.mxu0 0.0
    %3395 = vmatprep.subr.mxu0 0.0
    %3396 = vmatpush1.msra.mxu0 0.0
    %3397 = vmatprep.subr.mxu0 0.0
    %3398 = vmatpush1.msra.mxu0 0.0
    %3399 = vmatprep.subr.mxu0 0.0
    %3400 = vmatpush1.msra.mxu0 0.0
    %3401 = vmatprep.subr.mxu0 0.0
    %3402 = vmatpush1.msra.mxu0 0.0
    %3403 = vmatprep.subr.mxu0 0.0
    %3404 = vmatpush1.msra.mxu0 0.0
    %3405 = vmatprep.subr.mxu0 0.0
    %3406 = vmatpush1.msra.mxu0 0.0
    %3407 = vmatprep.subr.mxu0 0.0
    %3408 = vmatpush1.msra.mxu0 0.0
    %3409 = vmatprep.subr.mxu0 0.0
    %3410 = vmatpush1.msra.mxu0 0.0
    %3411 = vmatprep.subr.mxu0 0.0
    %3412 = vmatpush1.msra.mxu0 0.0
    %3413 = vmatprep.subr.mxu0 0.0
    %3414 = vmatpush1.msra.mxu0 0.0
    %3415 = vmatprep.subr.mxu0 0.0
    %3416 = vmatpush1.msra.mxu0 0.0
    %3417 = vmatprep.subr.mxu0 0.0
    %3418 = vmatpush1.msra.mxu0 0.0
    %3419 = vmatprep.subr.mxu0 0.0
    %3420 = vmatpush1.msra.mxu0 0.0
    %3421 = vmatprep.subr.mxu0 0.0
    %3422 = vmatpush1.msra.mxu0 0.0
    %3423 = vmatprep.subr.mxu0 0.0
    %3424 = vmatpush1.msra.mxu0 0.0
    %3425 = vmatprep.subr.mxu0 0.0
    %3426 = vmatpush1.msra.mxu0 0.0
    %3427 = vmatprep.subr.mxu0 0.0
    %3428 = vmatpush1.msra.mxu0 0.0
    %3429 = vmatprep.subr.mxu0 0.0
    %3430 = vmatpush1.msra.mxu0 0.0
    %3431 = vmatprep.subr.mxu0 0.0
    %3432 = vmatpush1.msra.mxu0 0.0
    %3433 = vmatprep.subr.mxu0 0.0
    %3434 = vmatpush1.msra.mxu0 0.0
    %3435 = vmatprep.subr.mxu0 0.0
    %3436 = vmatpush1.msra.mxu0 0.0
    %3437 = vmatprep.subr.mxu0 0.0
    %3438 = vmatpush1.msra.mxu0 0.0
    %3439 = vmatprep.subr.mxu0 0.0
    %3440 = vmatpush1.msra.mxu0 0.0
    %3441 = vmatprep.subr.mxu0 0.0
    %3442 = vmatpush1.msra.mxu0 0.0
    %3443 = vmatprep.subr.mxu0 0.0
    %3444 = vmatpush1.msra.mxu0 0.0
    %3445 = vmatprep.mubr.f32.mxu0 0.0
    %3446 = vmatmul.mubr.f32.gmra.mrb[0].mxu0 %v3379
    %v3447 = vpop.f32.mrb[0].mxu0
    %v3448 = vadd.f32 0.0, %v3447
    %v3449 = vpop.f32.mrb[0].mxu0
    %3450 = vdwg.mxu0
    %v3452 = vrot.slane %v3448, 3
    %v3453 = vrot.slane %v3448, 4
    %v3456 = vadd.f32 %v2636, %v3452
    %v3457 = vadd.f32 %v2637, %v3453
    %v3458 = vxor.u32 %v3456, 2147483648
    %v3459 = vxor.u32 %v3457, 2147483648
    %v3460 = vmul.f32 %v3458, 1.442695
    %v3461 = vpow.pop %v3460
    %v3462 = vmul.f32 %v3459, 1.442695
    %v3463 = vpow.pop %v3462
    %v3464 = vadd.f32 %v3461, 1.0
    %v3465 = vadd.f32 %v3463, 1.0
    %v3466 = vrcp.pop %v3464
    %v3467 = vmul.f32 1.0, %v3466
    %v3468 = vrcp.pop %v3465
    %v3469 = vmul.f32 1.0, %v3468
    %v3470 = vtanh.pop %v3456
    %v3471 = vtanh.pop %v3457
    %v3474 = vrot.slane %v3350, 7
    %v3475 = vrot.slane %v3351, 7
    %v3478 = vmul.f32 %v3467, %v3474
    %v3479 = vmul.f32 %v3469, %v3475
    %3482 = vrot.lane.b32.xlu0 %v3470, 64
    %v3483 = vpop.permute.xlu0 %3482
    %3484 = vrot.lane.b32.xlu0 %v3471, 64
    %v3485 = vpop.permute.xlu0 %3484
    %v3488 = vmul.f32 %v3467, %v3483
    %v3489 = vmul.f32 %v3469, %v3485
    %3492 = vrot.lane.b32.xlu0 %v3488, 32
    %v3493 = vpop.permute.xlu0 %3492
    %3494 = vrot.lane.b32.xlu0 %v3489, 32
    %v3495 = vpop.permute.xlu0 %3494
    %v3498 = vadd.f32 %v3478, %v3493
    %v3499 = vadd.f32 %v3479, %v3495
    %v3500 = vtanh.pop %v3498
    %v3501 = vtanh.pop %v3499
    %3504 = vrot.lane.b32.xlu0 %v3500, 64
    %v3505 = vpop.permute.xlu0 %3504
    %3506 = vrot.lane.b32.xlu0 %v3501, 64
    %v3507 = vpop.permute.xlu0 %3506
    %v3510 = vmul.f32 %v3467, %v3505
    %v3511 = vmul.f32 %v3469, %v3507
    %3514 = vrot.lane.b32.xlu0 %v3510, 32
    %v3515 = vpop.permute.xlu0 %3514
    %3516 = vrot.lane.b32.xlu0 %v3511, 32
    %v3517 = vpop.permute.xlu0 %3516
    %3520 = vst.msk [vmem:[#allocation10] sm:$0x20] %vm2252, %v3515
    %3521 = vst.msk [vmem:[#allocation10 + $0x8] sm:$0x20] %vm2252, %v3517
    %v3522 = vrot.slane %v3510, 5
    %v3523 = vrot.slane %v3511, 4
    %v3524 = vsel %vm1513, %v3523, %v3522
    %3525 = vrot.lane.b32.xlu0 %v3524, 32
    %v3526 = vpop.permute.xlu0 %3525
    %v3527 = vsel %vm91, %v3526, 0
    %3529 = vmatprep.subr.mxu0 0.0
    %3530 = vmatpush1.msra.mxu0 %v86
    %3531 = vmatprep.subr.mxu0 0.0
    %3532 = vmatpush1.msra.mxu0 %v87
    %3533 = vmatprep.subr.mxu0 0.0
    %3534 = vmatpush1.msra.mxu0 %v88
    %3535 = vmatprep.subr.mxu0 0.0
    %3536 = vmatpush1.msra.mxu0 %v89
    %3537 = vmatprep.subr.mxu0 0.0
    %3538 = vmatpush1.msra.mxu0 0.0
    %3539 = vmatprep.subr.mxu0 0.0
    %3540 = vmatpush1.msra.mxu0 0.0
    %3541 = vmatprep.subr.mxu0 0.0
    %3542 = vmatpush1.msra.mxu0 0.0
    %3543 = vmatprep.subr.mxu0 0.0
    %3544 = vmatpush1.msra.mxu0 0.0
    %3545 = vmatprep.subr.mxu0 0.0
    %3546 = vmatpush1.msra.mxu0 0.0
    %3547 = vmatprep.subr.mxu0 0.0
    %3548 = vmatpush1.msra.mxu0 0.0
    %3549 = vmatprep.subr.mxu0 0.0
    %3550 = vmatpush1.msra.mxu0 0.0
    %3551 = vmatprep.subr.mxu0 0.0
    %3552 = vmatpush1.msra.mxu0 0.0
    %3553 = vmatprep.subr.mxu0 0.0
    %3554 = vmatpush1.msra.mxu0 0.0
    %3555 = vmatprep.subr.mxu0 0.0
    %3556 = vmatpush1.msra.mxu0 0.0
    %3557 = vmatprep.subr.mxu0 0.0
    %3558 = vmatpush1.msra.mxu0 0.0
    %3559 = vmatprep.subr.mxu0 0.0
    %3560 = vmatpush1.msra.mxu0 0.0
    %3561 = vmatprep.subr.mxu0 0.0
    %3562 = vmatpush1.msra.mxu0 0.0
    %3563 = vmatprep.subr.mxu0 0.0
    %3564 = vmatpush1.msra.mxu0 0.0
    %3565 = vmatprep.subr.mxu0 0.0
    %3566 = vmatpush1.msra.mxu0 0.0
    %3567 = vmatprep.subr.mxu0 0.0
    %3568 = vmatpush1.msra.mxu0 0.0
    %3569 = vmatprep.subr.mxu0 0.0
    %3570 = vmatpush1.msra.mxu0 0.0
    %3571 = vmatprep.subr.mxu0 0.0
    %3572 = vmatpush1.msra.mxu0 0.0
    %3573 = vmatprep.subr.mxu0 0.0
    %3574 = vmatpush1.msra.mxu0 0.0
    %3575 = vmatprep.subr.mxu0 0.0
    %3576 = vmatpush1.msra.mxu0 0.0
    %3577 = vmatprep.subr.mxu0 0.0
    %3578 = vmatpush1.msra.mxu0 0.0
    %3579 = vmatprep.subr.mxu0 0.0
    %3580 = vmatpush1.msra.mxu0 0.0
    %3581 = vmatprep.subr.mxu0 0.0
    %3582 = vmatpush1.msra.mxu0 0.0
    %3583 = vmatprep.subr.mxu0 0.0
    %3584 = vmatpush1.msra.mxu0 0.0
    %3585 = vmatprep.subr.mxu0 0.0
    %3586 = vmatpush1.msra.mxu0 0.0
    %3587 = vmatprep.subr.mxu0 0.0
    %3588 = vmatpush1.msra.mxu0 0.0
    %3589 = vmatprep.subr.mxu0 0.0
    %3590 = vmatpush1.msra.mxu0 0.0
    %3591 = vmatprep.subr.mxu0 0.0
    %3592 = vmatpush1.msra.mxu0 0.0
    %3593 = vmatprep.mubr.f32.mxu0 0.0
    %3594 = vmatmul.mubr.f32.gmra.mrb[0].mxu0 %v3527
    %v3595 = vpop.f32.mrb[0].mxu0
    %v3596 = vadd.f32 0.0, %v3595
    %v3597 = vpop.f32.mrb[0].mxu0
    %3598 = vdwg.mxu0
    %v3600 = vrot.slane %v3596, 2
    %v3601 = vrot.slane %v3596, 3
    %v3604 = vadd.f32 %v2636, %v3600
    %v3605 = vadd.f32 %v2637, %v3601
    %v3606 = vxor.u32 %v3604, 2147483648
    %v3607 = vxor.u32 %v3605, 2147483648
    %v3608 = vmul.f32 %v3606, 1.442695
    %v3609 = vpow.pop %v3608
    %v3610 = vmul.f32 %v3607, 1.442695
    %v3611 = vpow.pop %v3610
    %v3612 = vadd.f32 %v3609, 1.0
    %v3613 = vadd.f32 %v3611, 1.0
    %v3614 = vrcp.pop %v3612
    %v3615 = vmul.f32 1.0, %v3614
    %v3616 = vrcp.pop %v3613
    %v3617 = vmul.f32 1.0, %v3616
    %v3618 = vtanh.pop %v3604
    %v3619 = vtanh.pop %v3605
    %v3622 = vrot.slane %v3498, 7
    %v3623 = vrot.slane %v3499, 7
    %v3626 = vmul.f32 %v3615, %v3622
    %v3627 = vmul.f32 %v3617, %v3623
    %3630 = vrot.lane.b32.xlu0 %v3618, 64
    %v3631 = vpop.permute.xlu0 %3630
    %3632 = vrot.lane.b32.xlu0 %v3619, 64
    %v3633 = vpop.permute.xlu0 %3632
    %v3636 = vmul.f32 %v3615, %v3631
    %v3637 = vmul.f32 %v3617, %v3633
    %3640 = vrot.lane.b32.xlu0 %v3636, 32
    %v3641 = vpop.permute.xlu0 %3640
    %3642 = vrot.lane.b32.xlu0 %v3637, 32
    %v3643 = vpop.permute.xlu0 %3642
    %v3646 = vadd.f32 %v3626, %v3641
    %v3647 = vadd.f32 %v3627, %v3643
    %v3648 = vtanh.pop %v3646
    %v3649 = vtanh.pop %v3647
    %3652 = vrot.lane.b32.xlu0 %v3648, 64
    %v3653 = vpop.permute.xlu0 %3652
    %3654 = vrot.lane.b32.xlu0 %v3649, 64
    %v3655 = vpop.permute.xlu0 %3654
    %v3658 = vmul.f32 %v3615, %v3653
    %v3659 = vmul.f32 %v3617, %v3655
    %3662 = vrot.lane.b32.xlu0 %v3658, 32
    %v3663 = vpop.permute.xlu0 %3662
    %3664 = vrot.lane.b32.xlu0 %v3659, 32
    %v3665 = vpop.permute.xlu0 %3664
    %3668 = vst.msk [vmem:[#allocation10] sm:$0x40] %vm2401, %v3663
    %3669 = vst.msk [vmem:[#allocation10 + $0x8] sm:$0x40] %vm2401, %v3665
    %v3670 = vrot.slane %v3658, 6
    %v3671 = vrot.slane %v3659, 5
    %v3672 = vsel %vm1513, %v3671, %v3670
    %3673 = vrot.lane.b32.xlu0 %v3672, 32
    %v3674 = vpop.permute.xlu0 %3673
    %v3675 = vsel %vm91, %v3674, 0
    %3677 = vmatprep.subr.mxu0 0.0
    %3678 = vmatpush1.msra.mxu0 %v86
    %3679 = vmatprep.subr.mxu0 0.0
    %3680 = vmatpush1.msra.mxu0 %v87
    %3681 = vmatprep.subr.mxu0 0.0
    %3682 = vmatpush1.msra.mxu0 %v88
    %3683 = vmatprep.subr.mxu0 0.0
    %3684 = vmatpush1.msra.mxu0 %v89
    %3685 = vmatprep.subr.mxu0 0.0
    %3686 = vmatpush1.msra.mxu0 0.0
    %3687 = vmatprep.subr.mxu0 0.0
    %3688 = vmatpush1.msra.mxu0 0.0
    %3689 = vmatprep.subr.mxu0 0.0
    %3690 = vmatpush1.msra.mxu0 0.0
    %3691 = vmatprep.subr.mxu0 0.0
    %3692 = vmatpush1.msra.mxu0 0.0
    %3693 = vmatprep.subr.mxu0 0.0
    %3694 = vmatpush1.msra.mxu0 0.0
    %3695 = vmatprep.subr.mxu0 0.0
    %3696 = vmatpush1.msra.mxu0 0.0
    %3697 = vmatprep.subr.mxu0 0.0
    %3698 = vmatpush1.msra.mxu0 0.0
    %3699 = vmatprep.subr.mxu0 0.0
    %3700 = vmatpush1.msra.mxu0 0.0
    %3701 = vmatprep.subr.mxu0 0.0
    %3702 = vmatpush1.msra.mxu0 0.0
    %3703 = vmatprep.subr.mxu0 0.0
    %3704 = vmatpush1.msra.mxu0 0.0
    %3705 = vmatprep.subr.mxu0 0.0
    %3706 = vmatpush1.msra.mxu0 0.0
    %3707 = vmatprep.subr.mxu0 0.0
    %3708 = vmatpush1.msra.mxu0 0.0
    %3709 = vmatprep.subr.mxu0 0.0
    %3710 = vmatpush1.msra.mxu0 0.0
    %3711 = vmatprep.subr.mxu0 0.0
    %3712 = vmatpush1.msra.mxu0 0.0
    %3713 = vmatprep.subr.mxu0 0.0
    %3714 = vmatpush1.msra.mxu0 0.0
    %3715 = vmatprep.subr.mxu0 0.0
    %3716 = vmatpush1.msra.mxu0 0.0
    %3717 = vmatprep.subr.mxu0 0.0
    %3718 = vmatpush1.msra.mxu0 0.0
    %3719 = vmatprep.subr.mxu0 0.0
    %3720 = vmatpush1.msra.mxu0 0.0
    %3721 = vmatprep.subr.mxu0 0.0
    %3722 = vmatpush1.msra.mxu0 0.0
    %3723 = vmatprep.subr.mxu0 0.0
    %3724 = vmatpush1.msra.mxu0 0.0
    %3725 = vmatprep.subr.mxu0 0.0
    %3726 = vmatpush1.msra.mxu0 0.0
    %3727 = vmatprep.subr.mxu0 0.0
    %3728 = vmatpush1.msra.mxu0 0.0
    %3729 = vmatprep.subr.mxu0 0.0
    %3730 = vmatpush1.msra.mxu0 0.0
    %3731 = vmatprep.subr.mxu0 0.0
    %3732 = vmatpush1.msra.mxu0 0.0
    %3733 = vmatprep.subr.mxu0 0.0
    %3734 = vmatpush1.msra.mxu0 0.0
    %3735 = vmatprep.subr.mxu0 0.0
    %3736 = vmatpush1.msra.mxu0 0.0
    %3737 = vmatprep.subr.mxu0 0.0
    %3738 = vmatpush1.msra.mxu0 0.0
    %3739 = vmatprep.subr.mxu0 0.0
    %3740 = vmatpush1.msra.mxu0 0.0
    %3741 = vmatprep.mubr.f32.mxu0 0.0
    %3742 = vmatmul.mubr.f32.gmra.mrb[0].mxu0 %v3675
    %v3743 = vpop.f32.mrb[0].mxu0
    %v3744 = vadd.f32 0.0, %v3743
    %v3745 = vpop.f32.mrb[0].mxu0
    %3746 = vdwg.mxu0
    %v3748 = vrot.slane %v3744, 1
    %v3749 = vrot.slane %v3744, 2
    %v3752 = vadd.f32 %v2636, %v3748
    %v3753 = vadd.f32 %v2637, %v3749
    %v3754 = vxor.u32 %v3752, 2147483648
    %v3755 = vxor.u32 %v3753, 2147483648
    %v3756 = vmul.f32 %v3754, 1.442695
    %v3757 = vpow.pop %v3756
    %v3758 = vmul.f32 %v3755, 1.442695
    %v3759 = vpow.pop %v3758
    %v3760 = vadd.f32 %v3757, 1.0
    %v3761 = vadd.f32 %v3759, 1.0
    %v3762 = vrcp.pop %v3760
    %v3763 = vmul.f32 1.0, %v3762
    %v3764 = vrcp.pop %v3761
    %v3765 = vmul.f32 1.0, %v3764
    %v3766 = vtanh.pop %v3752
    %v3767 = vtanh.pop %v3753
    %v3770 = vrot.slane %v3646, 7
    %v3771 = vrot.slane %v3647, 7
    %v3774 = vmul.f32 %v3763, %v3770
    %v3775 = vmul.f32 %v3765, %v3771
    %3778 = vrot.lane.b32.xlu0 %v3766, 64
    %v3779 = vpop.permute.xlu0 %3778
    %3780 = vrot.lane.b32.xlu0 %v3767, 64
    %v3781 = vpop.permute.xlu0 %3780
    %v3784 = vmul.f32 %v3763, %v3779
    %v3785 = vmul.f32 %v3765, %v3781
    %3788 = vrot.lane.b32.xlu0 %v3784, 32
    %v3789 = vpop.permute.xlu0 %3788
    %3790 = vrot.lane.b32.xlu0 %v3785, 32
    %v3791 = vpop.permute.xlu0 %3790
    %v3794 = vadd.f32 %v3774, %v3789
    %v3795 = vadd.f32 %v3775, %v3791
    %v3796 = vtanh.pop %v3794
    %v3797 = vtanh.pop %v3795
    %3800 = vrot.lane.b32.xlu0 %v3796, 64
    %v3801 = vpop.permute.xlu0 %3800
    %3802 = vrot.lane.b32.xlu0 %v3797, 64
    %v3803 = vpop.permute.xlu0 %3802
    %v3806 = vmul.f32 %v3763, %v3801
    %v3807 = vmul.f32 %v3765, %v3803
    %3810 = vrot.lane.b32.xlu0 %v3806, 32
    %v3811 = vpop.permute.xlu0 %3810
    %3812 = vrot.lane.b32.xlu0 %v3807, 32
    %v3813 = vpop.permute.xlu0 %3812
    %3816 = vst.msk [vmem:[#allocation10] sm:$0x80] %vm2550, %v3811
    %3817 = vst.msk [vmem:[#allocation10 + $0x8] sm:$0x80] %vm2550, %v3813
    %3818 = vrot.lane.b32.xlu0 %v76, 32
    %v3819 = vpop.permute.xlu0 %3818
    %3820 = vrot.lane.b32.xlu0 %v77, 32
    %v3821 = vpop.permute.xlu0 %3820
    %vm3824 = vcmask 523520
    %3825 = vst.msk [vmem:[#allocation10] sm:$0xff] %vm3824, %v3819
    %3826 = vst.msk [vmem:[#allocation10 + $0x8] sm:$0xff] %vm3824, %v3821
    // Predicated region
    $region38: #{tpu_custom_call.1} parent=1 // pred_check
      _
    $region39: #{tpu_custom_call.1} parent=1 // pred_check_branch
      %3828 = sbr.rel (0) target = $region41
    $region40: #{tpu_custom_call.1} parent=1 // pred_region
      %s3830 = ssub.s32 256, 256
      %3831 = vsyncadd [#allocation4], %s3830
      %s3832 = sshll.u32 [#allocation10], 4
      %s3833 = int_to_ptr.vmem [resolvable:$true] %s3832
      %3838 = dma.vmem_to_hbm [thread:$0]  %s3833, 256, %s5, [#allocation4], 128, 128, 8
    $region41: #{tpu_custom_call.1} parent=1 // pred_fallthru
      _
    // Predicated region
    $region42: #{tpu_custom_call.1} parent=1 // pred_check
      _
    $region43: #{tpu_custom_call.1} parent=1 // pred_check_branch
      %3840 = sbr.rel (0) target = $region45
    $region44: #{tpu_custom_call.1} parent=1 // pred_region
      %3841 = dma.done [#allocation4], 256
    $region45: #{tpu_custom_call.1} parent=1 // pred_fallthru
      _
    %3842 = vsyncpa [#allocation3], 1
    %3843 = vsyncpa [#allocation6], 1
    %3844 = vsyncpa [#allocation9], 1
    %3845 = vsyncpa [#allocation4], 1

</llo_original>
